<compile_context>
chip_gen: v7x
topology: tpu7x:2x2x1
jax: 0.10.0
libtpu: 0.0.40
codegen_flags: <defaults>
</compile_context>

<pallas_src>
import math
from itertools import combinations_with_replacement

import numpy as np
import jax
import jax.numpy as jnp
from jax.experimental import pallas as pl
from jax.experimental.pallas import tpu as pltpu


def _round_up(x, m):
    return ((x + m - 1) // m) * m


# ----------------------------------------------------------------------------
# Fused Pallas kernel (all orders, one pass over the patch rows).
#   p_ref : (tm, W_ext)                    f32  zero-extended unfold patches
#   w_ref : (n_blocks, W_pad, C_out_pad)   f32/bf16  folded + permuted projection weight
#   o_ref : (tm, C_out_pad)                f32  lane-dense output tile
# ----------------------------------------------------------------------------
def _make_fused_kernel(block_shifts, w_pad, matmul_dtype):
    def kernel(p_ref, w_ref, o_ref):
        p = p_ref[...]                                    # (tm, W_ext) f32, read once
        acc = None
        for b, shifts in enumerate(block_shifts):
            blk = p[:, 0:w_pad]                           # order-1 factor
            for s in shifts:                              # higher-order factors (VPU)
                blk = blk * p[:, s:s + w_pad]
            contrib = jnp.dot(blk.astype(matmul_dtype),   # MXU projection, f32 accum
                              w_ref[b],
                              preferred_element_type=jnp.float32)
            acc = contrib if acc is None else acc + contrib
        o_ref[...] = acc                                  # lane-dense (128-wide) store
    return kernel


def _fused_projection(patches_ext, w_fused, block_shifts, w_pad, matmul_dtype,
                      tm_max=512):
    m, w_ext = patches_ext.shape
    n_blocks, w_pad_chk, c_out_pad = w_fused.shape
    assert w_pad_chk == w_pad and n_blocks == len(block_shifts)

    # Large row tile (fewer ~0.35us grid steps), but always >=2 tiles so the
    # "parallel" axis can be sharded across v7x's two TensorCores / megacore.
    tm = min(tm_max, _round_up(m, 8))
    if m > 8 and pl.cdiv(m, tm) < 2:
        tm = max(8, _round_up(pl.cdiv(m, 2), 8))
    grid = (pl.cdiv(m, tm),)      # no explicit M padding: ragged last tile is fine
                                  # (rows are independent, OOB output rows are dropped)

    # Per-tile VMEM footprint (patches + weight + out, double-buffered) is well
    # under even v5e's 16 MiB default scoped limit, so no vmem_limit_bytes needed.
    out = pl.pallas_call(
        _make_fused_kernel(block_shifts, w_pad, matmul_dtype),
        out_shape=jax.ShapeDtypeStruct((m, c_out_pad), jnp.float32),
        grid=grid,
        in_specs=[
            pl.BlockSpec((tm, w_ext), lambda i: (i, 0)),
            pl.BlockSpec((n_blocks, w_pad, c_out_pad), lambda i: (0, 0, 0)),
        ],
        out_specs=pl.BlockSpec((tm, c_out_pad), lambda i: (i, 0)),
        compiler_params=pltpu.CompilerParams(dimension_semantics=("parallel",)),
    )(patches_ext, w_fused)
    return out


# ----------------------------------------------------------------------------
# Parameter / constant setup (plain numpy/JAX glue).
# ----------------------------------------------------------------------------
def _superdiagonal_mask(ks, order):
    # True = entry to be zeroed (redundant symmetric copy); False = kept (sorted combo).
    if order == 1:
        return np.zeros(ks, dtype=bool)
    mask = np.ones([ks] * order, dtype=bool)
    for idx in combinations_with_replacement(range(ks), order):
        mask[idx] = False
    return mask.reshape(-1)


class VolterraConv2dPallas:
    def __init__(self, in_channels, out_channels, kernel_size, stride=1,
                 padding=0, dilation=1, bias=True, orders=(1,),
                 masking=True, scaling=True, matmul_dtype=jnp.bfloat16,
                 tile_rows=512, key=None):
        as2 = lambda v: v if isinstance(v, tuple) else (v, v)
        self.in_channels = in_channels
        self.out_channels = out_channels
        self.kernel_size = as2(kernel_size)
        self.stride = as2(stride)
        # TODO(synk): padding='same' branch (which mutates self.padding at forward time) not implemented.
        self.padding = as2(padding)
        self.dilation = as2(dilation)
        self.orders = list(orders)
        self.masking = masking
        self.scaling = scaling
        self.use_bias = bias
        self.matmul_dtype = matmul_dtype
        self.tile_rows = tile_rows
        self.ks = self.kernel_size[0] * self.kernel_size[1]

        self.W = in_channels * self.ks                         # unfold row width
        self.w_pad = _round_up(self.W, 16)                     # sublane-aligned block width (f32 & bf16)
        self.max_shift = (self.ks - 1) if any(o > 1 for o in self.orders) else 0
        self.w_ext = self.w_pad + self.max_shift               # zero-extended patch width
        self.c_out_pad = max(128, _round_up(out_channels, 128))  # lane-dense output width

        key = jax.random.PRNGKey(0) if key is None else key
        self.weights, self.order_mults = [], []
        for order in self.orders:
            q = in_channels * self.ks ** order
            # xavier_uniform_(gain=sqrt(2)) on the transposed (q, C_out) weight.
            bound = math.sqrt(2.0) * math.sqrt(6.0 / (out_channels + q))
            key, sub = jax.random.split(key)
            w = jax.random.uniform(sub, (q, out_channels), jnp.float32,
                                   minval=-bound, maxval=bound)
            self.weights.append(w)

            mask = _superdiagonal_mask(self.ks, order)
            do_mask = self.masking if order > 1 else False
            do_scale = self.scaling if order > 1 else False
            mult = np.ones(self.ks ** order, dtype=np.float64)
            if do_mask:
                mult = np.where(mask, 0.0, 1.0)
            if do_scale:
                kept = mask.size - mask.sum()
                mult = mult / math.sqrt(float(kept))
            self.order_mults.append(mult.astype(np.float32))

        self.block_shifts, self.w_fused_f32 = self._build_fused_weight()
        self.bias_weights = jnp.zeros((out_channels, 1, 1), jnp.float32)

    # Fold mask + scaling (and symmetric duplicates) into a block-permuted weight.
    # Kernel block b corresponds to a sorted shift tuple (s_1<=...<=s_{o-1}); the
    # feature at column ci*ks + a1 of that block is p[ci,a1]*p[ci,a1+s_1]*... which
    # equals the original feature of every index tuple whose sorted form is
    # (a1, a1+s_1, ...).  All such original weight rows (x mult) land on that row.
    def _build_fused_weight(self):
        c_in, ks, w_pad = self.in_channels, self.ks, self.w_pad
        block_shifts, per_order = [], []
        for order, w, mult in zip(self.orders, self.weights, self.order_mults):
            w_np = np.asarray(w, dtype=np.float64)
            shift_tuples = list(combinations_with_replacement(range(ks), order - 1))
            block_shifts.extend(shift_tuples)
            block_index = {t: b for b, t in enumerate(shift_tuples)}
            wk = np.zeros((len(shift_tuples), w_pad, self.out_channels), np.float64)
            for r in range(ks ** order):
                digits, rr = [], r
                for _ in range(order):
                    digits.append(rr % ks)
                    rr //= ks
                digits = digits[::-1]                      # most-significant-first (PyTorch order)
                srt = sorted(digits)
                shifts = tuple(d - srt[0] for d in srt[1:])
                b = block_index[shifts]
                scale = float(mult[r])
                if scale == 0.0:
                    continue
                for ci in range(c_in):
                    wk[b, ci * ks + srt[0], :] += scale * w_np[ci * ks ** order + r, :]
            per_order.append(wk)
        w_full = np.concatenate(per_order, axis=0)
        w_full = np.pad(w_full, ((0, 0), (0, 0),
                                 (0, self.c_out_pad - self.out_channels)))
        return block_shifts, jnp.asarray(w_full, jnp.float32)

    def _unfold2d(self, x, pad_width_to=None):
        # F.unfold equivalent; returns (M, C_in*ks) pixel-major patches (optionally
        # zero-extended on the column axis; the pad fuses into the transpose/reshape
        # copy this op materializes anyway).
        # TODO(synk): longer term, fuse the unfold into the Pallas kernel (row-window
        # BlockSpec / manual DMA) to avoid the ks-fold HBM duplication of the input.
        n, c, h, w = x.shape
        (kh, kw), (sh, sw) = self.kernel_size, self.stride
        (ph, pw), (dh, dw) = self.padding, self.dilation
        out_h = (h + 2 * ph - dh * (kh - 1) - 1) // sh + 1
        out_w = (w + 2 * pw - dw * (kw - 1) - 1) // sw + 1
        xp = jnp.pad(x, ((0, 0), (0, 0), (ph, ph), (pw, pw)))
        cols = []
        for ih in range(kh):
            for iw in range(kw):
                sl = xp[:, :,
                        ih * dh: ih * dh + sh * (out_h - 1) + 1: sh,
                        iw * dw: iw * dw + sw * (out_w - 1) + 1: sw]
                cols.append(sl)                       # (N, C, out_h, out_w)
        patches = jnp.stack(cols, axis=2)             # (N, C, ks, out_h, out_w)
        patches2d = jnp.transpose(patches, (0, 3, 4, 1, 2)).reshape(
            n * out_h * out_w, c * self.ks)
        if pad_width_to is not None and pad_width_to > patches2d.shape[1]:
            patches2d = jnp.pad(
                patches2d, ((0, 0), (0, pad_width_to - patches2d.shape[1])))
        return patches2d, out_h, out_w

    def __call__(self, x, matmul_dtype=None):
        mdt = self.matmul_dtype if matmul_dtype is None else matmul_dtype
        n = x.shape[0]
        patches_ext, out_h, out_w = self._unfold2d(x.astype(jnp.float32),
                                                   pad_width_to=self.w_ext)
        w_fused = self.w_fused_f32.astype(mdt)
        out2d = _fused_projection(patches_ext, w_fused, tuple(self.block_shifts),
                                  self.w_pad, mdt, tm_max=self.tile_rows)
        out2d = out2d[:, :self.out_channels]
        # Raw reshape: mirrors PyTorch `out_image.view(-1, C_out, H, W)` applied to
        # the contiguous (N, L, C_out) tensor (intentionally NOT a permute+fold).
        folded = out2d.reshape(n, self.out_channels, out_h, out_w)
        if self.use_bias:
            folded = folded + self.bias_weights
        return folded


# ----------------------------------------------------------------------------
# Pure-JAX reference (mirrors the original PyTorch math, no Pallas).
# ----------------------------------------------------------------------------
def reference_forward(module, x):
    patches2d, out_h, out_w = module._unfold2d(x.astype(jnp.float32))
    m = patches2d.shape[0]
    p3 = patches2d.reshape(m, module.in_channels, module.ks)
    out2d = 0.0
    for order, w, mult in zip(module.orders, module.weights, module.order_mults):
        cur = p3
        for _ in range(order - 1):
            cur = (cur[:, :, :, None] * p3[:, :, None, :]).reshape(
                m, module.in_channels, -1)
        feat = cur.reshape(m, -1) * jnp.tile(jnp.asarray(mult),
                                             module.in_channels)[None, :]
        out2d = out2d + jnp.dot(feat, w, precision=jax.lax.Precision.HIGHEST)
    folded = out2d.reshape(x.shape[0], module.out_channels, out_h, out_w)
    if module.use_bias:
        folded = folded + module.bias_weights
    return folded


if __name__ == "__main__":
    key = jax.random.PRNGKey(0)
    kx, kp = jax.random.split(key)
    x = jax.random.normal(kx, (2, 4, 16, 16), jnp.float32)   # NCHW, like PyTorch

    module = VolterraConv2dPallas(in_channels=4, out_channels=8, kernel_size=3,
                                  stride=1, padding=1, dilation=1, bias=True,
                                  orders=[1, 2], masking=True, scaling=True,
                                  matmul_dtype=jnp.bfloat16, key=kp)

    ref = reference_forward(module, x)

    # Strict numerical check with an f32 MXU projection.
    out_f32 = jax.block_until_ready(module(x, matmul_dtype=jnp.float32))
    assert out_f32.shape == (2, 8, 16, 16) and out_f32.dtype == jnp.float32
    np.testing.assert_allclose(np.asarray(out_f32), np.asarray(ref),
                               rtol=2e-3, atol=2e-3)

    # Default fast path: bf16 MXU operands, f32 accumulation (looser tolerance).
    out_bf16 = jax.block_until_ready(module(x))
    assert out_bf16.shape == (2, 8, 16, 16) and out_bf16.dtype == jnp.float32
    np.testing.assert_allclose(np.asarray(out_bf16), np.asarray(ref),
                               rtol=5e-2, atol=5e-2)

    print("KERNEL_OK")
</pallas_src>

<mosaic_0001>
module attributes {stable_mosaic.version = 11 : i64} {
  func.func @kernel(%arg0: i32, %arg1: memref<256x56xf32, #tpu.memory_space<vmem>>, %arg2: memref<10x48x128xf32, #tpu.memory_space<vmem>>, %arg3: memref<256x128xf32, #tpu.memory_space<vmem>>) attributes {dimension_semantics = [#tpu.dimension_semantics<parallel>], iteration_bounds = array<i64: 2>, scalar_prefetch = 0 : i64, scratch_operands = 0 : i64, tpu.core_type = #tpu.core_type<tc>, window_params = [{transform_indices = @transform_0, window_bounds = array<i64: 256, 56>}, {pipeline_mode = #tpu.pipeline_mode<synchronous>, transform_indices = @transform_1, window_bounds = array<i64: 10, 48, 128>}, {transform_indices = @transform_2, window_bounds = array<i64: 256, 128>}]} {
    %c0 = arith.constant 0 : index
    %c0_0 = arith.constant 0 : index
    %0 = vector.load %arg1[%c0, %c0_0] : memref<256x56xf32, #tpu.memory_space<vmem>>, vector<256x56xf32>
    %1 = vector.extract_strided_slice %0 {offsets = [0, 0], sizes = [256, 48], strides = [1, 1]} : vector<256x56xf32> to vector<256x48xf32>
    %c0_1 = arith.constant 0 : index
    %c0_2 = arith.constant 0 : index
    %c0_3 = arith.constant 0 : index
    %2 = vector.load %arg2[%c0_1, %c0_2, %c0_3] : memref<10x48x128xf32, #tpu.memory_space<vmem>>, vector<1x48x128xf32>
    %3 = vector.shape_cast %2 : vector<1x48x128xf32> to vector<48x128xf32>
    %cst = arith.constant dense<0.000000e+00> : vector<256x128xf32>
    %4 = tpu.matmul %1, %3, %cst {dimension_numbers = #tpu.dot_dimension_numbers<[1], [0], [0], [1], [0, 0, 1, 1], [], []>} : vector<256x48xf32>, vector<48x128xf32>, vector<256x128xf32> -> vector<256x128xf32>
    %5 = vector.extract_strided_slice %0 {offsets = [0, 0], sizes = [256, 48], strides = [1, 1]} : vector<256x56xf32> to vector<256x48xf32>
    %6 = vector.extract_strided_slice %0 {offsets = [0, 0], sizes = [256, 48], strides = [1, 1]} : vector<256x56xf32> to vector<256x48xf32>
    %7 = arith.mulf %5, %6 : vector<256x48xf32>
    %c1 = arith.constant 1 : index
    %c0_4 = arith.constant 0 : index
    %c0_5 = arith.constant 0 : index
    %8 = vector.load %arg2[%c1, %c0_4, %c0_5] : memref<10x48x128xf32, #tpu.memory_space<vmem>>, vector<1x48x128xf32>
    %9 = vector.shape_cast %8 : vector<1x48x128xf32> to vector<48x128xf32>
    %cst_6 = arith.constant dense<0.000000e+00> : vector<256x128xf32>
    %10 = tpu.matmul %7, %9, %cst_6 {dimension_numbers = #tpu.dot_dimension_numbers<[1], [0], [0], [1], [0, 0, 1, 1], [], []>} : vector<256x48xf32>, vector<48x128xf32>, vector<256x128xf32> -> vector<256x128xf32>
    %11 = arith.addf %4, %10 : vector<256x128xf32>
    %12 = vector.extract_strided_slice %0 {offsets = [0, 0], sizes = [256, 48], strides = [1, 1]} : vector<256x56xf32> to vector<256x48xf32>
    %13 = vector.extract_strided_slice %0 {offsets = [0, 1], sizes = [256, 48], strides = [1, 1]} : vector<256x56xf32> to vector<256x48xf32>
    %14 = arith.mulf %12, %13 : vector<256x48xf32>
    %c2 = arith.constant 2 : index
    %c0_7 = arith.constant 0 : index
    %c0_8 = arith.constant 0 : index
    %15 = vector.load %arg2[%c2, %c0_7, %c0_8] : memref<10x48x128xf32, #tpu.memory_space<vmem>>, vector<1x48x128xf32>
    %16 = vector.shape_cast %15 : vector<1x48x128xf32> to vector<48x128xf32>
    %cst_9 = arith.constant dense<0.000000e+00> : vector<256x128xf32>
    %17 = tpu.matmul %14, %16, %cst_9 {dimension_numbers = #tpu.dot_dimension_numbers<[1], [0], [0], [1], [0, 0, 1, 1], [], []>} : vector<256x48xf32>, vector<48x128xf32>, vector<256x128xf32> -> vector<256x128xf32>
    %18 = arith.addf %11, %17 : vector<256x128xf32>
    %19 = vector.extract_strided_slice %0 {offsets = [0, 0], sizes = [256, 48], strides = [1, 1]} : vector<256x56xf32> to vector<256x48xf32>
    %20 = vector.extract_strided_slice %0 {offsets = [0, 2], sizes = [256, 48], strides = [1, 1]} : vector<256x56xf32> to vector<256x48xf32>
    %21 = arith.mulf %19, %20 : vector<256x48xf32>
    %c3 = arith.constant 3 : index
    %c0_10 = arith.constant 0 : index
    %c0_11 = arith.constant 0 : index
    %22 = vector.load %arg2[%c3, %c0_10, %c0_11] : memref<10x48x128xf32, #tpu.memory_space<vmem>>, vector<1x48x128xf32>
    %23 = vector.shape_cast %22 : vector<1x48x128xf32> to vector<48x128xf32>
    %cst_12 = arith.constant dense<0.000000e+00> : vector<256x128xf32>
    %24 = tpu.matmul %21, %23, %cst_12 {dimension_numbers = #tpu.dot_dimension_numbers<[1], [0], [0], [1], [0, 0, 1, 1], [], []>} : vector<256x48xf32>, vector<48x128xf32>, vector<256x128xf32> -> vector<256x128xf32>
    %25 = arith.addf %18, %24 : vector<256x128xf32>
    %26 = vector.extract_strided_slice %0 {offsets = [0, 0], sizes = [256, 48], strides = [1, 1]} : vector<256x56xf32> to vector<256x48xf32>
    %27 = vector.extract_strided_slice %0 {offsets = [0, 3], sizes = [256, 48], strides = [1, 1]} : vector<256x56xf32> to vector<256x48xf32>
    %28 = arith.mulf %26, %27 : vector<256x48xf32>
    %c4 = arith.constant 4 : index
    %c0_13 = arith.constant 0 : index
    %c0_14 = arith.constant 0 : index
    %29 = vector.load %arg2[%c4, %c0_13, %c0_14] : memref<10x48x128xf32, #tpu.memory_space<vmem>>, vector<1x48x128xf32>
    %30 = vector.shape_cast %29 : vector<1x48x128xf32> to vector<48x128xf32>
    %cst_15 = arith.constant dense<0.000000e+00> : vector<256x128xf32>
    %31 = tpu.matmul %28, %30, %cst_15 {dimension_numbers = #tpu.dot_dimension_numbers<[1], [0], [0], [1], [0, 0, 1, 1], [], []>} : vector<256x48xf32>, vector<48x128xf32>, vector<256x128xf32> -> vector<256x128xf32>
    %32 = arith.addf %25, %31 : vector<256x128xf32>
    %33 = vector.extract_strided_slice %0 {offsets = [0, 0], sizes = [256, 48], strides = [1, 1]} : vector<256x56xf32> to vector<256x48xf32>
    %34 = vector.extract_strided_slice %0 {offsets = [0, 4], sizes = [256, 48], strides = [1, 1]} : vector<256x56xf32> to vector<256x48xf32>
    %35 = arith.mulf %33, %34 : vector<256x48xf32>
    %c5 = arith.constant 5 : index
    %c0_16 = arith.constant 0 : index
    %c0_17 = arith.constant 0 : index
    %36 = vector.load %arg2[%c5, %c0_16, %c0_17] : memref<10x48x128xf32, #tpu.memory_space<vmem>>, vector<1x48x128xf32>
    %37 = vector.shape_cast %36 : vector<1x48x128xf32> to vector<48x128xf32>
    %cst_18 = arith.constant dense<0.000000e+00> : vector<256x128xf32>
    %38 = tpu.matmul %35, %37, %cst_18 {dimension_numbers = #tpu.dot_dimension_numbers<[1], [0], [0], [1], [0, 0, 1, 1], [], []>} : vector<256x48xf32>, vector<48x128xf32>, vector<256x128xf32> -> vector<256x128xf32>
    %39 = arith.addf %32, %38 : vector<256x128xf32>
    %40 = vector.extract_strided_slice %0 {offsets = [0, 0], sizes = [256, 48], strides = [1, 1]} : vector<256x56xf32> to vector<256x48xf32>
    %41 = vector.extract_strided_slice %0 {offsets = [0, 5], sizes = [256, 48], strides = [1, 1]} : vector<256x56xf32> to vector<256x48xf32>
    %42 = arith.mulf %40, %41 : vector<256x48xf32>
    %c6 = arith.constant 6 : index
    %c0_19 = arith.constant 0 : index
    %c0_20 = arith.constant 0 : index
    %43 = vector.load %arg2[%c6, %c0_19, %c0_20] : memref<10x48x128xf32, #tpu.memory_space<vmem>>, vector<1x48x128xf32>
    %44 = vector.shape_cast %43 : vector<1x48x128xf32> to vector<48x128xf32>
    %cst_21 = arith.constant dense<0.000000e+00> : vector<256x128xf32>
    %45 = tpu.matmul %42, %44, %cst_21 {dimension_numbers = #tpu.dot_dimension_numbers<[1], [0], [0], [1], [0, 0, 1, 1], [], []>} : vector<256x48xf32>, vector<48x128xf32>, vector<256x128xf32> -> vector<256x128xf32>
    %46 = arith.addf %39, %45 : vector<256x128xf32>
    %47 = vector.extract_strided_slice %0 {offsets = [0, 0], sizes = [256, 48], strides = [1, 1]} : vector<256x56xf32> to vector<256x48xf32>
    %48 = vector.extract_strided_slice %0 {offsets = [0, 6], sizes = [256, 48], strides = [1, 1]} : vector<256x56xf32> to vector<256x48xf32>
    %49 = arith.mulf %47, %48 : vector<256x48xf32>
    %c7 = arith.constant 7 : index
    %c0_22 = arith.constant 0 : index
    %c0_23 = arith.constant 0 : index
    %50 = vector.load %arg2[%c7, %c0_22, %c0_23] : memref<10x48x128xf32, #tpu.memory_space<vmem>>, vector<1x48x128xf32>
    %51 = vector.shape_cast %50 : vector<1x48x128xf32> to vector<48x128xf32>
    %cst_24 = arith.constant dense<0.000000e+00> : vector<256x128xf32>
    %52 = tpu.matmul %49, %51, %cst_24 {dimension_numbers = #tpu.dot_dimension_numbers<[1], [0], [0], [1], [0, 0, 1, 1], [], []>} : vector<256x48xf32>, vector<48x128xf32>, vector<256x128xf32> -> vector<256x128xf32>
    %53 = arith.addf %46, %52 : vector<256x128xf32>
    %54 = vector.extract_strided_slice %0 {offsets = [0, 0], sizes = [256, 48], strides = [1, 1]} : vector<256x56xf32> to vector<256x48xf32>
    %55 = vector.extract_strided_slice %0 {offsets = [0, 7], sizes = [256, 48], strides = [1, 1]} : vector<256x56xf32> to vector<256x48xf32>
    %56 = arith.mulf %54, %55 : vector<256x48xf32>
    %c8 = arith.constant 8 : index
    %c0_25 = arith.constant 0 : index
    %c0_26 = arith.constant 0 : index
    %57 = vector.load %arg2[%c8, %c0_25, %c0_26] : memref<10x48x128xf32, #tpu.memory_space<vmem>>, vector<1x48x128xf32>
    %58 = vector.shape_cast %57 : vector<1x48x128xf32> to vector<48x128xf32>
    %cst_27 = arith.constant dense<0.000000e+00> : vector<256x128xf32>
    %59 = tpu.matmul %56, %58, %cst_27 {dimension_numbers = #tpu.dot_dimension_numbers<[1], [0], [0], [1], [0, 0, 1, 1], [], []>} : vector<256x48xf32>, vector<48x128xf32>, vector<256x128xf32> -> vector<256x128xf32>
    %60 = arith.addf %53, %59 : vector<256x128xf32>
    %61 = vector.extract_strided_slice %0 {offsets = [0, 0], sizes = [256, 48], strides = [1, 1]} : vector<256x56xf32> to vector<256x48xf32>
    %62 = vector.extract_strided_slice %0 {offsets = [0, 8], sizes = [256, 48], strides = [1, 1]} : vector<256x56xf32> to vector<256x48xf32>
    %63 = arith.mulf %61, %62 : vector<256x48xf32>
    %c9 = arith.constant 9 : index
    %c0_28 = arith.constant 0 : index
    %c0_29 = arith.constant 0 : index
    %64 = vector.load %arg2[%c9, %c0_28, %c0_29] : memref<10x48x128xf32, #tpu.memory_space<vmem>>, vector<1x48x128xf32>
    %65 = vector.shape_cast %64 : vector<1x48x128xf32> to vector<48x128xf32>
    %cst_30 = arith.constant dense<0.000000e+00> : vector<256x128xf32>
    %66 = tpu.matmul %63, %65, %cst_30 {dimension_numbers = #tpu.dot_dimension_numbers<[1], [0], [0], [1], [0, 0, 1, 1], [], []>} : vector<256x48xf32>, vector<48x128xf32>, vector<256x128xf32> -> vector<256x128xf32>
    %67 = arith.addf %60, %66 : vector<256x128xf32>
    %c0_31 = arith.constant 0 : index
    %c0_32 = arith.constant 0 : index
    %68 = vector.load %arg3[%c0_31, %c0_32] : memref<256x128xf32, #tpu.memory_space<vmem>>, vector<256x128xf32>
    tpu.vector_store %arg3[%c0_31, %c0_32], %67 {strides = array<i32>} : memref<256x128xf32, #tpu.memory_space<vmem>>, vector<256x128xf32>,
    return
  }
  func.func @transform_0(%arg0: i32) -> (i32, i32) {
    %c0_i32 = arith.constant 0 : i32
    %c0_i32_0 = arith.constant 0 : i32
    return %arg0, %c0_i32 : i32, i32
  }
  func.func @transform_1(%arg0: i32) -> (i32, i32, i32) {
    %c0_i32 = arith.constant 0 : i32
    %c0_i32_0 = arith.constant 0 : i32
    %c0_i32_1 = arith.constant 0 : i32
    %c0_i32_2 = arith.constant 0 : i32
    return %c0_i32, %c0_i32_0, %c0_i32_1 : i32, i32, i32
  }
  func.func @transform_2(%arg0: i32) -> (i32, i32) {
    %c0_i32 = arith.constant 0 : i32
    %c0_i32_0 = arith.constant 0 : i32
    return %arg0, %c0_i32 : i32, i32
  }
}

</mosaic_0001>

<llo_original>
// kernel: tpu_custom_call.1
$region0: #{tpu_custom_call.1}
  #allocation0 [shape = 'u32[]', space=smem, size = 0x4, offset = 0x4, fixed_abs, tag = 'smem constant byte address 0x4 - core index']
  #allocation1 [shape = 'u32[144,128]{1,0:T(1,128)}', space=vmem, size = 0x12000, scoped, tag = 'internal scratch']
  %s0 = inlined_call_operand.vmem [shape: f32[512,56], index: 0, kind: input, shape index: {}]
  %s1 = inlined_call_operand.vmem [shape: f32[10,48,128], index: 1, kind: input, shape index: {}]
  %s2 = inlined_call_operand.hbm [shape: f32[512,128], index: 2, kind: output, shape index: {}]
  %s3 = sld [smem:[#allocation0]]
  $region41: #{tpu_custom_call.1} parent=0
    _
  %s5 = ssub.s32 1, %s3
  %s6 = scalar_select 0, %s5, %s3
  $region1: #{tpu_custom_call.1} parent=0
    #allocation2 [shape = 'u8[262144]{0}', space=vmem, size = 0x40000, scoped, tag = 'output window, operand 0']
    #allocation3 [shape = 's32[2]{0}', space=sflag, size = 0x8, scoped, tag = 'scoped memory for tpu_custom_call.1']
    %7 = vsyncpa [#allocation3], 0
    %s8 = scalar_lea.sflag [#allocation3], 1
    %9 = vsyncpa %s8, 0
    loop: start=0, step=1, limit=4
    $region2: #{tpu_custom_call.1} parent=1 // loop_pre_header
      _
    $region3: #{tpu_custom_call.1} parent=1 // loop_header
      %s11 = sphi 0, %s15
      %p12 = scmp.ge.s32.totalorder %s11, 4
      %s21 = sphi 0, %s23
      %s24 = sphi 0, %s21
      %s25 = sphi 0, %s24
      %s41 = sphi 0, %s25
      %s45 = sphi 0, %s45
      %s47 = sphi 0, %s45
      %s48 = sphi 0, %s47
      %s62 = sphi 0, %s48
      %s68 = sphi 0, %s70
      %s71 = sphi 0, %s68
      %s72 = sphi 0, %s71
      %s88 = sphi 0, %s72
    $region4: #{tpu_custom_call.1} parent=1 // loop_header_branch
      %14 = sbr.rel (%p12) target = $region8
    $region5: #{tpu_custom_call.1} parent=1 // loop_body
      %s16 = ssub.s32 %s11, 1
      %s17 = ssub.s32 %s11, 2
      %s18 = sadd.s32 %s11, 1
      %s19 = ssub.s32 %s11, %s18
      %p20 = scmp.eq.s32.totalorder %s19, 0
      %s22 = sadd.s32 %s21, 1
      %s23 = scalar_select %p20, %s21, %s22
      %p26 = pneg %p20
      %p27 = scmp.eq.s32.totalorder %s11, 1
      %p28 = por %p26, %p27
      %p29 = scmp.ne.s32.totalorder %s21, %s24
      %p30 = scmp.eq.s32.totalorder %s11, 0
      %p31 = por %p29, %p30
      %p32 = scmp.ne.s32.totalorder %s21, %s24
      %p33 = scmp.eq.s32.totalorder %s16, 1
      %p34 = por %p32, %p33
      %p35 = scmp.ne.s32.totalorder %s24, %s25
      %p36 = scmp.eq.s32.totalorder %s16, 0
      %p37 = por %p35, %p36
      %p38 = scmp.ne.s32.totalorder %s24, %s25
      %p39 = scmp.eq.s32.totalorder %s17, 1
      %p40 = por %p38, %p39
      %p42 = scmp.ne.s32.totalorder %s25, %s41
      %p43 = scmp.eq.s32.totalorder %s17, 0
      %p44 = por %p42, %p43
      %s46 = sadd.s32 %s45, 1
      %p49 = scmp.eq.s32.totalorder %s11, 1
      %p50 = scmp.ne.s32.totalorder %s45, %s47
      %p51 = scmp.eq.s32.totalorder %s11, 0
      %p52 = por %p50, %p51
      %p53 = scmp.ne.s32.totalorder %s45, %s47
      %p54 = scmp.eq.s32.totalorder %s16, 1
      %p55 = por %p53, %p54
      %p56 = scmp.ne.s32.totalorder %s47, %s48
      %p57 = scmp.eq.s32.totalorder %s16, 0
      %p58 = por %p56, %p57
      %p59 = scmp.ne.s32.totalorder %s47, %s48
      %p60 = scmp.eq.s32.totalorder %s17, 1
      %p61 = por %p59, %p60
      %p63 = scmp.ne.s32.totalorder %s48, %s62
      %p64 = scmp.eq.s32.totalorder %s17, 0
      %p65 = por %p63, %p64
      %s66 = ssub.s32 %s11, %s18
      %p67 = scmp.eq.s32.totalorder %s66, 0
      %s69 = sadd.s32 %s68, 1
      %s70 = scalar_select %p67, %s68, %s69
      %p73 = pneg %p67
      %p74 = scmp.eq.s32.totalorder %s11, 1
      %p75 = por %p73, %p74
      %p76 = scmp.ne.s32.totalorder %s68, %s71
      %p77 = scmp.eq.s32.totalorder %s11, 0
      %p78 = por %p76, %p77
      %p79 = scmp.ne.s32.totalorder %s68, %s71
      %p80 = scmp.eq.s32.totalorder %s16, 1
      %p81 = por %p79, %p80
      %p82 = scmp.ne.s32.totalorder %s71, %s72
      %p83 = scmp.eq.s32.totalorder %s16, 0
      %p84 = por %p82, %p83
      %p85 = scmp.ne.s32.totalorder %s71, %s72
      %p86 = scmp.eq.s32.totalorder %s17, 1
      %p87 = por %p85, %p86
      %p89 = scmp.ne.s32.totalorder %s72, %s88
      %p90 = scmp.eq.s32.totalorder %s17, 0
      %p91 = por %p89, %p90
      %p92 = scmp.le.s32.totalorder 1, %s11
      %p93 = scmp.lt.s32.totalorder %s11, 3
      %p94 = pnand %p92, %p93
      %p95 = pneg %p94
      // Predicated region
      $region9: #{tpu_custom_call.1} parent=5 // pred_check
        _
      $region10: #{tpu_custom_call.1} parent=5 // pred_check_branch
        %97 = sbr.rel (%p94) target = $region12
      $region11: #{tpu_custom_call.1} parent=5 // pred_region
        %s98 = ssub.s32 %s11, 1
        // Predicated region
        $region13: #{tpu_custom_call.1} parent=11 // pred_check
          %p99 = pneg %p58
        $region14: #{tpu_custom_call.1} parent=11 // pred_check_branch
          %101 = sbr.rel (%p99) target = $region16
        $region15: #{tpu_custom_call.1} parent=11 // pred_region
          _
        $region16: #{tpu_custom_call.1} parent=11 // pred_fallthru
          _
      $region12: #{tpu_custom_call.1} parent=5 // pred_fallthru
        _
      %p102 = scmp.lt.s32.totalorder %s11, 2
      // Predicated region
      $region17: #{tpu_custom_call.1} parent=5 // pred_check
        %p103 = pneg %p102
      $region18: #{tpu_custom_call.1} parent=5 // pred_check_branch
        %105 = sbr.rel (%p103) target = $region20
      $region19: #{tpu_custom_call.1} parent=5 // pred_region
        // Predicated region
        $region21: #{tpu_custom_call.1} parent=19 // pred_check
          %p106 = pneg %p31
        $region22: #{tpu_custom_call.1} parent=19 // pred_check_branch
          %108 = sbr.rel (%p106) target = $region24
        $region23: #{tpu_custom_call.1} parent=19 // pred_region
          %s109 = smul.u32 32, %s11
          %p110 = scmp.lt.s32.totalorder %s109, 63
          %s111 = scalar_select %p110, %s109, 63
          %s112 = smul.addr %s111, 8
          %s113 = scalar_lea.vmem %s0, %s112
          %s114 = smul.u32 32, %s11
        $region24: #{tpu_custom_call.1} parent=19 // pred_fallthru
          _
      $region20: #{tpu_custom_call.1} parent=5 // pred_fallthru
        _
      %p115 = scmp.le.s32.totalorder 1, %s11
      %p116 = scmp.lt.s32.totalorder %s11, 3
      %p117 = pnand %p115, %p116
      %p118 = pneg %p117
      // Predicated region
      $region25: #{tpu_custom_call.1} parent=5 // pred_check
        _
      $region26: #{tpu_custom_call.1} parent=5 // pred_check_branch
        %120 = sbr.rel (%p117) target = $region28
      $region27: #{tpu_custom_call.1} parent=5 // pred_region
        %s121 = ssub.s32 %s11, 1
        %s122 = smul.u32 32, %s16
        %p123 = scmp.lt.s32.totalorder %s122, 63
        %s124 = scalar_select %p123, %s122, 63
        %s125 = smul.addr %s124, 8
        %s126 = scalar_lea.vmem %s0, %s125
        %p127 = pneg %p37
        %p128 = pneg %p34
        %p129 = pneg %p58
        %p130 = pneg %p55
        %p131 = pneg %p84
        %p132 = pneg %p81
        %s133 = sand.u32 %s71, 1
        %s134 = scalar_lea.sflag [#allocation3], %s133
        %s135 = sand.u32 %s71, 1
        %s136 = smul.addr %s135, 256
        %s137 = scalar_lea.vmem [#allocation2], %s136
        %s138 = smul.u32 32, %s16
        %p139 = scmp.lt.s32.totalorder %s138, 63
        %s140 = scalar_select %p139, %s138, 63
        %s141 = smul.addr %s140, 8
        %s142 = scalar_lea.vmem %s0, %s141
        %s143 = smul.u32 32, %s16
        %s144 = smul.u32 32, %s16
        %v145 = vld [vmem:[%s142] sm:$0xff]
        %v146 = vld [vmem:[%s142 + $0x8] sm:$0xff]
        %v147 = vld [vmem:[%s142 + $0x10] sm:$0xff]
        %v148 = vld [vmem:[%s142 + $0x18] sm:$0xff]
        %v149 = vld [vmem:[%s142 + $0x20] sm:$0xff]
        %v150 = vld [vmem:[%s142 + $0x28] sm:$0xff]
        %v151 = vld [vmem:[%s142 + $0x30] sm:$0xff]
        %v152 = vld [vmem:[%s142 + $0x38] sm:$0xff]
        %v153 = vld [vmem:[%s142 + $0x40] sm:$0xff]
        %v154 = vld [vmem:[%s142 + $0x48] sm:$0xff]
        %v155 = vld [vmem:[%s142 + $0x50] sm:$0xff]
        %v156 = vld [vmem:[%s142 + $0x58] sm:$0xff]
        %v157 = vld [vmem:[%s142 + $0x60] sm:$0xff]
        %v158 = vld [vmem:[%s142 + $0x68] sm:$0xff]
        %v159 = vld [vmem:[%s142 + $0x70] sm:$0xff]
        %v160 = vld [vmem:[%s142 + $0x78] sm:$0xff]
        %v161 = vld [vmem:[%s142 + $0x80] sm:$0xff]
        %v162 = vld [vmem:[%s142 + $0x88] sm:$0xff]
        %v163 = vld [vmem:[%s142 + $0x90] sm:$0xff]
        %v164 = vld [vmem:[%s142 + $0x98] sm:$0xff]
        %v165 = vld [vmem:[%s142 + $0xa0] sm:$0xff]
        %v166 = vld [vmem:[%s142 + $0xa8] sm:$0xff]
        %v167 = vld [vmem:[%s142 + $0xb0] sm:$0xff]
        %v168 = vld [vmem:[%s142 + $0xb8] sm:$0xff]
        %v169 = vld [vmem:[%s142 + $0xc0] sm:$0xff]
        %v170 = vld [vmem:[%s142 + $0xc8] sm:$0xff]
        %v171 = vld [vmem:[%s142 + $0xd0] sm:$0xff]
        %v172 = vld [vmem:[%s142 + $0xd8] sm:$0xff]
        %v173 = vld [vmem:[%s142 + $0xe0] sm:$0xff]
        %v174 = vld [vmem:[%s142 + $0xe8] sm:$0xff]
        %v175 = vld [vmem:[%s142 + $0xf0] sm:$0xff]
        %v176 = vld [vmem:[%s142 + $0xf8] sm:$0xff]
        %v177 = vld [vmem:[%s1] sm:$0xff]
        %v178 = vld [vmem:[%s1 + $0x8] sm:$0xff]
        %v179 = vld [vmem:[%s1 + $0x10] sm:$0xff]
        %v180 = vld [vmem:[%s1 + $0x18] sm:$0xff]
        %v181 = vld [vmem:[%s1 + $0x20] sm:$0xff]
        %v182 = vld [vmem:[%s1 + $0x28] sm:$0xff]
        %v183 = vmul.f32 %v145, %v145
        %v184 = vmul.f32 %v146, %v146
        %v185 = vmul.f32 %v147, %v147
        %v186 = vmul.f32 %v148, %v148
        %v187 = vmul.f32 %v149, %v149
        %v188 = vmul.f32 %v150, %v150
        %v189 = vmul.f32 %v151, %v151
        %v190 = vmul.f32 %v152, %v152
        %v191 = vmul.f32 %v153, %v153
        %v192 = vmul.f32 %v154, %v154
        %v193 = vmul.f32 %v155, %v155
        %v194 = vmul.f32 %v156, %v156
        %v195 = vmul.f32 %v157, %v157
        %v196 = vmul.f32 %v158, %v158
        %v197 = vmul.f32 %v159, %v159
        %v198 = vmul.f32 %v160, %v160
        %v199 = vmul.f32 %v161, %v161
        %v200 = vmul.f32 %v162, %v162
        %v201 = vmul.f32 %v163, %v163
        %v202 = vmul.f32 %v164, %v164
        %v203 = vmul.f32 %v165, %v165
        %v204 = vmul.f32 %v166, %v166
        %v205 = vmul.f32 %v167, %v167
        %v206 = vmul.f32 %v168, %v168
        %v207 = vmul.f32 %v169, %v169
        %v208 = vmul.f32 %v170, %v170
        %v209 = vmul.f32 %v171, %v171
        %v210 = vmul.f32 %v172, %v172
        %v211 = vmul.f32 %v173, %v173
        %v212 = vmul.f32 %v174, %v174
        %v213 = vmul.f32 %v175, %v175
        %v214 = vmul.f32 %v176, %v176
        %s215 = scalar_lea.vmem %s1, 48
        %v216 = vld [vmem:[%s215] sm:$0xff]
        %v217 = vld [vmem:[%s215 + $0x8] sm:$0xff]
        %v218 = vld [vmem:[%s215 + $0x10] sm:$0xff]
        %v219 = vld [vmem:[%s215 + $0x18] sm:$0xff]
        %v220 = vld [vmem:[%s215 + $0x20] sm:$0xff]
        %v221 = vld [vmem:[%s215 + $0x28] sm:$0xff]
        %vm222 = vcmask 392192
        %v224 = vsel %vm222, %v183, 0
        %v227 = vsel %vm222, %v184, 0
        %v230 = vsel %vm222, %v185, 0
        %v233 = vsel %vm222, %v186, 0
        %v236 = vsel %vm222, %v187, 0
        %v239 = vsel %vm222, %v188, 0
        %v242 = vsel %vm222, %v189, 0
        %v245 = vsel %vm222, %v190, 0
        %v248 = vsel %vm222, %v191, 0
        %v251 = vsel %vm222, %v192, 0
        %v254 = vsel %vm222, %v193, 0
        %v257 = vsel %vm222, %v194, 0
        %v260 = vsel %vm222, %v195, 0
        %v263 = vsel %vm222, %v196, 0
        %v266 = vsel %vm222, %v197, 0
        %v269 = vsel %vm222, %v198, 0
        %v272 = vsel %vm222, %v199, 0
        %v275 = vsel %vm222, %v200, 0
        %v278 = vsel %vm222, %v201, 0
        %v281 = vsel %vm222, %v202, 0
        %v284 = vsel %vm222, %v203, 0
        %v287 = vsel %vm222, %v204, 0
        %v290 = vsel %vm222, %v205, 0
        %v293 = vsel %vm222, %v206, 0
        %v296 = vsel %vm222, %v207, 0
        %v299 = vsel %vm222, %v208, 0
        %v302 = vsel %vm222, %v209, 0
        %v305 = vsel %vm222, %v210, 0
        %v308 = vsel %vm222, %v211, 0
        %v311 = vsel %vm222, %v212, 0
        %v314 = vsel %vm222, %v213, 0
        %v317 = vsel %vm222, %v214, 0
        %319 = vmatprep.subr.mxu0 0.0
        %320 = vmatpush1.msra.mxu0 %v216
        %321 = vmatprep.subr.mxu0 0.0
        %322 = vmatpush1.msra.mxu0 %v217
        %323 = vmatprep.subr.mxu0 0.0
        %324 = vmatpush1.msra.mxu0 %v218
        %325 = vmatprep.subr.mxu0 0.0
        %326 = vmatpush1.msra.mxu0 %v219
        %327 = vmatprep.subr.mxu0 0.0
        %328 = vmatpush1.msra.mxu0 %v220
        %329 = vmatprep.subr.mxu0 0.0
        %330 = vmatpush1.msra.mxu0 %v221
        %331 = vmatprep.subr.mxu0 0.0
        %332 = vmatpush1.msra.mxu0 0.0
        %333 = vmatprep.subr.mxu0 0.0
        %334 = vmatpush1.msra.mxu0 0.0
        %335 = vmatprep.subr.mxu0 0.0
        %336 = vmatpush1.msra.mxu0 0.0
        %337 = vmatprep.subr.mxu0 0.0
        %338 = vmatpush1.msra.mxu0 0.0
        %339 = vmatprep.subr.mxu0 0.0
        %340 = vmatpush1.msra.mxu0 0.0
        %341 = vmatprep.subr.mxu0 0.0
        %342 = vmatpush1.msra.mxu0 0.0
        %343 = vmatprep.subr.mxu0 0.0
        %344 = vmatpush1.msra.mxu0 0.0
        %345 = vmatprep.subr.mxu0 0.0
        %346 = vmatpush1.msra.mxu0 0.0
        %347 = vmatprep.subr.mxu0 0.0
        %348 = vmatpush1.msra.mxu0 0.0
        %349 = vmatprep.subr.mxu0 0.0
        %350 = vmatpush1.msra.mxu0 0.0
        %351 = vmatprep.subr.mxu0 0.0
        %352 = vmatpush1.msra.mxu0 0.0
        %353 = vmatprep.subr.mxu0 0.0
        %354 = vmatpush1.msra.mxu0 0.0
        %355 = vmatprep.subr.mxu0 0.0
        %356 = vmatpush1.msra.mxu0 0.0
        %357 = vmatprep.subr.mxu0 0.0
        %358 = vmatpush1.msra.mxu0 0.0
        %359 = vmatprep.subr.mxu0 0.0
        %360 = vmatpush1.msra.mxu0 0.0
        %361 = vmatprep.subr.mxu0 0.0
        %362 = vmatpush1.msra.mxu0 0.0
        %363 = vmatprep.subr.mxu0 0.0
        %364 = vmatpush1.msra.mxu0 0.0
        %365 = vmatprep.subr.mxu0 0.0
        %366 = vmatpush1.msra.mxu0 0.0
        %367 = vmatprep.subr.mxu0 0.0
        %368 = vmatpush1.msra.mxu0 0.0
        %369 = vmatprep.subr.mxu0 0.0
        %370 = vmatpush1.msra.mxu0 0.0
        %371 = vmatprep.subr.mxu0 0.0
        %372 = vmatpush1.msra.mxu0 0.0
        %373 = vmatprep.subr.mxu0 0.0
        %374 = vmatpush1.msra.mxu0 0.0
        %375 = vmatprep.subr.mxu0 0.0
        %376 = vmatpush1.msra.mxu0 0.0
        %377 = vmatprep.subr.mxu0 0.0
        %378 = vmatpush1.msra.mxu0 0.0
        %379 = vmatprep.subr.mxu0 0.0
        %380 = vmatpush1.msra.mxu0 0.0
        %381 = vmatprep.subr.mxu0 0.0
        %382 = vmatpush1.msra.mxu0 0.0
        %383 = vmatprep.mubr.f32.mxu0 0.0
        %384 = vmatmul.mubr.f32.gmra.mrb[0].mxu0 %v224
        %v385 = vpop.f32.mrb[0].mxu0
        %v386 = vadd.f32 0.0, %v385
        %v387 = vpop.f32.mrb[0].mxu0
        %388 = vmatprep.mubr.f32.mxu0 0.0
        %389 = vmatmul.mubr.f32.gmra.mrb[0].mxu0 %v227
        %v390 = vpop.f32.mrb[0].mxu0
        %v391 = vadd.f32 0.0, %v390
        %v392 = vpop.f32.mrb[0].mxu0
        %393 = vmatprep.mubr.f32.mxu0 0.0
        %394 = vmatmul.mubr.f32.gmra.mrb[0].mxu0 %v230
        %v395 = vpop.f32.mrb[0].mxu0
        %v396 = vadd.f32 0.0, %v395
        %v397 = vpop.f32.mrb[0].mxu0
        %398 = vmatprep.mubr.f32.mxu0 0.0
        %399 = vmatmul.mubr.f32.gmra.mrb[0].mxu0 %v233
        %v400 = vpop.f32.mrb[0].mxu0
        %v401 = vadd.f32 0.0, %v400
        %v402 = vpop.f32.mrb[0].mxu0
        %403 = vmatprep.mubr.f32.mxu0 0.0
        %404 = vmatmul.mubr.f32.gmra.mrb[0].mxu0 %v236
        %v405 = vpop.f32.mrb[0].mxu0
        %v406 = vadd.f32 0.0, %v405
        %v407 = vpop.f32.mrb[0].mxu0
        %408 = vmatprep.mubr.f32.mxu0 0.0
        %409 = vmatmul.mubr.f32.gmra.mrb[0].mxu0 %v239
        %v410 = vpop.f32.mrb[0].mxu0
        %v411 = vadd.f32 0.0, %v410
        %v412 = vpop.f32.mrb[0].mxu0
        %413 = vmatprep.mubr.f32.mxu0 0.0
        %414 = vmatmul.mubr.f32.gmra.mrb[0].mxu0 %v242
        %v415 = vpop.f32.mrb[0].mxu0
        %v416 = vadd.f32 0.0, %v415
        %v417 = vpop.f32.mrb[0].mxu0
        %418 = vmatprep.mubr.f32.mxu0 0.0
        %419 = vmatmul.mubr.f32.gmra.mrb[0].mxu0 %v245
        %v420 = vpop.f32.mrb[0].mxu0
        %v421 = vadd.f32 0.0, %v420
        %v422 = vpop.f32.mrb[0].mxu0
        %423 = vmatprep.mubr.f32.mxu0 0.0
        %424 = vmatmul.mubr.f32.gmra.mrb[0].mxu0 %v248
        %v425 = vpop.f32.mrb[0].mxu0
        %v426 = vadd.f32 0.0, %v425
        %v427 = vpop.f32.mrb[0].mxu0
        %428 = vmatprep.mubr.f32.mxu0 0.0
        %429 = vmatmul.mubr.f32.gmra.mrb[0].mxu0 %v251
        %v430 = vpop.f32.mrb[0].mxu0
        %v431 = vadd.f32 0.0, %v430
        %v432 = vpop.f32.mrb[0].mxu0
        %433 = vmatprep.mubr.f32.mxu0 0.0
        %434 = vmatmul.mubr.f32.gmra.mrb[0].mxu0 %v254
        %v435 = vpop.f32.mrb[0].mxu0
        %v436 = vadd.f32 0.0, %v435
        %v437 = vpop.f32.mrb[0].mxu0
        %438 = vmatprep.mubr.f32.mxu0 0.0
        %439 = vmatmul.mubr.f32.gmra.mrb[0].mxu0 %v257
        %v440 = vpop.f32.mrb[0].mxu0
        %v441 = vadd.f32 0.0, %v440
        %v442 = vpop.f32.mrb[0].mxu0
        %443 = vmatprep.mubr.f32.mxu0 0.0
        %444 = vmatmul.mubr.f32.gmra.mrb[0].mxu0 %v260
        %v445 = vpop.f32.mrb[0].mxu0
        %v446 = vadd.f32 0.0, %v445
        %v447 = vpop.f32.mrb[0].mxu0
        %448 = vmatprep.mubr.f32.mxu0 0.0
        %449 = vmatmul.mubr.f32.gmra.mrb[0].mxu0 %v263
        %v450 = vpop.f32.mrb[0].mxu0
        %v451 = vadd.f32 0.0, %v450
        %v452 = vpop.f32.mrb[0].mxu0
        %453 = vmatprep.mubr.f32.mxu0 0.0
        %454 = vmatmul.mubr.f32.gmra.mrb[0].mxu0 %v266
        %v455 = vpop.f32.mrb[0].mxu0
        %v456 = vadd.f32 0.0, %v455
        %v457 = vpop.f32.mrb[0].mxu0
        %458 = vmatprep.mubr.f32.mxu0 0.0
        %459 = vmatmul.mubr.f32.gmra.mrb[0].mxu0 %v269
        %v460 = vpop.f32.mrb[0].mxu0
        %v461 = vadd.f32 0.0, %v460
        %v462 = vpop.f32.mrb[0].mxu0
        %463 = vmatprep.mubr.f32.mxu0 0.0
        %464 = vmatmul.mubr.f32.gmra.mrb[0].mxu0 %v272
        %v465 = vpop.f32.mrb[0].mxu0
        %v466 = vadd.f32 0.0, %v465
        %v467 = vpop.f32.mrb[0].mxu0
        %468 = vmatprep.mubr.f32.mxu0 0.0
        %469 = vmatmul.mubr.f32.gmra.mrb[0].mxu0 %v275
        %v470 = vpop.f32.mrb[0].mxu0
        %v471 = vadd.f32 0.0, %v470
        %v472 = vpop.f32.mrb[0].mxu0
        %473 = vmatprep.mubr.f32.mxu0 0.0
        %474 = vmatmul.mubr.f32.gmra.mrb[0].mxu0 %v278
        %v475 = vpop.f32.mrb[0].mxu0
        %v476 = vadd.f32 0.0, %v475
        %v477 = vpop.f32.mrb[0].mxu0
        %478 = vmatprep.mubr.f32.mxu0 0.0
        %479 = vmatmul.mubr.f32.gmra.mrb[0].mxu0 %v281
        %v480 = vpop.f32.mrb[0].mxu0
        %v481 = vadd.f32 0.0, %v480
        %v482 = vpop.f32.mrb[0].mxu0
        %483 = vmatprep.mubr.f32.mxu0 0.0
        %484 = vmatmul.mubr.f32.gmra.mrb[0].mxu0 %v284
        %v485 = vpop.f32.mrb[0].mxu0
        %v486 = vadd.f32 0.0, %v485
        %v487 = vpop.f32.mrb[0].mxu0
        %488 = vmatprep.mubr.f32.mxu0 0.0
        %489 = vmatmul.mubr.f32.gmra.mrb[0].mxu0 %v287
        %v490 = vpop.f32.mrb[0].mxu0
        %v491 = vadd.f32 0.0, %v490
        %v492 = vpop.f32.mrb[0].mxu0
        %493 = vmatprep.mubr.f32.mxu0 0.0
        %494 = vmatmul.mubr.f32.gmra.mrb[0].mxu0 %v290
        %v495 = vpop.f32.mrb[0].mxu0
        %v496 = vadd.f32 0.0, %v495
        %v497 = vpop.f32.mrb[0].mxu0
        %498 = vmatprep.mubr.f32.mxu0 0.0
        %499 = vmatmul.mubr.f32.gmra.mrb[0].mxu0 %v293
        %v500 = vpop.f32.mrb[0].mxu0
        %v501 = vadd.f32 0.0, %v500
        %v502 = vpop.f32.mrb[0].mxu0
        %503 = vmatprep.mubr.f32.mxu0 0.0
        %504 = vmatmul.mubr.f32.gmra.mrb[0].mxu0 %v296
        %v505 = vpop.f32.mrb[0].mxu0
        %v506 = vadd.f32 0.0, %v505
        %v507 = vpop.f32.mrb[0].mxu0
        %508 = vmatprep.mubr.f32.mxu0 0.0
        %509 = vmatmul.mubr.f32.gmra.mrb[0].mxu0 %v299
        %v510 = vpop.f32.mrb[0].mxu0
        %v511 = vadd.f32 0.0, %v510
        %v512 = vpop.f32.mrb[0].mxu0
        %513 = vmatprep.mubr.f32.mxu0 0.0
        %514 = vmatmul.mubr.f32.gmra.mrb[0].mxu0 %v302
        %v515 = vpop.f32.mrb[0].mxu0
        %v516 = vadd.f32 0.0, %v515
        %v517 = vpop.f32.mrb[0].mxu0
        %518 = vmatprep.mubr.f32.mxu0 0.0
        %519 = vmatmul.mubr.f32.gmra.mrb[0].mxu0 %v305
        %v520 = vpop.f32.mrb[0].mxu0
        %v521 = vadd.f32 0.0, %v520
        %v522 = vpop.f32.mrb[0].mxu0
        %523 = vmatprep.mubr.f32.mxu0 0.0
        %524 = vmatmul.mubr.f32.gmra.mrb[0].mxu0 %v308
        %v525 = vpop.f32.mrb[0].mxu0
        %v526 = vadd.f32 0.0, %v525
        %v527 = vpop.f32.mrb[0].mxu0
        %528 = vmatprep.mubr.f32.mxu0 0.0
        %529 = vmatmul.mubr.f32.gmra.mrb[0].mxu0 %v311
        %v530 = vpop.f32.mrb[0].mxu0
        %v531 = vadd.f32 0.0, %v530
        %v532 = vpop.f32.mrb[0].mxu0
        %533 = vmatprep.mubr.f32.mxu0 0.0
        %534 = vmatmul.mubr.f32.gmra.mrb[0].mxu0 %v314
        %v535 = vpop.f32.mrb[0].mxu0
        %v536 = vadd.f32 0.0, %v535
        %v537 = vpop.f32.mrb[0].mxu0
        %538 = vmatprep.mubr.f32.mxu0 0.0
        %539 = vmatmul.mubr.f32.gmra.mrb[0].mxu0 %v317
        %v540 = vpop.f32.mrb[0].mxu0
        %v541 = vadd.f32 0.0, %v540
        %v542 = vpop.f32.mrb[0].mxu0
        %543 = vdwg.mxu0
        %v545 = vsel %vm222, %v145, 0
        %v548 = vsel %vm222, %v146, 0
        %v551 = vsel %vm222, %v147, 0
        %v554 = vsel %vm222, %v148, 0
        %v557 = vsel %vm222, %v149, 0
        %v560 = vsel %vm222, %v150, 0
        %v563 = vsel %vm222, %v151, 0
        %v566 = vsel %vm222, %v152, 0
        %v569 = vsel %vm222, %v153, 0
        %v572 = vsel %vm222, %v154, 0
        %v575 = vsel %vm222, %v155, 0
        %v578 = vsel %vm222, %v156, 0
        %v581 = vsel %vm222, %v157, 0
        %v584 = vsel %vm222, %v158, 0
        %v587 = vsel %vm222, %v159, 0
        %v590 = vsel %vm222, %v160, 0
        %v593 = vsel %vm222, %v161, 0
        %v596 = vsel %vm222, %v162, 0
        %v599 = vsel %vm222, %v163, 0
        %v602 = vsel %vm222, %v164, 0
        %v605 = vsel %vm222, %v165, 0
        %v608 = vsel %vm222, %v166, 0
        %v611 = vsel %vm222, %v167, 0
        %v614 = vsel %vm222, %v168, 0
        %v617 = vsel %vm222, %v169, 0
        %v620 = vsel %vm222, %v170, 0
        %v623 = vsel %vm222, %v171, 0
        %v626 = vsel %vm222, %v172, 0
        %v629 = vsel %vm222, %v173, 0
        %v632 = vsel %vm222, %v174, 0
        %v635 = vsel %vm222, %v175, 0
        %v638 = vsel %vm222, %v176, 0
        %640 = vmatprep.subr.mxu0 0.0
        %641 = vmatpush1.msra.mxu0 %v177
        %642 = vmatprep.subr.mxu0 0.0
        %643 = vmatpush1.msra.mxu0 %v178
        %644 = vmatprep.subr.mxu0 0.0
        %645 = vmatpush1.msra.mxu0 %v179
        %646 = vmatprep.subr.mxu0 0.0
        %647 = vmatpush1.msra.mxu0 %v180
        %648 = vmatprep.subr.mxu0 0.0
        %649 = vmatpush1.msra.mxu0 %v181
        %650 = vmatprep.subr.mxu0 0.0
        %651 = vmatpush1.msra.mxu0 %v182
        %652 = vmatprep.subr.mxu0 0.0
        %653 = vmatpush1.msra.mxu0 0.0
        %654 = vmatprep.subr.mxu0 0.0
        %655 = vmatpush1.msra.mxu0 0.0
        %656 = vmatprep.subr.mxu0 0.0
        %657 = vmatpush1.msra.mxu0 0.0
        %658 = vmatprep.subr.mxu0 0.0
        %659 = vmatpush1.msra.mxu0 0.0
        %660 = vmatprep.subr.mxu0 0.0
        %661 = vmatpush1.msra.mxu0 0.0
        %662 = vmatprep.subr.mxu0 0.0
        %663 = vmatpush1.msra.mxu0 0.0
        %664 = vmatprep.subr.mxu0 0.0
        %665 = vmatpush1.msra.mxu0 0.0
        %666 = vmatprep.subr.mxu0 0.0
        %667 = vmatpush1.msra.mxu0 0.0
        %668 = vmatprep.subr.mxu0 0.0
        %669 = vmatpush1.msra.mxu0 0.0
        %670 = vmatprep.subr.mxu0 0.0
        %671 = vmatpush1.msra.mxu0 0.0
        %672 = vmatprep.subr.mxu0 0.0
        %673 = vmatpush1.msra.mxu0 0.0
        %674 = vmatprep.subr.mxu0 0.0
        %675 = vmatpush1.msra.mxu0 0.0
        %676 = vmatprep.subr.mxu0 0.0
        %677 = vmatpush1.msra.mxu0 0.0
        %678 = vmatprep.subr.mxu0 0.0
        %679 = vmatpush1.msra.mxu0 0.0
        %680 = vmatprep.subr.mxu0 0.0
        %681 = vmatpush1.msra.mxu0 0.0
        %682 = vmatprep.subr.mxu0 0.0
        %683 = vmatpush1.msra.mxu0 0.0
        %684 = vmatprep.subr.mxu0 0.0
        %685 = vmatpush1.msra.mxu0 0.0
        %686 = vmatprep.subr.mxu0 0.0
        %687 = vmatpush1.msra.mxu0 0.0
        %688 = vmatprep.subr.mxu0 0.0
        %689 = vmatpush1.msra.mxu0 0.0
        %690 = vmatprep.subr.mxu0 0.0
        %691 = vmatpush1.msra.mxu0 0.0
        %692 = vmatprep.subr.mxu0 0.0
        %693 = vmatpush1.msra.mxu0 0.0
        %694 = vmatprep.subr.mxu0 0.0
        %695 = vmatpush1.msra.mxu0 0.0
        %696 = vmatprep.subr.mxu0 0.0
        %697 = vmatpush1.msra.mxu0 0.0
        %698 = vmatprep.subr.mxu0 0.0
        %699 = vmatpush1.msra.mxu0 0.0
        %700 = vmatprep.subr.mxu0 0.0
        %701 = vmatpush1.msra.mxu0 0.0
        %702 = vmatprep.subr.mxu0 0.0
        %703 = vmatpush1.msra.mxu0 0.0
        %704 = vmatprep.mubr.f32.mxu0 0.0
        %705 = vmatmul.mubr.f32.gmra.mrb[0].mxu0 %v545
        %v706 = vpop.f32.mrb[0].mxu0
        %v707 = vadd.f32 %v386, %v706
        %v708 = vpop.f32.mrb[0].mxu0
        %709 = vmatprep.mubr.f32.mxu0 0.0
        %710 = vmatmul.mubr.f32.gmra.mrb[0].mxu0 %v548
        %v711 = vpop.f32.mrb[0].mxu0
        %v712 = vadd.f32 %v391, %v711
        %v713 = vpop.f32.mrb[0].mxu0
        %714 = vmatprep.mubr.f32.mxu0 0.0
        %715 = vmatmul.mubr.f32.gmra.mrb[0].mxu0 %v551
        %v716 = vpop.f32.mrb[0].mxu0
        %v717 = vadd.f32 %v396, %v716
        %v718 = vpop.f32.mrb[0].mxu0
        %719 = vmatprep.mubr.f32.mxu0 0.0
        %720 = vmatmul.mubr.f32.gmra.mrb[0].mxu0 %v554
        %v721 = vpop.f32.mrb[0].mxu0
        %v722 = vadd.f32 %v401, %v721
        %v723 = vpop.f32.mrb[0].mxu0
        %724 = vmatprep.mubr.f32.mxu0 0.0
        %725 = vmatmul.mubr.f32.gmra.mrb[0].mxu0 %v557
        %v726 = vpop.f32.mrb[0].mxu0
        %v727 = vadd.f32 %v406, %v726
        %v728 = vpop.f32.mrb[0].mxu0
        %729 = vmatprep.mubr.f32.mxu0 0.0
        %730 = vmatmul.mubr.f32.gmra.mrb[0].mxu0 %v560
        %v731 = vpop.f32.mrb[0].mxu0
        %v732 = vadd.f32 %v411, %v731
        %v733 = vpop.f32.mrb[0].mxu0
        %734 = vmatprep.mubr.f32.mxu0 0.0
        %735 = vmatmul.mubr.f32.gmra.mrb[0].mxu0 %v563
        %v736 = vpop.f32.mrb[0].mxu0
        %v737 = vadd.f32 %v416, %v736
        %v738 = vpop.f32.mrb[0].mxu0
        %739 = vmatprep.mubr.f32.mxu0 0.0
        %740 = vmatmul.mubr.f32.gmra.mrb[0].mxu0 %v566
        %v741 = vpop.f32.mrb[0].mxu0
        %v742 = vadd.f32 %v421, %v741
        %v743 = vpop.f32.mrb[0].mxu0
        %744 = vmatprep.mubr.f32.mxu0 0.0
        %745 = vmatmul.mubr.f32.gmra.mrb[0].mxu0 %v569
        %v746 = vpop.f32.mrb[0].mxu0
        %v747 = vadd.f32 %v426, %v746
        %v748 = vpop.f32.mrb[0].mxu0
        %749 = vmatprep.mubr.f32.mxu0 0.0
        %750 = vmatmul.mubr.f32.gmra.mrb[0].mxu0 %v572
        %v751 = vpop.f32.mrb[0].mxu0
        %v752 = vadd.f32 %v431, %v751
        %v753 = vpop.f32.mrb[0].mxu0
        %754 = vmatprep.mubr.f32.mxu0 0.0
        %755 = vmatmul.mubr.f32.gmra.mrb[0].mxu0 %v575
        %v756 = vpop.f32.mrb[0].mxu0
        %v757 = vadd.f32 %v436, %v756
        %v758 = vpop.f32.mrb[0].mxu0
        %759 = vmatprep.mubr.f32.mxu0 0.0
        %760 = vmatmul.mubr.f32.gmra.mrb[0].mxu0 %v578
        %v761 = vpop.f32.mrb[0].mxu0
        %v762 = vadd.f32 %v441, %v761
        %v763 = vpop.f32.mrb[0].mxu0
        %764 = vmatprep.mubr.f32.mxu0 0.0
        %765 = vmatmul.mubr.f32.gmra.mrb[0].mxu0 %v581
        %v766 = vpop.f32.mrb[0].mxu0
        %v767 = vadd.f32 %v446, %v766
        %v768 = vpop.f32.mrb[0].mxu0
        %769 = vmatprep.mubr.f32.mxu0 0.0
        %770 = vmatmul.mubr.f32.gmra.mrb[0].mxu0 %v584
        %v771 = vpop.f32.mrb[0].mxu0
        %v772 = vadd.f32 %v451, %v771
        %v773 = vpop.f32.mrb[0].mxu0
        %774 = vmatprep.mubr.f32.mxu0 0.0
        %775 = vmatmul.mubr.f32.gmra.mrb[0].mxu0 %v587
        %v776 = vpop.f32.mrb[0].mxu0
        %v777 = vadd.f32 %v456, %v776
        %v778 = vpop.f32.mrb[0].mxu0
        %779 = vmatprep.mubr.f32.mxu0 0.0
        %780 = vmatmul.mubr.f32.gmra.mrb[0].mxu0 %v590
        %v781 = vpop.f32.mrb[0].mxu0
        %v782 = vadd.f32 %v461, %v781
        %v783 = vpop.f32.mrb[0].mxu0
        %784 = vmatprep.mubr.f32.mxu0 0.0
        %785 = vmatmul.mubr.f32.gmra.mrb[0].mxu0 %v593
        %v786 = vpop.f32.mrb[0].mxu0
        %v787 = vadd.f32 %v466, %v786
        %v788 = vpop.f32.mrb[0].mxu0
        %789 = vmatprep.mubr.f32.mxu0 0.0
        %790 = vmatmul.mubr.f32.gmra.mrb[0].mxu0 %v596
        %v791 = vpop.f32.mrb[0].mxu0
        %v792 = vadd.f32 %v471, %v791
        %v793 = vpop.f32.mrb[0].mxu0
        %794 = vmatprep.mubr.f32.mxu0 0.0
        %795 = vmatmul.mubr.f32.gmra.mrb[0].mxu0 %v599
        %v796 = vpop.f32.mrb[0].mxu0
        %v797 = vadd.f32 %v476, %v796
        %v798 = vpop.f32.mrb[0].mxu0
        %799 = vmatprep.mubr.f32.mxu0 0.0
        %800 = vmatmul.mubr.f32.gmra.mrb[0].mxu0 %v602
        %v801 = vpop.f32.mrb[0].mxu0
        %v802 = vadd.f32 %v481, %v801
        %v803 = vpop.f32.mrb[0].mxu0
        %804 = vmatprep.mubr.f32.mxu0 0.0
        %805 = vmatmul.mubr.f32.gmra.mrb[0].mxu0 %v605
        %v806 = vpop.f32.mrb[0].mxu0
        %v807 = vadd.f32 %v486, %v806
        %v808 = vpop.f32.mrb[0].mxu0
        %809 = vmatprep.mubr.f32.mxu0 0.0
        %810 = vmatmul.mubr.f32.gmra.mrb[0].mxu0 %v608
        %v811 = vpop.f32.mrb[0].mxu0
        %v812 = vadd.f32 %v491, %v811
        %v813 = vpop.f32.mrb[0].mxu0
        %814 = vmatprep.mubr.f32.mxu0 0.0
        %815 = vmatmul.mubr.f32.gmra.mrb[0].mxu0 %v611
        %v816 = vpop.f32.mrb[0].mxu0
        %v817 = vadd.f32 %v496, %v816
        %v818 = vpop.f32.mrb[0].mxu0
        %819 = vmatprep.mubr.f32.mxu0 0.0
        %820 = vmatmul.mubr.f32.gmra.mrb[0].mxu0 %v614
        %v821 = vpop.f32.mrb[0].mxu0
        %v822 = vadd.f32 %v501, %v821
        %v823 = vpop.f32.mrb[0].mxu0
        %824 = vmatprep.mubr.f32.mxu0 0.0
        %825 = vmatmul.mubr.f32.gmra.mrb[0].mxu0 %v617
        %v826 = vpop.f32.mrb[0].mxu0
        %v827 = vadd.f32 %v506, %v826
        %v828 = vpop.f32.mrb[0].mxu0
        %829 = vmatprep.mubr.f32.mxu0 0.0
        %830 = vmatmul.mubr.f32.gmra.mrb[0].mxu0 %v620
        %v831 = vpop.f32.mrb[0].mxu0
        %v832 = vadd.f32 %v511, %v831
        %v833 = vpop.f32.mrb[0].mxu0
        %834 = vmatprep.mubr.f32.mxu0 0.0
        %835 = vmatmul.mubr.f32.gmra.mrb[0].mxu0 %v623
        %v836 = vpop.f32.mrb[0].mxu0
        %v837 = vadd.f32 %v516, %v836
        %v838 = vpop.f32.mrb[0].mxu0
        %839 = vmatprep.mubr.f32.mxu0 0.0
        %840 = vmatmul.mubr.f32.gmra.mrb[0].mxu0 %v626
        %v841 = vpop.f32.mrb[0].mxu0
        %v842 = vadd.f32 %v521, %v841
        %v843 = vpop.f32.mrb[0].mxu0
        %844 = vmatprep.mubr.f32.mxu0 0.0
        %845 = vmatmul.mubr.f32.gmra.mrb[0].mxu0 %v629
        %v846 = vpop.f32.mrb[0].mxu0
        %v847 = vadd.f32 %v526, %v846
        %v848 = vpop.f32.mrb[0].mxu0
        %849 = vmatprep.mubr.f32.mxu0 0.0
        %850 = vmatmul.mubr.f32.gmra.mrb[0].mxu0 %v632
        %v851 = vpop.f32.mrb[0].mxu0
        %v852 = vadd.f32 %v531, %v851
        %v853 = vpop.f32.mrb[0].mxu0
        %854 = vmatprep.mubr.f32.mxu0 0.0
        %855 = vmatmul.mubr.f32.gmra.mrb[0].mxu0 %v635
        %v856 = vpop.f32.mrb[0].mxu0
        %v857 = vadd.f32 %v536, %v856
        %v858 = vpop.f32.mrb[0].mxu0
        %859 = vmatprep.mubr.f32.mxu0 0.0
        %860 = vmatmul.mubr.f32.gmra.mrb[0].mxu0 %v638
        %v861 = vpop.f32.mrb[0].mxu0
        %v862 = vadd.f32 %v541, %v861
        %v863 = vpop.f32.mrb[0].mxu0
        %864 = vdwg.mxu0
        %865 = vrot.lane.b32.xlu0 %v145, 127
        %v866 = vpop.permute.xlu0 %865
        %867 = vrot.lane.b32.xlu0 %v146, 127
        %v868 = vpop.permute.xlu0 %867
        %869 = vrot.lane.b32.xlu0 %v147, 127
        %v870 = vpop.permute.xlu0 %869
        %871 = vrot.lane.b32.xlu0 %v148, 127
        %v872 = vpop.permute.xlu0 %871
        %873 = vrot.lane.b32.xlu0 %v149, 127
        %v874 = vpop.permute.xlu0 %873
        %875 = vrot.lane.b32.xlu0 %v150, 127
        %v876 = vpop.permute.xlu0 %875
        %877 = vrot.lane.b32.xlu0 %v151, 127
        %v878 = vpop.permute.xlu0 %877
        %879 = vrot.lane.b32.xlu0 %v152, 127
        %v880 = vpop.permute.xlu0 %879
        %881 = vrot.lane.b32.xlu0 %v153, 127
        %v882 = vpop.permute.xlu0 %881
        %883 = vrot.lane.b32.xlu0 %v154, 127
        %v884 = vpop.permute.xlu0 %883
        %885 = vrot.lane.b32.xlu0 %v155, 127
        %v886 = vpop.permute.xlu0 %885
        %887 = vrot.lane.b32.xlu0 %v156, 127
        %v888 = vpop.permute.xlu0 %887
        %889 = vrot.lane.b32.xlu0 %v157, 127
        %v890 = vpop.permute.xlu0 %889
        %891 = vrot.lane.b32.xlu0 %v158, 127
        %v892 = vpop.permute.xlu0 %891
        %893 = vrot.lane.b32.xlu0 %v159, 127
        %v894 = vpop.permute.xlu0 %893
        %895 = vrot.lane.b32.xlu0 %v160, 127
        %v896 = vpop.permute.xlu0 %895
        %897 = vrot.lane.b32.xlu0 %v161, 127
        %v898 = vpop.permute.xlu0 %897
        %899 = vrot.lane.b32.xlu0 %v162, 127
        %v900 = vpop.permute.xlu0 %899
        %901 = vrot.lane.b32.xlu0 %v163, 127
        %v902 = vpop.permute.xlu0 %901
        %903 = vrot.lane.b32.xlu0 %v164, 127
        %v904 = vpop.permute.xlu0 %903
        %905 = vrot.lane.b32.xlu0 %v165, 127
        %v906 = vpop.permute.xlu0 %905
        %907 = vrot.lane.b32.xlu0 %v166, 127
        %v908 = vpop.permute.xlu0 %907
        %909 = vrot.lane.b32.xlu0 %v167, 127
        %v910 = vpop.permute.xlu0 %909
        %911 = vrot.lane.b32.xlu0 %v168, 127
        %v912 = vpop.permute.xlu0 %911
        %913 = vrot.lane.b32.xlu0 %v169, 127
        %v914 = vpop.permute.xlu0 %913
        %915 = vrot.lane.b32.xlu0 %v170, 127
        %v916 = vpop.permute.xlu0 %915
        %917 = vrot.lane.b32.xlu0 %v171, 127
        %v918 = vpop.permute.xlu0 %917
        %919 = vrot.lane.b32.xlu0 %v172, 127
        %v920 = vpop.permute.xlu0 %919
        %921 = vrot.lane.b32.xlu0 %v173, 127
        %v922 = vpop.permute.xlu0 %921
        %923 = vrot.lane.b32.xlu0 %v174, 127
        %v924 = vpop.permute.xlu0 %923
        %925 = vrot.lane.b32.xlu0 %v175, 127
        %v926 = vpop.permute.xlu0 %925
        %927 = vrot.lane.b32.xlu0 %v176, 127
        %v928 = vpop.permute.xlu0 %927
        %v961 = vmul.f32 %v145, %v866
        %v962 = vmul.f32 %v146, %v868
        %v963 = vmul.f32 %v147, %v870
        %v964 = vmul.f32 %v148, %v872
        %v965 = vmul.f32 %v149, %v874
        %v966 = vmul.f32 %v150, %v876
        %v967 = vmul.f32 %v151, %v878
        %v968 = vmul.f32 %v152, %v880
        %v969 = vmul.f32 %v153, %v882
        %v970 = vmul.f32 %v154, %v884
        %v971 = vmul.f32 %v155, %v886
        %v972 = vmul.f32 %v156, %v888
        %v973 = vmul.f32 %v157, %v890
        %v974 = vmul.f32 %v158, %v892
        %v975 = vmul.f32 %v159, %v894
        %v976 = vmul.f32 %v160, %v896
        %v977 = vmul.f32 %v161, %v898
        %v978 = vmul.f32 %v162, %v900
        %v979 = vmul.f32 %v163, %v902
        %v980 = vmul.f32 %v164, %v904
        %v981 = vmul.f32 %v165, %v906
        %v982 = vmul.f32 %v166, %v908
        %v983 = vmul.f32 %v167, %v910
        %v984 = vmul.f32 %v168, %v912
        %v985 = vmul.f32 %v169, %v914
        %v986 = vmul.f32 %v170, %v916
        %v987 = vmul.f32 %v171, %v918
        %v988 = vmul.f32 %v172, %v920
        %v989 = vmul.f32 %v173, %v922
        %v990 = vmul.f32 %v174, %v924
        %v991 = vmul.f32 %v175, %v926
        %v992 = vmul.f32 %v176, %v928
        %s993 = scalar_lea.vmem %s1, 96
        %v994 = vld [vmem:[%s993] sm:$0xff]
        %v995 = vld [vmem:[%s993 + $0x8] sm:$0xff]
        %v996 = vld [vmem:[%s993 + $0x10] sm:$0xff]
        %v997 = vld [vmem:[%s993 + $0x18] sm:$0xff]
        %v998 = vld [vmem:[%s993 + $0x20] sm:$0xff]
        %v999 = vld [vmem:[%s993 + $0x28] sm:$0xff]
        %v1001 = vsel %vm222, %v961, 0
        %v1004 = vsel %vm222, %v962, 0
        %v1007 = vsel %vm222, %v963, 0
        %v1010 = vsel %vm222, %v964, 0
        %v1013 = vsel %vm222, %v965, 0
        %v1016 = vsel %vm222, %v966, 0
        %v1019 = vsel %vm222, %v967, 0
        %v1022 = vsel %vm222, %v968, 0
        %v1025 = vsel %vm222, %v969, 0
        %v1028 = vsel %vm222, %v970, 0
        %v1031 = vsel %vm222, %v971, 0
        %v1034 = vsel %vm222, %v972, 0
        %v1037 = vsel %vm222, %v973, 0
        %v1040 = vsel %vm222, %v974, 0
        %v1043 = vsel %vm222, %v975, 0
        %v1046 = vsel %vm222, %v976, 0
        %v1049 = vsel %vm222, %v977, 0
        %v1052 = vsel %vm222, %v978, 0
        %v1055 = vsel %vm222, %v979, 0
        %v1058 = vsel %vm222, %v980, 0
        %v1061 = vsel %vm222, %v981, 0
        %v1064 = vsel %vm222, %v982, 0
        %v1067 = vsel %vm222, %v983, 0
        %v1070 = vsel %vm222, %v984, 0
        %v1073 = vsel %vm222, %v985, 0
        %v1076 = vsel %vm222, %v986, 0
        %v1079 = vsel %vm222, %v987, 0
        %v1082 = vsel %vm222, %v988, 0
        %v1085 = vsel %vm222, %v989, 0
        %v1088 = vsel %vm222, %v990, 0
        %v1091 = vsel %vm222, %v991, 0
        %v1094 = vsel %vm222, %v992, 0
        %1096 = vmatprep.subr.mxu0 0.0
        %1097 = vmatpush1.msra.mxu0 %v994
        %1098 = vmatprep.subr.mxu0 0.0
        %1099 = vmatpush1.msra.mxu0 %v995
        %1100 = vmatprep.subr.mxu0 0.0
        %1101 = vmatpush1.msra.mxu0 %v996
        %1102 = vmatprep.subr.mxu0 0.0
        %1103 = vmatpush1.msra.mxu0 %v997
        %1104 = vmatprep.subr.mxu0 0.0
        %1105 = vmatpush1.msra.mxu0 %v998
        %1106 = vmatprep.subr.mxu0 0.0
        %1107 = vmatpush1.msra.mxu0 %v999
        %1108 = vmatprep.subr.mxu0 0.0
        %1109 = vmatpush1.msra.mxu0 0.0
        %1110 = vmatprep.subr.mxu0 0.0
        %1111 = vmatpush1.msra.mxu0 0.0
        %1112 = vmatprep.subr.mxu0 0.0
        %1113 = vmatpush1.msra.mxu0 0.0
        %1114 = vmatprep.subr.mxu0 0.0
        %1115 = vmatpush1.msra.mxu0 0.0
        %1116 = vmatprep.subr.mxu0 0.0
        %1117 = vmatpush1.msra.mxu0 0.0
        %1118 = vmatprep.subr.mxu0 0.0
        %1119 = vmatpush1.msra.mxu0 0.0
        %1120 = vmatprep.subr.mxu0 0.0
        %1121 = vmatpush1.msra.mxu0 0.0
        %1122 = vmatprep.subr.mxu0 0.0
        %1123 = vmatpush1.msra.mxu0 0.0
        %1124 = vmatprep.subr.mxu0 0.0
        %1125 = vmatpush1.msra.mxu0 0.0
        %1126 = vmatprep.subr.mxu0 0.0
        %1127 = vmatpush1.msra.mxu0 0.0
        %1128 = vmatprep.subr.mxu0 0.0
        %1129 = vmatpush1.msra.mxu0 0.0
        %1130 = vmatprep.subr.mxu0 0.0
        %1131 = vmatpush1.msra.mxu0 0.0
        %1132 = vmatprep.subr.mxu0 0.0
        %1133 = vmatpush1.msra.mxu0 0.0
        %1134 = vmatprep.subr.mxu0 0.0
        %1135 = vmatpush1.msra.mxu0 0.0
        %1136 = vmatprep.subr.mxu0 0.0
        %1137 = vmatpush1.msra.mxu0 0.0
        %1138 = vmatprep.subr.mxu0 0.0
        %1139 = vmatpush1.msra.mxu0 0.0
        %1140 = vmatprep.subr.mxu0 0.0
        %1141 = vmatpush1.msra.mxu0 0.0
        %1142 = vmatprep.subr.mxu0 0.0
        %1143 = vmatpush1.msra.mxu0 0.0
        %1144 = vmatprep.subr.mxu0 0.0
        %1145 = vmatpush1.msra.mxu0 0.0
        %1146 = vmatprep.subr.mxu0 0.0
        %1147 = vmatpush1.msra.mxu0 0.0
        %1148 = vmatprep.subr.mxu0 0.0
        %1149 = vmatpush1.msra.mxu0 0.0
        %1150 = vmatprep.subr.mxu0 0.0
        %1151 = vmatpush1.msra.mxu0 0.0
        %1152 = vmatprep.subr.mxu0 0.0
        %1153 = vmatpush1.msra.mxu0 0.0
        %1154 = vmatprep.subr.mxu0 0.0
        %1155 = vmatpush1.msra.mxu0 0.0
        %1156 = vmatprep.subr.mxu0 0.0
        %1157 = vmatpush1.msra.mxu0 0.0
        %1158 = vmatprep.subr.mxu0 0.0
        %1159 = vmatpush1.msra.mxu0 0.0
        %1160 = vmatprep.mubr.f32.mxu0 0.0
        %1161 = vmatmul.mubr.f32.gmra.mrb[0].mxu0 %v1001
        %v1162 = vpop.f32.mrb[0].mxu0
        %v1163 = vadd.f32 0.0, %v1162
        %v1164 = vpop.f32.mrb[0].mxu0
        %1165 = vmatprep.mubr.f32.mxu0 0.0
        %1166 = vmatmul.mubr.f32.gmra.mrb[0].mxu0 %v1004
        %v1167 = vpop.f32.mrb[0].mxu0
        %v1168 = vadd.f32 0.0, %v1167
        %v1169 = vpop.f32.mrb[0].mxu0
        %1170 = vmatprep.mubr.f32.mxu0 0.0
        %1171 = vmatmul.mubr.f32.gmra.mrb[0].mxu0 %v1007
        %v1172 = vpop.f32.mrb[0].mxu0
        %v1173 = vadd.f32 0.0, %v1172
        %v1174 = vpop.f32.mrb[0].mxu0
        %1175 = vmatprep.mubr.f32.mxu0 0.0
        %1176 = vmatmul.mubr.f32.gmra.mrb[0].mxu0 %v1010
        %v1177 = vpop.f32.mrb[0].mxu0
        %v1178 = vadd.f32 0.0, %v1177
        %v1179 = vpop.f32.mrb[0].mxu0
        %1180 = vmatprep.mubr.f32.mxu0 0.0
        %1181 = vmatmul.mubr.f32.gmra.mrb[0].mxu0 %v1013
        %v1182 = vpop.f32.mrb[0].mxu0
        %v1183 = vadd.f32 0.0, %v1182
        %v1184 = vpop.f32.mrb[0].mxu0
        %1185 = vmatprep.mubr.f32.mxu0 0.0
        %1186 = vmatmul.mubr.f32.gmra.mrb[0].mxu0 %v1016
        %v1187 = vpop.f32.mrb[0].mxu0
        %v1188 = vadd.f32 0.0, %v1187
        %v1189 = vpop.f32.mrb[0].mxu0
        %1190 = vmatprep.mubr.f32.mxu0 0.0
        %1191 = vmatmul.mubr.f32.gmra.mrb[0].mxu0 %v1019
        %v1192 = vpop.f32.mrb[0].mxu0
        %v1193 = vadd.f32 0.0, %v1192
        %v1194 = vpop.f32.mrb[0].mxu0
        %1195 = vmatprep.mubr.f32.mxu0 0.0
        %1196 = vmatmul.mubr.f32.gmra.mrb[0].mxu0 %v1022
        %v1197 = vpop.f32.mrb[0].mxu0
        %v1198 = vadd.f32 0.0, %v1197
        %v1199 = vpop.f32.mrb[0].mxu0
        %1200 = vmatprep.mubr.f32.mxu0 0.0
        %1201 = vmatmul.mubr.f32.gmra.mrb[0].mxu0 %v1025
        %v1202 = vpop.f32.mrb[0].mxu0
        %v1203 = vadd.f32 0.0, %v1202
        %v1204 = vpop.f32.mrb[0].mxu0
        %1205 = vmatprep.mubr.f32.mxu0 0.0
        %1206 = vmatmul.mubr.f32.gmra.mrb[0].mxu0 %v1028
        %v1207 = vpop.f32.mrb[0].mxu0
        %v1208 = vadd.f32 0.0, %v1207
        %v1209 = vpop.f32.mrb[0].mxu0
        %1210 = vmatprep.mubr.f32.mxu0 0.0
        %1211 = vmatmul.mubr.f32.gmra.mrb[0].mxu0 %v1031
        %v1212 = vpop.f32.mrb[0].mxu0
        %v1213 = vadd.f32 0.0, %v1212
        %v1214 = vpop.f32.mrb[0].mxu0
        %1215 = vmatprep.mubr.f32.mxu0 0.0
        %1216 = vmatmul.mubr.f32.gmra.mrb[0].mxu0 %v1034
        %v1217 = vpop.f32.mrb[0].mxu0
        %v1218 = vadd.f32 0.0, %v1217
        %v1219 = vpop.f32.mrb[0].mxu0
        %1220 = vmatprep.mubr.f32.mxu0 0.0
        %1221 = vmatmul.mubr.f32.gmra.mrb[0].mxu0 %v1037
        %v1222 = vpop.f32.mrb[0].mxu0
        %v1223 = vadd.f32 0.0, %v1222
        %v1224 = vpop.f32.mrb[0].mxu0
        %1225 = vmatprep.mubr.f32.mxu0 0.0
        %1226 = vmatmul.mubr.f32.gmra.mrb[0].mxu0 %v1040
        %v1227 = vpop.f32.mrb[0].mxu0
        %v1228 = vadd.f32 0.0, %v1227
        %v1229 = vpop.f32.mrb[0].mxu0
        %1230 = vmatprep.mubr.f32.mxu0 0.0
        %1231 = vmatmul.mubr.f32.gmra.mrb[0].mxu0 %v1043
        %v1232 = vpop.f32.mrb[0].mxu0
        %v1233 = vadd.f32 0.0, %v1232
        %v1234 = vpop.f32.mrb[0].mxu0
        %1235 = vmatprep.mubr.f32.mxu0 0.0
        %1236 = vmatmul.mubr.f32.gmra.mrb[0].mxu0 %v1046
        %v1237 = vpop.f32.mrb[0].mxu0
        %v1238 = vadd.f32 0.0, %v1237
        %v1239 = vpop.f32.mrb[0].mxu0
        %1240 = vmatprep.mubr.f32.mxu0 0.0
        %1241 = vmatmul.mubr.f32.gmra.mrb[0].mxu0 %v1049
        %v1242 = vpop.f32.mrb[0].mxu0
        %v1243 = vadd.f32 0.0, %v1242
        %v1244 = vpop.f32.mrb[0].mxu0
        %1245 = vmatprep.mubr.f32.mxu0 0.0
        %1246 = vmatmul.mubr.f32.gmra.mrb[0].mxu0 %v1052
        %v1247 = vpop.f32.mrb[0].mxu0
        %v1248 = vadd.f32 0.0, %v1247
        %v1249 = vpop.f32.mrb[0].mxu0
        %1250 = vmatprep.mubr.f32.mxu0 0.0
        %1251 = vmatmul.mubr.f32.gmra.mrb[0].mxu0 %v1055
        %v1252 = vpop.f32.mrb[0].mxu0
        %v1253 = vadd.f32 0.0, %v1252
        %v1254 = vpop.f32.mrb[0].mxu0
        %1255 = vmatprep.mubr.f32.mxu0 0.0
        %1256 = vmatmul.mubr.f32.gmra.mrb[0].mxu0 %v1058
        %v1257 = vpop.f32.mrb[0].mxu0
        %v1258 = vadd.f32 0.0, %v1257
        %v1259 = vpop.f32.mrb[0].mxu0
        %1260 = vmatprep.mubr.f32.mxu0 0.0
        %1261 = vmatmul.mubr.f32.gmra.mrb[0].mxu0 %v1061
        %v1262 = vpop.f32.mrb[0].mxu0
        %v1263 = vadd.f32 0.0, %v1262
        %v1264 = vpop.f32.mrb[0].mxu0
        %1265 = vmatprep.mubr.f32.mxu0 0.0
        %1266 = vmatmul.mubr.f32.gmra.mrb[0].mxu0 %v1064
        %v1267 = vpop.f32.mrb[0].mxu0
        %v1268 = vadd.f32 0.0, %v1267
        %v1269 = vpop.f32.mrb[0].mxu0
        %1270 = vmatprep.mubr.f32.mxu0 0.0
        %1271 = vmatmul.mubr.f32.gmra.mrb[0].mxu0 %v1067
        %v1272 = vpop.f32.mrb[0].mxu0
        %v1273 = vadd.f32 0.0, %v1272
        %v1274 = vpop.f32.mrb[0].mxu0
        %1275 = vmatprep.mubr.f32.mxu0 0.0
        %1276 = vmatmul.mubr.f32.gmra.mrb[0].mxu0 %v1070
        %v1277 = vpop.f32.mrb[0].mxu0
        %v1278 = vadd.f32 0.0, %v1277
        %v1279 = vpop.f32.mrb[0].mxu0
        %1280 = vmatprep.mubr.f32.mxu0 0.0
        %1281 = vmatmul.mubr.f32.gmra.mrb[0].mxu0 %v1073
        %v1282 = vpop.f32.mrb[0].mxu0
        %v1283 = vadd.f32 0.0, %v1282
        %v1284 = vpop.f32.mrb[0].mxu0
        %1285 = vmatprep.mubr.f32.mxu0 0.0
        %1286 = vmatmul.mubr.f32.gmra.mrb[0].mxu0 %v1076
        %v1287 = vpop.f32.mrb[0].mxu0
        %v1288 = vadd.f32 0.0, %v1287
        %v1289 = vpop.f32.mrb[0].mxu0
        %1290 = vmatprep.mubr.f32.mxu0 0.0
        %1291 = vmatmul.mubr.f32.gmra.mrb[0].mxu0 %v1079
        %v1292 = vpop.f32.mrb[0].mxu0
        %v1293 = vadd.f32 0.0, %v1292
        %v1294 = vpop.f32.mrb[0].mxu0
        %1295 = vmatprep.mubr.f32.mxu0 0.0
        %1296 = vmatmul.mubr.f32.gmra.mrb[0].mxu0 %v1082
        %v1297 = vpop.f32.mrb[0].mxu0
        %v1298 = vadd.f32 0.0, %v1297
        %v1299 = vpop.f32.mrb[0].mxu0
        %1300 = vmatprep.mubr.f32.mxu0 0.0
        %1301 = vmatmul.mubr.f32.gmra.mrb[0].mxu0 %v1085
        %v1302 = vpop.f32.mrb[0].mxu0
        %v1303 = vadd.f32 0.0, %v1302
        %v1304 = vpop.f32.mrb[0].mxu0
        %1305 = vmatprep.mubr.f32.mxu0 0.0
        %1306 = vmatmul.mubr.f32.gmra.mrb[0].mxu0 %v1088
        %v1307 = vpop.f32.mrb[0].mxu0
        %v1308 = vadd.f32 0.0, %v1307
        %v1309 = vpop.f32.mrb[0].mxu0
        %1310 = vmatprep.mubr.f32.mxu0 0.0
        %1311 = vmatmul.mubr.f32.gmra.mrb[0].mxu0 %v1091
        %v1312 = vpop.f32.mrb[0].mxu0
        %v1313 = vadd.f32 0.0, %v1312
        %v1314 = vpop.f32.mrb[0].mxu0
        %1315 = vmatprep.mubr.f32.mxu0 0.0
        %1316 = vmatmul.mubr.f32.gmra.mrb[0].mxu0 %v1094
        %v1317 = vpop.f32.mrb[0].mxu0
        %v1318 = vadd.f32 0.0, %v1317
        %v1319 = vpop.f32.mrb[0].mxu0
        %1320 = vdwg.mxu0
        %v1321 = vadd.f32 %v707, %v1163
        %v1322 = vadd.f32 %v712, %v1168
        %v1323 = vadd.f32 %v717, %v1173
        %v1324 = vadd.f32 %v722, %v1178
        %v1325 = vadd.f32 %v727, %v1183
        %v1326 = vadd.f32 %v732, %v1188
        %v1327 = vadd.f32 %v737, %v1193
        %v1328 = vadd.f32 %v742, %v1198
        %v1329 = vadd.f32 %v747, %v1203
        %v1330 = vadd.f32 %v752, %v1208
        %v1331 = vadd.f32 %v757, %v1213
        %v1332 = vadd.f32 %v762, %v1218
        %v1333 = vadd.f32 %v767, %v1223
        %v1334 = vadd.f32 %v772, %v1228
        %v1335 = vadd.f32 %v777, %v1233
        %v1336 = vadd.f32 %v782, %v1238
        %v1337 = vadd.f32 %v787, %v1243
        %v1338 = vadd.f32 %v792, %v1248
        %v1339 = vadd.f32 %v797, %v1253
        %v1340 = vadd.f32 %v802, %v1258
        %v1341 = vadd.f32 %v807, %v1263
        %v1342 = vadd.f32 %v812, %v1268
        %v1343 = vadd.f32 %v817, %v1273
        %v1344 = vadd.f32 %v822, %v1278
        %v1345 = vadd.f32 %v827, %v1283
        %v1346 = vadd.f32 %v832, %v1288
        %v1347 = vadd.f32 %v837, %v1293
        %v1348 = vadd.f32 %v842, %v1298
        %v1349 = vadd.f32 %v847, %v1303
        %v1350 = vadd.f32 %v852, %v1308
        %v1351 = vadd.f32 %v857, %v1313
        %v1352 = vadd.f32 %v862, %v1318
        %1353 = vrot.lane.b32.xlu0 %v145, 126
        %v1354 = vpop.permute.xlu0 %1353
        %1355 = vrot.lane.b32.xlu0 %v146, 126
        %v1356 = vpop.permute.xlu0 %1355
        %1357 = vrot.lane.b32.xlu0 %v147, 126
        %v1358 = vpop.permute.xlu0 %1357
        %1359 = vrot.lane.b32.xlu0 %v148, 126
        %v1360 = vpop.permute.xlu0 %1359
        %1361 = vrot.lane.b32.xlu0 %v149, 126
        %v1362 = vpop.permute.xlu0 %1361
        %1363 = vrot.lane.b32.xlu0 %v150, 126
        %v1364 = vpop.permute.xlu0 %1363
        %1365 = vrot.lane.b32.xlu0 %v151, 126
        %v1366 = vpop.permute.xlu0 %1365
        %1367 = vrot.lane.b32.xlu0 %v152, 126
        %v1368 = vpop.permute.xlu0 %1367
        %1369 = vrot.lane.b32.xlu0 %v153, 126
        %v1370 = vpop.permute.xlu0 %1369
        %1371 = vrot.lane.b32.xlu0 %v154, 126
        %v1372 = vpop.permute.xlu0 %1371
        %1373 = vrot.lane.b32.xlu0 %v155, 126
        %v1374 = vpop.permute.xlu0 %1373
        %1375 = vrot.lane.b32.xlu0 %v156, 126
        %v1376 = vpop.permute.xlu0 %1375
        %1377 = vrot.lane.b32.xlu0 %v157, 126
        %v1378 = vpop.permute.xlu0 %1377
        %1379 = vrot.lane.b32.xlu0 %v158, 126
        %v1380 = vpop.permute.xlu0 %1379
        %1381 = vrot.lane.b32.xlu0 %v159, 126
        %v1382 = vpop.permute.xlu0 %1381
        %1383 = vrot.lane.b32.xlu0 %v160, 126
        %v1384 = vpop.permute.xlu0 %1383
        %1385 = vrot.lane.b32.xlu0 %v161, 126
        %v1386 = vpop.permute.xlu0 %1385
        %1387 = vrot.lane.b32.xlu0 %v162, 126
        %v1388 = vpop.permute.xlu0 %1387
        %1389 = vrot.lane.b32.xlu0 %v163, 126
        %v1390 = vpop.permute.xlu0 %1389
        %1391 = vrot.lane.b32.xlu0 %v164, 126
        %v1392 = vpop.permute.xlu0 %1391
        %1393 = vrot.lane.b32.xlu0 %v165, 126
        %v1394 = vpop.permute.xlu0 %1393
        %1395 = vrot.lane.b32.xlu0 %v166, 126
        %v1396 = vpop.permute.xlu0 %1395
        %1397 = vrot.lane.b32.xlu0 %v167, 126
        %v1398 = vpop.permute.xlu0 %1397
        %1399 = vrot.lane.b32.xlu0 %v168, 126
        %v1400 = vpop.permute.xlu0 %1399
        %1401 = vrot.lane.b32.xlu0 %v169, 126
        %v1402 = vpop.permute.xlu0 %1401
        %1403 = vrot.lane.b32.xlu0 %v170, 126
        %v1404 = vpop.permute.xlu0 %1403
        %1405 = vrot.lane.b32.xlu0 %v171, 126
        %v1406 = vpop.permute.xlu0 %1405
        %1407 = vrot.lane.b32.xlu0 %v172, 126
        %v1408 = vpop.permute.xlu0 %1407
        %1409 = vrot.lane.b32.xlu0 %v173, 126
        %v1410 = vpop.permute.xlu0 %1409
        %1411 = vrot.lane.b32.xlu0 %v174, 126
        %v1412 = vpop.permute.xlu0 %1411
        %1413 = vrot.lane.b32.xlu0 %v175, 126
        %v1414 = vpop.permute.xlu0 %1413
        %1415 = vrot.lane.b32.xlu0 %v176, 126
        %v1416 = vpop.permute.xlu0 %1415
        %v1449 = vmul.f32 %v145, %v1354
        %v1450 = vmul.f32 %v146, %v1356
        %v1451 = vmul.f32 %v147, %v1358
        %v1452 = vmul.f32 %v148, %v1360
        %v1453 = vmul.f32 %v149, %v1362
        %v1454 = vmul.f32 %v150, %v1364
        %v1455 = vmul.f32 %v151, %v1366
        %v1456 = vmul.f32 %v152, %v1368
        %v1457 = vmul.f32 %v153, %v1370
        %v1458 = vmul.f32 %v154, %v1372
        %v1459 = vmul.f32 %v155, %v1374
        %v1460 = vmul.f32 %v156, %v1376
        %v1461 = vmul.f32 %v157, %v1378
        %v1462 = vmul.f32 %v158, %v1380
        %v1463 = vmul.f32 %v159, %v1382
        %v1464 = vmul.f32 %v160, %v1384
        %v1465 = vmul.f32 %v161, %v1386
        %v1466 = vmul.f32 %v162, %v1388
        %v1467 = vmul.f32 %v163, %v1390
        %v1468 = vmul.f32 %v164, %v1392
        %v1469 = vmul.f32 %v165, %v1394
        %v1470 = vmul.f32 %v166, %v1396
        %v1471 = vmul.f32 %v167, %v1398
        %v1472 = vmul.f32 %v168, %v1400
        %v1473 = vmul.f32 %v169, %v1402
        %v1474 = vmul.f32 %v170, %v1404
        %v1475 = vmul.f32 %v171, %v1406
        %v1476 = vmul.f32 %v172, %v1408
        %v1477 = vmul.f32 %v173, %v1410
        %v1478 = vmul.f32 %v174, %v1412
        %v1479 = vmul.f32 %v175, %v1414
        %v1480 = vmul.f32 %v176, %v1416
        %s1481 = scalar_lea.vmem %s1, 144
        %v1482 = vld [vmem:[%s1481] sm:$0xff]
        %v1483 = vld [vmem:[%s1481 + $0x8] sm:$0xff]
        %v1484 = vld [vmem:[%s1481 + $0x10] sm:$0xff]
        %v1485 = vld [vmem:[%s1481 + $0x18] sm:$0xff]
        %v1486 = vld [vmem:[%s1481 + $0x20] sm:$0xff]
        %v1487 = vld [vmem:[%s1481 + $0x28] sm:$0xff]
        %v1489 = vsel %vm222, %v1449, 0
        %v1492 = vsel %vm222, %v1450, 0
        %v1495 = vsel %vm222, %v1451, 0
        %v1498 = vsel %vm222, %v1452, 0
        %v1501 = vsel %vm222, %v1453, 0
        %v1504 = vsel %vm222, %v1454, 0
        %v1507 = vsel %vm222, %v1455, 0
        %v1510 = vsel %vm222, %v1456, 0
        %v1513 = vsel %vm222, %v1457, 0
        %v1516 = vsel %vm222, %v1458, 0
        %v1519 = vsel %vm222, %v1459, 0
        %v1522 = vsel %vm222, %v1460, 0
        %v1525 = vsel %vm222, %v1461, 0
        %v1528 = vsel %vm222, %v1462, 0
        %v1531 = vsel %vm222, %v1463, 0
        %v1534 = vsel %vm222, %v1464, 0
        %v1537 = vsel %vm222, %v1465, 0
        %v1540 = vsel %vm222, %v1466, 0
        %v1543 = vsel %vm222, %v1467, 0
        %v1546 = vsel %vm222, %v1468, 0
        %v1549 = vsel %vm222, %v1469, 0
        %v1552 = vsel %vm222, %v1470, 0
        %v1555 = vsel %vm222, %v1471, 0
        %v1558 = vsel %vm222, %v1472, 0
        %v1561 = vsel %vm222, %v1473, 0
        %v1564 = vsel %vm222, %v1474, 0
        %v1567 = vsel %vm222, %v1475, 0
        %v1570 = vsel %vm222, %v1476, 0
        %v1573 = vsel %vm222, %v1477, 0
        %v1576 = vsel %vm222, %v1478, 0
        %v1579 = vsel %vm222, %v1479, 0
        %v1582 = vsel %vm222, %v1480, 0
        %1584 = vmatprep.subr.mxu0 0.0
        %1585 = vmatpush1.msra.mxu0 %v1482
        %1586 = vmatprep.subr.mxu0 0.0
        %1587 = vmatpush1.msra.mxu0 %v1483
        %1588 = vmatprep.subr.mxu0 0.0
        %1589 = vmatpush1.msra.mxu0 %v1484
        %1590 = vmatprep.subr.mxu0 0.0
        %1591 = vmatpush1.msra.mxu0 %v1485
        %1592 = vmatprep.subr.mxu0 0.0
        %1593 = vmatpush1.msra.mxu0 %v1486
        %1594 = vmatprep.subr.mxu0 0.0
        %1595 = vmatpush1.msra.mxu0 %v1487
        %1596 = vmatprep.subr.mxu0 0.0
        %1597 = vmatpush1.msra.mxu0 0.0
        %1598 = vmatprep.subr.mxu0 0.0
        %1599 = vmatpush1.msra.mxu0 0.0
        %1600 = vmatprep.subr.mxu0 0.0
        %1601 = vmatpush1.msra.mxu0 0.0
        %1602 = vmatprep.subr.mxu0 0.0
        %1603 = vmatpush1.msra.mxu0 0.0
        %1604 = vmatprep.subr.mxu0 0.0
        %1605 = vmatpush1.msra.mxu0 0.0
        %1606 = vmatprep.subr.mxu0 0.0
        %1607 = vmatpush1.msra.mxu0 0.0
        %1608 = vmatprep.subr.mxu0 0.0
        %1609 = vmatpush1.msra.mxu0 0.0
        %1610 = vmatprep.subr.mxu0 0.0
        %1611 = vmatpush1.msra.mxu0 0.0
        %1612 = vmatprep.subr.mxu0 0.0
        %1613 = vmatpush1.msra.mxu0 0.0
        %1614 = vmatprep.subr.mxu0 0.0
        %1615 = vmatpush1.msra.mxu0 0.0
        %1616 = vmatprep.subr.mxu0 0.0
        %1617 = vmatpush1.msra.mxu0 0.0
        %1618 = vmatprep.subr.mxu0 0.0
        %1619 = vmatpush1.msra.mxu0 0.0
        %1620 = vmatprep.subr.mxu0 0.0
        %1621 = vmatpush1.msra.mxu0 0.0
        %1622 = vmatprep.subr.mxu0 0.0
        %1623 = vmatpush1.msra.mxu0 0.0
        %1624 = vmatprep.subr.mxu0 0.0
        %1625 = vmatpush1.msra.mxu0 0.0
        %1626 = vmatprep.subr.mxu0 0.0
        %1627 = vmatpush1.msra.mxu0 0.0
        %1628 = vmatprep.subr.mxu0 0.0
        %1629 = vmatpush1.msra.mxu0 0.0
        %1630 = vmatprep.subr.mxu0 0.0
        %1631 = vmatpush1.msra.mxu0 0.0
        %1632 = vmatprep.subr.mxu0 0.0
        %1633 = vmatpush1.msra.mxu0 0.0
        %1634 = vmatprep.subr.mxu0 0.0
        %1635 = vmatpush1.msra.mxu0 0.0
        %1636 = vmatprep.subr.mxu0 0.0
        %1637 = vmatpush1.msra.mxu0 0.0
        %1638 = vmatprep.subr.mxu0 0.0
        %1639 = vmatpush1.msra.mxu0 0.0
        %1640 = vmatprep.subr.mxu0 0.0
        %1641 = vmatpush1.msra.mxu0 0.0
        %1642 = vmatprep.subr.mxu0 0.0
        %1643 = vmatpush1.msra.mxu0 0.0
        %1644 = vmatprep.subr.mxu0 0.0
        %1645 = vmatpush1.msra.mxu0 0.0
        %1646 = vmatprep.subr.mxu0 0.0
        %1647 = vmatpush1.msra.mxu0 0.0
        %1648 = vmatprep.mubr.f32.mxu0 0.0
        %1649 = vmatmul.mubr.f32.gmra.mrb[0].mxu0 %v1489
        %v1650 = vpop.f32.mrb[0].mxu0
        %v1651 = vadd.f32 0.0, %v1650
        %v1652 = vpop.f32.mrb[0].mxu0
        %1653 = vmatprep.mubr.f32.mxu0 0.0
        %1654 = vmatmul.mubr.f32.gmra.mrb[0].mxu0 %v1492
        %v1655 = vpop.f32.mrb[0].mxu0
        %v1656 = vadd.f32 0.0, %v1655
        %v1657 = vpop.f32.mrb[0].mxu0
        %1658 = vmatprep.mubr.f32.mxu0 0.0
        %1659 = vmatmul.mubr.f32.gmra.mrb[0].mxu0 %v1495
        %v1660 = vpop.f32.mrb[0].mxu0
        %v1661 = vadd.f32 0.0, %v1660
        %v1662 = vpop.f32.mrb[0].mxu0
        %1663 = vmatprep.mubr.f32.mxu0 0.0
        %1664 = vmatmul.mubr.f32.gmra.mrb[0].mxu0 %v1498
        %v1665 = vpop.f32.mrb[0].mxu0
        %v1666 = vadd.f32 0.0, %v1665
        %v1667 = vpop.f32.mrb[0].mxu0
        %1668 = vmatprep.mubr.f32.mxu0 0.0
        %1669 = vmatmul.mubr.f32.gmra.mrb[0].mxu0 %v1501
        %v1670 = vpop.f32.mrb[0].mxu0
        %v1671 = vadd.f32 0.0, %v1670
        %v1672 = vpop.f32.mrb[0].mxu0
        %1673 = vmatprep.mubr.f32.mxu0 0.0
        %1674 = vmatmul.mubr.f32.gmra.mrb[0].mxu0 %v1504
        %v1675 = vpop.f32.mrb[0].mxu0
        %v1676 = vadd.f32 0.0, %v1675
        %v1677 = vpop.f32.mrb[0].mxu0
        %1678 = vmatprep.mubr.f32.mxu0 0.0
        %1679 = vmatmul.mubr.f32.gmra.mrb[0].mxu0 %v1507
        %v1680 = vpop.f32.mrb[0].mxu0
        %v1681 = vadd.f32 0.0, %v1680
        %v1682 = vpop.f32.mrb[0].mxu0
        %1683 = vmatprep.mubr.f32.mxu0 0.0
        %1684 = vmatmul.mubr.f32.gmra.mrb[0].mxu0 %v1510
        %v1685 = vpop.f32.mrb[0].mxu0
        %v1686 = vadd.f32 0.0, %v1685
        %v1687 = vpop.f32.mrb[0].mxu0
        %1688 = vmatprep.mubr.f32.mxu0 0.0
        %1689 = vmatmul.mubr.f32.gmra.mrb[0].mxu0 %v1513
        %v1690 = vpop.f32.mrb[0].mxu0
        %v1691 = vadd.f32 0.0, %v1690
        %v1692 = vpop.f32.mrb[0].mxu0
        %1693 = vmatprep.mubr.f32.mxu0 0.0
        %1694 = vmatmul.mubr.f32.gmra.mrb[0].mxu0 %v1516
        %v1695 = vpop.f32.mrb[0].mxu0
        %v1696 = vadd.f32 0.0, %v1695
        %v1697 = vpop.f32.mrb[0].mxu0
        %1698 = vmatprep.mubr.f32.mxu0 0.0
        %1699 = vmatmul.mubr.f32.gmra.mrb[0].mxu0 %v1519
        %v1700 = vpop.f32.mrb[0].mxu0
        %v1701 = vadd.f32 0.0, %v1700
        %v1702 = vpop.f32.mrb[0].mxu0
        %1703 = vmatprep.mubr.f32.mxu0 0.0
        %1704 = vmatmul.mubr.f32.gmra.mrb[0].mxu0 %v1522
        %v1705 = vpop.f32.mrb[0].mxu0
        %v1706 = vadd.f32 0.0, %v1705
        %v1707 = vpop.f32.mrb[0].mxu0
        %1708 = vmatprep.mubr.f32.mxu0 0.0
        %1709 = vmatmul.mubr.f32.gmra.mrb[0].mxu0 %v1525
        %v1710 = vpop.f32.mrb[0].mxu0
        %v1711 = vadd.f32 0.0, %v1710
        %v1712 = vpop.f32.mrb[0].mxu0
        %1713 = vmatprep.mubr.f32.mxu0 0.0
        %1714 = vmatmul.mubr.f32.gmra.mrb[0].mxu0 %v1528
        %v1715 = vpop.f32.mrb[0].mxu0
        %v1716 = vadd.f32 0.0, %v1715
        %v1717 = vpop.f32.mrb[0].mxu0
        %1718 = vmatprep.mubr.f32.mxu0 0.0
        %1719 = vmatmul.mubr.f32.gmra.mrb[0].mxu0 %v1531
        %v1720 = vpop.f32.mrb[0].mxu0
        %v1721 = vadd.f32 0.0, %v1720
        %v1722 = vpop.f32.mrb[0].mxu0
        %1723 = vmatprep.mubr.f32.mxu0 0.0
        %1724 = vmatmul.mubr.f32.gmra.mrb[0].mxu0 %v1534
        %v1725 = vpop.f32.mrb[0].mxu0
        %v1726 = vadd.f32 0.0, %v1725
        %v1727 = vpop.f32.mrb[0].mxu0
        %1728 = vmatprep.mubr.f32.mxu0 0.0
        %1729 = vmatmul.mubr.f32.gmra.mrb[0].mxu0 %v1537
        %v1730 = vpop.f32.mrb[0].mxu0
        %v1731 = vadd.f32 0.0, %v1730
        %v1732 = vpop.f32.mrb[0].mxu0
        %1733 = vmatprep.mubr.f32.mxu0 0.0
        %1734 = vmatmul.mubr.f32.gmra.mrb[0].mxu0 %v1540
        %v1735 = vpop.f32.mrb[0].mxu0
        %v1736 = vadd.f32 0.0, %v1735
        %v1737 = vpop.f32.mrb[0].mxu0
        %1738 = vmatprep.mubr.f32.mxu0 0.0
        %1739 = vmatmul.mubr.f32.gmra.mrb[0].mxu0 %v1543
        %v1740 = vpop.f32.mrb[0].mxu0
        %v1741 = vadd.f32 0.0, %v1740
        %v1742 = vpop.f32.mrb[0].mxu0
        %1743 = vmatprep.mubr.f32.mxu0 0.0
        %1744 = vmatmul.mubr.f32.gmra.mrb[0].mxu0 %v1546
        %v1745 = vpop.f32.mrb[0].mxu0
        %v1746 = vadd.f32 0.0, %v1745
        %v1747 = vpop.f32.mrb[0].mxu0
        %1748 = vmatprep.mubr.f32.mxu0 0.0
        %1749 = vmatmul.mubr.f32.gmra.mrb[0].mxu0 %v1549
        %v1750 = vpop.f32.mrb[0].mxu0
        %v1751 = vadd.f32 0.0, %v1750
        %v1752 = vpop.f32.mrb[0].mxu0
        %1753 = vmatprep.mubr.f32.mxu0 0.0
        %1754 = vmatmul.mubr.f32.gmra.mrb[0].mxu0 %v1552
        %v1755 = vpop.f32.mrb[0].mxu0
        %v1756 = vadd.f32 0.0, %v1755
        %v1757 = vpop.f32.mrb[0].mxu0
        %1758 = vmatprep.mubr.f32.mxu0 0.0
        %1759 = vmatmul.mubr.f32.gmra.mrb[0].mxu0 %v1555
        %v1760 = vpop.f32.mrb[0].mxu0
        %v1761 = vadd.f32 0.0, %v1760
        %v1762 = vpop.f32.mrb[0].mxu0
        %1763 = vmatprep.mubr.f32.mxu0 0.0
        %1764 = vmatmul.mubr.f32.gmra.mrb[0].mxu0 %v1558
        %v1765 = vpop.f32.mrb[0].mxu0
        %v1766 = vadd.f32 0.0, %v1765
        %v1767 = vpop.f32.mrb[0].mxu0
        %1768 = vmatprep.mubr.f32.mxu0 0.0
        %1769 = vmatmul.mubr.f32.gmra.mrb[0].mxu0 %v1561
        %v1770 = vpop.f32.mrb[0].mxu0
        %v1771 = vadd.f32 0.0, %v1770
        %v1772 = vpop.f32.mrb[0].mxu0
        %1773 = vmatprep.mubr.f32.mxu0 0.0
        %1774 = vmatmul.mubr.f32.gmra.mrb[0].mxu0 %v1564
        %v1775 = vpop.f32.mrb[0].mxu0
        %v1776 = vadd.f32 0.0, %v1775
        %v1777 = vpop.f32.mrb[0].mxu0
        %1778 = vmatprep.mubr.f32.mxu0 0.0
        %1779 = vmatmul.mubr.f32.gmra.mrb[0].mxu0 %v1567
        %v1780 = vpop.f32.mrb[0].mxu0
        %v1781 = vadd.f32 0.0, %v1780
        %v1782 = vpop.f32.mrb[0].mxu0
        %1783 = vmatprep.mubr.f32.mxu0 0.0
        %1784 = vmatmul.mubr.f32.gmra.mrb[0].mxu0 %v1570
        %v1785 = vpop.f32.mrb[0].mxu0
        %v1786 = vadd.f32 0.0, %v1785
        %v1787 = vpop.f32.mrb[0].mxu0
        %1788 = vmatprep.mubr.f32.mxu0 0.0
        %1789 = vmatmul.mubr.f32.gmra.mrb[0].mxu0 %v1573
        %v1790 = vpop.f32.mrb[0].mxu0
        %v1791 = vadd.f32 0.0, %v1790
        %v1792 = vpop.f32.mrb[0].mxu0
        %1793 = vmatprep.mubr.f32.mxu0 0.0
        %1794 = vmatmul.mubr.f32.gmra.mrb[0].mxu0 %v1576
        %v1795 = vpop.f32.mrb[0].mxu0
        %v1796 = vadd.f32 0.0, %v1795
        %v1797 = vpop.f32.mrb[0].mxu0
        %1798 = vmatprep.mubr.f32.mxu0 0.0
        %1799 = vmatmul.mubr.f32.gmra.mrb[0].mxu0 %v1579
        %v1800 = vpop.f32.mrb[0].mxu0
        %v1801 = vadd.f32 0.0, %v1800
        %v1802 = vpop.f32.mrb[0].mxu0
        %1803 = vmatprep.mubr.f32.mxu0 0.0
        %1804 = vmatmul.mubr.f32.gmra.mrb[0].mxu0 %v1582
        %v1805 = vpop.f32.mrb[0].mxu0
        %v1806 = vadd.f32 0.0, %v1805
        %v1807 = vpop.f32.mrb[0].mxu0
        %1808 = vdwg.mxu0
        %v1809 = vadd.f32 %v1321, %v1651
        %v1810 = vadd.f32 %v1322, %v1656
        %v1811 = vadd.f32 %v1323, %v1661
        %v1812 = vadd.f32 %v1324, %v1666
        %v1813 = vadd.f32 %v1325, %v1671
        %v1814 = vadd.f32 %v1326, %v1676
        %v1815 = vadd.f32 %v1327, %v1681
        %v1816 = vadd.f32 %v1328, %v1686
        %v1817 = vadd.f32 %v1329, %v1691
        %v1818 = vadd.f32 %v1330, %v1696
        %v1819 = vadd.f32 %v1331, %v1701
        %v1820 = vadd.f32 %v1332, %v1706
        %v1821 = vadd.f32 %v1333, %v1711
        %v1822 = vadd.f32 %v1334, %v1716
        %v1823 = vadd.f32 %v1335, %v1721
        %v1824 = vadd.f32 %v1336, %v1726
        %v1825 = vadd.f32 %v1337, %v1731
        %v1826 = vadd.f32 %v1338, %v1736
        %v1827 = vadd.f32 %v1339, %v1741
        %v1828 = vadd.f32 %v1340, %v1746
        %v1829 = vadd.f32 %v1341, %v1751
        %v1830 = vadd.f32 %v1342, %v1756
        %v1831 = vadd.f32 %v1343, %v1761
        %v1832 = vadd.f32 %v1344, %v1766
        %v1833 = vadd.f32 %v1345, %v1771
        %v1834 = vadd.f32 %v1346, %v1776
        %v1835 = vadd.f32 %v1347, %v1781
        %v1836 = vadd.f32 %v1348, %v1786
        %v1837 = vadd.f32 %v1349, %v1791
        %v1838 = vadd.f32 %v1350, %v1796
        %v1839 = vadd.f32 %v1351, %v1801
        %v1840 = vadd.f32 %v1352, %v1806
        %1841 = vrot.lane.b32.xlu0 %v145, 125
        %v1842 = vpop.permute.xlu0 %1841
        %1843 = vrot.lane.b32.xlu0 %v146, 125
        %v1844 = vpop.permute.xlu0 %1843
        %1845 = vrot.lane.b32.xlu0 %v147, 125
        %v1846 = vpop.permute.xlu0 %1845
        %1847 = vrot.lane.b32.xlu0 %v148, 125
        %v1848 = vpop.permute.xlu0 %1847
        %1849 = vrot.lane.b32.xlu0 %v149, 125
        %v1850 = vpop.permute.xlu0 %1849
        %1851 = vrot.lane.b32.xlu0 %v150, 125
        %v1852 = vpop.permute.xlu0 %1851
        %1853 = vrot.lane.b32.xlu0 %v151, 125
        %v1854 = vpop.permute.xlu0 %1853
        %1855 = vrot.lane.b32.xlu0 %v152, 125
        %v1856 = vpop.permute.xlu0 %1855
        %1857 = vrot.lane.b32.xlu0 %v153, 125
        %v1858 = vpop.permute.xlu0 %1857
        %1859 = vrot.lane.b32.xlu0 %v154, 125
        %v1860 = vpop.permute.xlu0 %1859
        %1861 = vrot.lane.b32.xlu0 %v155, 125
        %v1862 = vpop.permute.xlu0 %1861
        %1863 = vrot.lane.b32.xlu0 %v156, 125
        %v1864 = vpop.permute.xlu0 %1863
        %1865 = vrot.lane.b32.xlu0 %v157, 125
        %v1866 = vpop.permute.xlu0 %1865
        %1867 = vrot.lane.b32.xlu0 %v158, 125
        %v1868 = vpop.permute.xlu0 %1867
        %1869 = vrot.lane.b32.xlu0 %v159, 125
        %v1870 = vpop.permute.xlu0 %1869
        %1871 = vrot.lane.b32.xlu0 %v160, 125
        %v1872 = vpop.permute.xlu0 %1871
        %1873 = vrot.lane.b32.xlu0 %v161, 125
        %v1874 = vpop.permute.xlu0 %1873
        %1875 = vrot.lane.b32.xlu0 %v162, 125
        %v1876 = vpop.permute.xlu0 %1875
        %1877 = vrot.lane.b32.xlu0 %v163, 125
        %v1878 = vpop.permute.xlu0 %1877
        %1879 = vrot.lane.b32.xlu0 %v164, 125
        %v1880 = vpop.permute.xlu0 %1879
        %1881 = vrot.lane.b32.xlu0 %v165, 125
        %v1882 = vpop.permute.xlu0 %1881
        %1883 = vrot.lane.b32.xlu0 %v166, 125
        %v1884 = vpop.permute.xlu0 %1883
        %1885 = vrot.lane.b32.xlu0 %v167, 125
        %v1886 = vpop.permute.xlu0 %1885
        %1887 = vrot.lane.b32.xlu0 %v168, 125
        %v1888 = vpop.permute.xlu0 %1887
        %1889 = vrot.lane.b32.xlu0 %v169, 125
        %v1890 = vpop.permute.xlu0 %1889
        %1891 = vrot.lane.b32.xlu0 %v170, 125
        %v1892 = vpop.permute.xlu0 %1891
        %1893 = vrot.lane.b32.xlu0 %v171, 125
        %v1894 = vpop.permute.xlu0 %1893
        %1895 = vrot.lane.b32.xlu0 %v172, 125
        %v1896 = vpop.permute.xlu0 %1895
        %1897 = vrot.lane.b32.xlu0 %v173, 125
        %v1898 = vpop.permute.xlu0 %1897
        %1899 = vrot.lane.b32.xlu0 %v174, 125
        %v1900 = vpop.permute.xlu0 %1899
        %1901 = vrot.lane.b32.xlu0 %v175, 125
        %v1902 = vpop.permute.xlu0 %1901
        %1903 = vrot.lane.b32.xlu0 %v176, 125
        %v1904 = vpop.permute.xlu0 %1903
        %v1937 = vmul.f32 %v145, %v1842
        %v1938 = vmul.f32 %v146, %v1844
        %v1939 = vmul.f32 %v147, %v1846
        %v1940 = vmul.f32 %v148, %v1848
        %v1941 = vmul.f32 %v149, %v1850
        %v1942 = vmul.f32 %v150, %v1852
        %v1943 = vmul.f32 %v151, %v1854
        %v1944 = vmul.f32 %v152, %v1856
        %v1945 = vmul.f32 %v153, %v1858
        %v1946 = vmul.f32 %v154, %v1860
        %v1947 = vmul.f32 %v155, %v1862
        %v1948 = vmul.f32 %v156, %v1864
        %v1949 = vmul.f32 %v157, %v1866
        %v1950 = vmul.f32 %v158, %v1868
        %v1951 = vmul.f32 %v159, %v1870
        %v1952 = vmul.f32 %v160, %v1872
        %v1953 = vmul.f32 %v161, %v1874
        %v1954 = vmul.f32 %v162, %v1876
        %v1955 = vmul.f32 %v163, %v1878
        %v1956 = vmul.f32 %v164, %v1880
        %v1957 = vmul.f32 %v165, %v1882
        %v1958 = vmul.f32 %v166, %v1884
        %v1959 = vmul.f32 %v167, %v1886
        %v1960 = vmul.f32 %v168, %v1888
        %v1961 = vmul.f32 %v169, %v1890
        %v1962 = vmul.f32 %v170, %v1892
        %v1963 = vmul.f32 %v171, %v1894
        %v1964 = vmul.f32 %v172, %v1896
        %v1965 = vmul.f32 %v173, %v1898
        %v1966 = vmul.f32 %v174, %v1900
        %v1967 = vmul.f32 %v175, %v1902
        %v1968 = vmul.f32 %v176, %v1904
        %s1969 = scalar_lea.vmem %s1, 192
        %v1970 = vld [vmem:[%s1969] sm:$0xff]
        %v1971 = vld [vmem:[%s1969 + $0x8] sm:$0xff]
        %v1972 = vld [vmem:[%s1969 + $0x10] sm:$0xff]
        %v1973 = vld [vmem:[%s1969 + $0x18] sm:$0xff]
        %v1974 = vld [vmem:[%s1969 + $0x20] sm:$0xff]
        %v1975 = vld [vmem:[%s1969 + $0x28] sm:$0xff]
        %v1977 = vsel %vm222, %v1937, 0
        %v1980 = vsel %vm222, %v1938, 0
        %v1983 = vsel %vm222, %v1939, 0
        %v1986 = vsel %vm222, %v1940, 0
        %v1989 = vsel %vm222, %v1941, 0
        %v1992 = vsel %vm222, %v1942, 0
        %v1995 = vsel %vm222, %v1943, 0
        %v1998 = vsel %vm222, %v1944, 0
        %v2001 = vsel %vm222, %v1945, 0
        %v2004 = vsel %vm222, %v1946, 0
        %v2007 = vsel %vm222, %v1947, 0
        %v2010 = vsel %vm222, %v1948, 0
        %v2013 = vsel %vm222, %v1949, 0
        %v2016 = vsel %vm222, %v1950, 0
        %v2019 = vsel %vm222, %v1951, 0
        %v2022 = vsel %vm222, %v1952, 0
        %v2025 = vsel %vm222, %v1953, 0
        %v2028 = vsel %vm222, %v1954, 0
        %v2031 = vsel %vm222, %v1955, 0
        %v2034 = vsel %vm222, %v1956, 0
        %v2037 = vsel %vm222, %v1957, 0
        %v2040 = vsel %vm222, %v1958, 0
        %v2043 = vsel %vm222, %v1959, 0
        %v2046 = vsel %vm222, %v1960, 0
        %v2049 = vsel %vm222, %v1961, 0
        %v2052 = vsel %vm222, %v1962, 0
        %v2055 = vsel %vm222, %v1963, 0
        %v2058 = vsel %vm222, %v1964, 0
        %v2061 = vsel %vm222, %v1965, 0
        %v2064 = vsel %vm222, %v1966, 0
        %v2067 = vsel %vm222, %v1967, 0
        %v2070 = vsel %vm222, %v1968, 0
        %2072 = vmatprep.subr.mxu0 0.0
        %2073 = vmatpush1.msra.mxu0 %v1970
        %2074 = vmatprep.subr.mxu0 0.0
        %2075 = vmatpush1.msra.mxu0 %v1971
        %2076 = vmatprep.subr.mxu0 0.0
        %2077 = vmatpush1.msra.mxu0 %v1972
        %2078 = vmatprep.subr.mxu0 0.0
        %2079 = vmatpush1.msra.mxu0 %v1973
        %2080 = vmatprep.subr.mxu0 0.0
        %2081 = vmatpush1.msra.mxu0 %v1974
        %2082 = vmatprep.subr.mxu0 0.0
        %2083 = vmatpush1.msra.mxu0 %v1975
        %2084 = vmatprep.subr.mxu0 0.0
        %2085 = vmatpush1.msra.mxu0 0.0
        %2086 = vmatprep.subr.mxu0 0.0
        %2087 = vmatpush1.msra.mxu0 0.0
        %2088 = vmatprep.subr.mxu0 0.0
        %2089 = vmatpush1.msra.mxu0 0.0
        %2090 = vmatprep.subr.mxu0 0.0
        %2091 = vmatpush1.msra.mxu0 0.0
        %2092 = vmatprep.subr.mxu0 0.0
        %2093 = vmatpush1.msra.mxu0 0.0
        %2094 = vmatprep.subr.mxu0 0.0
        %2095 = vmatpush1.msra.mxu0 0.0
        %2096 = vmatprep.subr.mxu0 0.0
        %2097 = vmatpush1.msra.mxu0 0.0
        %2098 = vmatprep.subr.mxu0 0.0
        %2099 = vmatpush1.msra.mxu0 0.0
        %2100 = vmatprep.subr.mxu0 0.0
        %2101 = vmatpush1.msra.mxu0 0.0
        %2102 = vmatprep.subr.mxu0 0.0
        %2103 = vmatpush1.msra.mxu0 0.0
        %2104 = vmatprep.subr.mxu0 0.0
        %2105 = vmatpush1.msra.mxu0 0.0
        %2106 = vmatprep.subr.mxu0 0.0
        %2107 = vmatpush1.msra.mxu0 0.0
        %2108 = vmatprep.subr.mxu0 0.0
        %2109 = vmatpush1.msra.mxu0 0.0
        %2110 = vmatprep.subr.mxu0 0.0
        %2111 = vmatpush1.msra.mxu0 0.0
        %2112 = vmatprep.subr.mxu0 0.0
        %2113 = vmatpush1.msra.mxu0 0.0
        %2114 = vmatprep.subr.mxu0 0.0
        %2115 = vmatpush1.msra.mxu0 0.0
        %2116 = vmatprep.subr.mxu0 0.0
        %2117 = vmatpush1.msra.mxu0 0.0
        %2118 = vmatprep.subr.mxu0 0.0
        %2119 = vmatpush1.msra.mxu0 0.0
        %2120 = vmatprep.subr.mxu0 0.0
        %2121 = vmatpush1.msra.mxu0 0.0
        %2122 = vmatprep.subr.mxu0 0.0
        %2123 = vmatpush1.msra.mxu0 0.0
        %2124 = vmatprep.subr.mxu0 0.0
        %2125 = vmatpush1.msra.mxu0 0.0
        %2126 = vmatprep.subr.mxu0 0.0
        %2127 = vmatpush1.msra.mxu0 0.0
        %2128 = vmatprep.subr.mxu0 0.0
        %2129 = vmatpush1.msra.mxu0 0.0
        %2130 = vmatprep.subr.mxu0 0.0
        %2131 = vmatpush1.msra.mxu0 0.0
        %2132 = vmatprep.subr.mxu0 0.0
        %2133 = vmatpush1.msra.mxu0 0.0
        %2134 = vmatprep.subr.mxu0 0.0
        %2135 = vmatpush1.msra.mxu0 0.0
        %2136 = vmatprep.mubr.f32.mxu0 0.0
        %2137 = vmatmul.mubr.f32.gmra.mrb[0].mxu0 %v1977
        %v2138 = vpop.f32.mrb[0].mxu0
        %v2139 = vadd.f32 0.0, %v2138
        %v2140 = vpop.f32.mrb[0].mxu0
        %2141 = vmatprep.mubr.f32.mxu0 0.0
        %2142 = vmatmul.mubr.f32.gmra.mrb[0].mxu0 %v1980
        %v2143 = vpop.f32.mrb[0].mxu0
        %v2144 = vadd.f32 0.0, %v2143
        %v2145 = vpop.f32.mrb[0].mxu0
        %2146 = vmatprep.mubr.f32.mxu0 0.0
        %2147 = vmatmul.mubr.f32.gmra.mrb[0].mxu0 %v1983
        %v2148 = vpop.f32.mrb[0].mxu0
        %v2149 = vadd.f32 0.0, %v2148
        %v2150 = vpop.f32.mrb[0].mxu0
        %2151 = vmatprep.mubr.f32.mxu0 0.0
        %2152 = vmatmul.mubr.f32.gmra.mrb[0].mxu0 %v1986
        %v2153 = vpop.f32.mrb[0].mxu0
        %v2154 = vadd.f32 0.0, %v2153
        %v2155 = vpop.f32.mrb[0].mxu0
        %2156 = vmatprep.mubr.f32.mxu0 0.0
        %2157 = vmatmul.mubr.f32.gmra.mrb[0].mxu0 %v1989
        %v2158 = vpop.f32.mrb[0].mxu0
        %v2159 = vadd.f32 0.0, %v2158
        %v2160 = vpop.f32.mrb[0].mxu0
        %2161 = vmatprep.mubr.f32.mxu0 0.0
        %2162 = vmatmul.mubr.f32.gmra.mrb[0].mxu0 %v1992
        %v2163 = vpop.f32.mrb[0].mxu0
        %v2164 = vadd.f32 0.0, %v2163
        %v2165 = vpop.f32.mrb[0].mxu0
        %2166 = vmatprep.mubr.f32.mxu0 0.0
        %2167 = vmatmul.mubr.f32.gmra.mrb[0].mxu0 %v1995
        %v2168 = vpop.f32.mrb[0].mxu0
        %v2169 = vadd.f32 0.0, %v2168
        %v2170 = vpop.f32.mrb[0].mxu0
        %2171 = vmatprep.mubr.f32.mxu0 0.0
        %2172 = vmatmul.mubr.f32.gmra.mrb[0].mxu0 %v1998
        %v2173 = vpop.f32.mrb[0].mxu0
        %v2174 = vadd.f32 0.0, %v2173
        %v2175 = vpop.f32.mrb[0].mxu0
        %2176 = vmatprep.mubr.f32.mxu0 0.0
        %2177 = vmatmul.mubr.f32.gmra.mrb[0].mxu0 %v2001
        %v2178 = vpop.f32.mrb[0].mxu0
        %v2179 = vadd.f32 0.0, %v2178
        %v2180 = vpop.f32.mrb[0].mxu0
        %2181 = vmatprep.mubr.f32.mxu0 0.0
        %2182 = vmatmul.mubr.f32.gmra.mrb[0].mxu0 %v2004
        %v2183 = vpop.f32.mrb[0].mxu0
        %v2184 = vadd.f32 0.0, %v2183
        %v2185 = vpop.f32.mrb[0].mxu0
        %2186 = vmatprep.mubr.f32.mxu0 0.0
        %2187 = vmatmul.mubr.f32.gmra.mrb[0].mxu0 %v2007
        %v2188 = vpop.f32.mrb[0].mxu0
        %v2189 = vadd.f32 0.0, %v2188
        %v2190 = vpop.f32.mrb[0].mxu0
        %2191 = vmatprep.mubr.f32.mxu0 0.0
        %2192 = vmatmul.mubr.f32.gmra.mrb[0].mxu0 %v2010
        %v2193 = vpop.f32.mrb[0].mxu0
        %v2194 = vadd.f32 0.0, %v2193
        %v2195 = vpop.f32.mrb[0].mxu0
        %2196 = vmatprep.mubr.f32.mxu0 0.0
        %2197 = vmatmul.mubr.f32.gmra.mrb[0].mxu0 %v2013
        %v2198 = vpop.f32.mrb[0].mxu0
        %v2199 = vadd.f32 0.0, %v2198
        %v2200 = vpop.f32.mrb[0].mxu0
        %2201 = vmatprep.mubr.f32.mxu0 0.0
        %2202 = vmatmul.mubr.f32.gmra.mrb[0].mxu0 %v2016
        %v2203 = vpop.f32.mrb[0].mxu0
        %v2204 = vadd.f32 0.0, %v2203
        %v2205 = vpop.f32.mrb[0].mxu0
        %2206 = vmatprep.mubr.f32.mxu0 0.0
        %2207 = vmatmul.mubr.f32.gmra.mrb[0].mxu0 %v2019
        %v2208 = vpop.f32.mrb[0].mxu0
        %v2209 = vadd.f32 0.0, %v2208
        %v2210 = vpop.f32.mrb[0].mxu0
        %2211 = vmatprep.mubr.f32.mxu0 0.0
        %2212 = vmatmul.mubr.f32.gmra.mrb[0].mxu0 %v2022
        %v2213 = vpop.f32.mrb[0].mxu0
        %v2214 = vadd.f32 0.0, %v2213
        %v2215 = vpop.f32.mrb[0].mxu0
        %2216 = vmatprep.mubr.f32.mxu0 0.0
        %2217 = vmatmul.mubr.f32.gmra.mrb[0].mxu0 %v2025
        %v2218 = vpop.f32.mrb[0].mxu0
        %v2219 = vadd.f32 0.0, %v2218
        %v2220 = vpop.f32.mrb[0].mxu0
        %2221 = vmatprep.mubr.f32.mxu0 0.0
        %2222 = vmatmul.mubr.f32.gmra.mrb[0].mxu0 %v2028
        %v2223 = vpop.f32.mrb[0].mxu0
        %v2224 = vadd.f32 0.0, %v2223
        %v2225 = vpop.f32.mrb[0].mxu0
        %2226 = vmatprep.mubr.f32.mxu0 0.0
        %2227 = vmatmul.mubr.f32.gmra.mrb[0].mxu0 %v2031
        %v2228 = vpop.f32.mrb[0].mxu0
        %v2229 = vadd.f32 0.0, %v2228
        %v2230 = vpop.f32.mrb[0].mxu0
        %2231 = vmatprep.mubr.f32.mxu0 0.0
        %2232 = vmatmul.mubr.f32.gmra.mrb[0].mxu0 %v2034
        %v2233 = vpop.f32.mrb[0].mxu0
        %v2234 = vadd.f32 0.0, %v2233
        %v2235 = vpop.f32.mrb[0].mxu0
        %2236 = vmatprep.mubr.f32.mxu0 0.0
        %2237 = vmatmul.mubr.f32.gmra.mrb[0].mxu0 %v2037
        %v2238 = vpop.f32.mrb[0].mxu0
        %v2239 = vadd.f32 0.0, %v2238
        %v2240 = vpop.f32.mrb[0].mxu0
        %2241 = vmatprep.mubr.f32.mxu0 0.0
        %2242 = vmatmul.mubr.f32.gmra.mrb[0].mxu0 %v2040
        %v2243 = vpop.f32.mrb[0].mxu0
        %v2244 = vadd.f32 0.0, %v2243
        %v2245 = vpop.f32.mrb[0].mxu0
        %2246 = vmatprep.mubr.f32.mxu0 0.0
        %2247 = vmatmul.mubr.f32.gmra.mrb[0].mxu0 %v2043
        %v2248 = vpop.f32.mrb[0].mxu0
        %v2249 = vadd.f32 0.0, %v2248
        %v2250 = vpop.f32.mrb[0].mxu0
        %2251 = vmatprep.mubr.f32.mxu0 0.0
        %2252 = vmatmul.mubr.f32.gmra.mrb[0].mxu0 %v2046
        %v2253 = vpop.f32.mrb[0].mxu0
        %v2254 = vadd.f32 0.0, %v2253
        %v2255 = vpop.f32.mrb[0].mxu0
        %2256 = vmatprep.mubr.f32.mxu0 0.0
        %2257 = vmatmul.mubr.f32.gmra.mrb[0].mxu0 %v2049
        %v2258 = vpop.f32.mrb[0].mxu0
        %v2259 = vadd.f32 0.0, %v2258
        %v2260 = vpop.f32.mrb[0].mxu0
        %2261 = vmatprep.mubr.f32.mxu0 0.0
        %2262 = vmatmul.mubr.f32.gmra.mrb[0].mxu0 %v2052
        %v2263 = vpop.f32.mrb[0].mxu0
        %v2264 = vadd.f32 0.0, %v2263
        %v2265 = vpop.f32.mrb[0].mxu0
        %2266 = vmatprep.mubr.f32.mxu0 0.0
        %2267 = vmatmul.mubr.f32.gmra.mrb[0].mxu0 %v2055
        %v2268 = vpop.f32.mrb[0].mxu0
        %v2269 = vadd.f32 0.0, %v2268
        %v2270 = vpop.f32.mrb[0].mxu0
        %2271 = vmatprep.mubr.f32.mxu0 0.0
        %2272 = vmatmul.mubr.f32.gmra.mrb[0].mxu0 %v2058
        %v2273 = vpop.f32.mrb[0].mxu0
        %v2274 = vadd.f32 0.0, %v2273
        %v2275 = vpop.f32.mrb[0].mxu0
        %2276 = vmatprep.mubr.f32.mxu0 0.0
        %2277 = vmatmul.mubr.f32.gmra.mrb[0].mxu0 %v2061
        %v2278 = vpop.f32.mrb[0].mxu0
        %v2279 = vadd.f32 0.0, %v2278
        %v2280 = vpop.f32.mrb[0].mxu0
        %2281 = vmatprep.mubr.f32.mxu0 0.0
        %2282 = vmatmul.mubr.f32.gmra.mrb[0].mxu0 %v2064
        %v2283 = vpop.f32.mrb[0].mxu0
        %v2284 = vadd.f32 0.0, %v2283
        %v2285 = vpop.f32.mrb[0].mxu0
        %2286 = vmatprep.mubr.f32.mxu0 0.0
        %2287 = vmatmul.mubr.f32.gmra.mrb[0].mxu0 %v2067
        %v2288 = vpop.f32.mrb[0].mxu0
        %v2289 = vadd.f32 0.0, %v2288
        %v2290 = vpop.f32.mrb[0].mxu0
        %2291 = vmatprep.mubr.f32.mxu0 0.0
        %2292 = vmatmul.mubr.f32.gmra.mrb[0].mxu0 %v2070
        %v2293 = vpop.f32.mrb[0].mxu0
        %v2294 = vadd.f32 0.0, %v2293
        %v2295 = vpop.f32.mrb[0].mxu0
        %2296 = vdwg.mxu0
        %v2297 = vadd.f32 %v1809, %v2139
        %v2298 = vadd.f32 %v1810, %v2144
        %v2299 = vadd.f32 %v1811, %v2149
        %v2300 = vadd.f32 %v1812, %v2154
        %v2301 = vadd.f32 %v1813, %v2159
        %v2302 = vadd.f32 %v1814, %v2164
        %v2303 = vadd.f32 %v1815, %v2169
        %v2304 = vadd.f32 %v1816, %v2174
        %v2305 = vadd.f32 %v1817, %v2179
        %v2306 = vadd.f32 %v1818, %v2184
        %v2307 = vadd.f32 %v1819, %v2189
        %v2308 = vadd.f32 %v1820, %v2194
        %v2309 = vadd.f32 %v1821, %v2199
        %v2310 = vadd.f32 %v1822, %v2204
        %v2311 = vadd.f32 %v1823, %v2209
        %v2312 = vadd.f32 %v1824, %v2214
        %v2313 = vadd.f32 %v1825, %v2219
        %v2314 = vadd.f32 %v1826, %v2224
        %v2315 = vadd.f32 %v1827, %v2229
        %v2316 = vadd.f32 %v1828, %v2234
        %v2317 = vadd.f32 %v1829, %v2239
        %v2318 = vadd.f32 %v1830, %v2244
        %v2319 = vadd.f32 %v1831, %v2249
        %v2320 = vadd.f32 %v1832, %v2254
        %v2321 = vadd.f32 %v1833, %v2259
        %v2322 = vadd.f32 %v1834, %v2264
        %v2323 = vadd.f32 %v1835, %v2269
        %v2324 = vadd.f32 %v1836, %v2274
        %v2325 = vadd.f32 %v1837, %v2279
        %v2326 = vadd.f32 %v1838, %v2284
        %v2327 = vadd.f32 %v1839, %v2289
        %v2328 = vadd.f32 %v1840, %v2294
        %2329 = vrot.lane.b32.xlu0 %v145, 124
        %v2330 = vpop.permute.xlu0 %2329
        %2331 = vrot.lane.b32.xlu0 %v146, 124
        %v2332 = vpop.permute.xlu0 %2331
        %2333 = vrot.lane.b32.xlu0 %v147, 124
        %v2334 = vpop.permute.xlu0 %2333
        %2335 = vrot.lane.b32.xlu0 %v148, 124
        %v2336 = vpop.permute.xlu0 %2335
        %2337 = vrot.lane.b32.xlu0 %v149, 124
        %v2338 = vpop.permute.xlu0 %2337
        %2339 = vrot.lane.b32.xlu0 %v150, 124
        %v2340 = vpop.permute.xlu0 %2339
        %2341 = vrot.lane.b32.xlu0 %v151, 124
        %v2342 = vpop.permute.xlu0 %2341
        %2343 = vrot.lane.b32.xlu0 %v152, 124
        %v2344 = vpop.permute.xlu0 %2343
        %2345 = vrot.lane.b32.xlu0 %v153, 124
        %v2346 = vpop.permute.xlu0 %2345
        %2347 = vrot.lane.b32.xlu0 %v154, 124
        %v2348 = vpop.permute.xlu0 %2347
        %2349 = vrot.lane.b32.xlu0 %v155, 124
        %v2350 = vpop.permute.xlu0 %2349
        %2351 = vrot.lane.b32.xlu0 %v156, 124
        %v2352 = vpop.permute.xlu0 %2351
        %2353 = vrot.lane.b32.xlu0 %v157, 124
        %v2354 = vpop.permute.xlu0 %2353
        %2355 = vrot.lane.b32.xlu0 %v158, 124
        %v2356 = vpop.permute.xlu0 %2355
        %2357 = vrot.lane.b32.xlu0 %v159, 124
        %v2358 = vpop.permute.xlu0 %2357
        %2359 = vrot.lane.b32.xlu0 %v160, 124
        %v2360 = vpop.permute.xlu0 %2359
        %2361 = vrot.lane.b32.xlu0 %v161, 124
        %v2362 = vpop.permute.xlu0 %2361
        %2363 = vrot.lane.b32.xlu0 %v162, 124
        %v2364 = vpop.permute.xlu0 %2363
        %2365 = vrot.lane.b32.xlu0 %v163, 124
        %v2366 = vpop.permute.xlu0 %2365
        %2367 = vrot.lane.b32.xlu0 %v164, 124
        %v2368 = vpop.permute.xlu0 %2367
        %2369 = vrot.lane.b32.xlu0 %v165, 124
        %v2370 = vpop.permute.xlu0 %2369
        %2371 = vrot.lane.b32.xlu0 %v166, 124
        %v2372 = vpop.permute.xlu0 %2371
        %2373 = vrot.lane.b32.xlu0 %v167, 124
        %v2374 = vpop.permute.xlu0 %2373
        %2375 = vrot.lane.b32.xlu0 %v168, 124
        %v2376 = vpop.permute.xlu0 %2375
        %2377 = vrot.lane.b32.xlu0 %v169, 124
        %v2378 = vpop.permute.xlu0 %2377
        %2379 = vrot.lane.b32.xlu0 %v170, 124
        %v2380 = vpop.permute.xlu0 %2379
        %2381 = vrot.lane.b32.xlu0 %v171, 124
        %v2382 = vpop.permute.xlu0 %2381
        %2383 = vrot.lane.b32.xlu0 %v172, 124
        %v2384 = vpop.permute.xlu0 %2383
        %2385 = vrot.lane.b32.xlu0 %v173, 124
        %v2386 = vpop.permute.xlu0 %2385
        %2387 = vrot.lane.b32.xlu0 %v174, 124
        %v2388 = vpop.permute.xlu0 %2387
        %2389 = vrot.lane.b32.xlu0 %v175, 124
        %v2390 = vpop.permute.xlu0 %2389
        %2391 = vrot.lane.b32.xlu0 %v176, 124
        %v2392 = vpop.permute.xlu0 %2391
        %v2425 = vmul.f32 %v145, %v2330
        %v2426 = vmul.f32 %v146, %v2332
        %v2427 = vmul.f32 %v147, %v2334
        %v2428 = vmul.f32 %v148, %v2336
        %v2429 = vmul.f32 %v149, %v2338
        %v2430 = vmul.f32 %v150, %v2340
        %v2431 = vmul.f32 %v151, %v2342
        %v2432 = vmul.f32 %v152, %v2344
        %v2433 = vmul.f32 %v153, %v2346
        %v2434 = vmul.f32 %v154, %v2348
        %v2435 = vmul.f32 %v155, %v2350
        %v2436 = vmul.f32 %v156, %v2352
        %v2437 = vmul.f32 %v157, %v2354
        %v2438 = vmul.f32 %v158, %v2356
        %v2439 = vmul.f32 %v159, %v2358
        %v2440 = vmul.f32 %v160, %v2360
        %v2441 = vmul.f32 %v161, %v2362
        %v2442 = vmul.f32 %v162, %v2364
        %v2443 = vmul.f32 %v163, %v2366
        %v2444 = vmul.f32 %v164, %v2368
        %v2445 = vmul.f32 %v165, %v2370
        %v2446 = vmul.f32 %v166, %v2372
        %v2447 = vmul.f32 %v167, %v2374
        %v2448 = vmul.f32 %v168, %v2376
        %v2449 = vmul.f32 %v169, %v2378
        %v2450 = vmul.f32 %v170, %v2380
        %v2451 = vmul.f32 %v171, %v2382
        %v2452 = vmul.f32 %v172, %v2384
        %v2453 = vmul.f32 %v173, %v2386
        %v2454 = vmul.f32 %v174, %v2388
        %v2455 = vmul.f32 %v175, %v2390
        %v2456 = vmul.f32 %v176, %v2392
        %s2457 = scalar_lea.vmem %s1, 240
        %v2458 = vld [vmem:[%s2457] sm:$0xff]
        %v2459 = vld [vmem:[%s2457 + $0x8] sm:$0xff]
        %v2460 = vld [vmem:[%s2457 + $0x10] sm:$0xff]
        %v2461 = vld [vmem:[%s2457 + $0x18] sm:$0xff]
        %v2462 = vld [vmem:[%s2457 + $0x20] sm:$0xff]
        %v2463 = vld [vmem:[%s2457 + $0x28] sm:$0xff]
        %v2465 = vsel %vm222, %v2425, 0
        %v2468 = vsel %vm222, %v2426, 0
        %v2471 = vsel %vm222, %v2427, 0
        %v2474 = vsel %vm222, %v2428, 0
        %v2477 = vsel %vm222, %v2429, 0
        %v2480 = vsel %vm222, %v2430, 0
        %v2483 = vsel %vm222, %v2431, 0
        %v2486 = vsel %vm222, %v2432, 0
        %v2489 = vsel %vm222, %v2433, 0
        %v2492 = vsel %vm222, %v2434, 0
        %v2495 = vsel %vm222, %v2435, 0
        %v2498 = vsel %vm222, %v2436, 0
        %v2501 = vsel %vm222, %v2437, 0
        %v2504 = vsel %vm222, %v2438, 0
        %v2507 = vsel %vm222, %v2439, 0
        %v2510 = vsel %vm222, %v2440, 0
        %v2513 = vsel %vm222, %v2441, 0
        %v2516 = vsel %vm222, %v2442, 0
        %v2519 = vsel %vm222, %v2443, 0
        %v2522 = vsel %vm222, %v2444, 0
        %v2525 = vsel %vm222, %v2445, 0
        %v2528 = vsel %vm222, %v2446, 0
        %v2531 = vsel %vm222, %v2447, 0
        %v2534 = vsel %vm222, %v2448, 0
        %v2537 = vsel %vm222, %v2449, 0
        %v2540 = vsel %vm222, %v2450, 0
        %v2543 = vsel %vm222, %v2451, 0
        %v2546 = vsel %vm222, %v2452, 0
        %v2549 = vsel %vm222, %v2453, 0
        %v2552 = vsel %vm222, %v2454, 0
        %v2555 = vsel %vm222, %v2455, 0
        %v2558 = vsel %vm222, %v2456, 0
        %2560 = vmatprep.subr.mxu0 0.0
        %2561 = vmatpush1.msra.mxu0 %v2458
        %2562 = vmatprep.subr.mxu0 0.0
        %2563 = vmatpush1.msra.mxu0 %v2459
        %2564 = vmatprep.subr.mxu0 0.0
        %2565 = vmatpush1.msra.mxu0 %v2460
        %2566 = vmatprep.subr.mxu0 0.0
        %2567 = vmatpush1.msra.mxu0 %v2461
        %2568 = vmatprep.subr.mxu0 0.0
        %2569 = vmatpush1.msra.mxu0 %v2462
        %2570 = vmatprep.subr.mxu0 0.0
        %2571 = vmatpush1.msra.mxu0 %v2463
        %2572 = vmatprep.subr.mxu0 0.0
        %2573 = vmatpush1.msra.mxu0 0.0
        %2574 = vmatprep.subr.mxu0 0.0
        %2575 = vmatpush1.msra.mxu0 0.0
        %2576 = vmatprep.subr.mxu0 0.0
        %2577 = vmatpush1.msra.mxu0 0.0
        %2578 = vmatprep.subr.mxu0 0.0
        %2579 = vmatpush1.msra.mxu0 0.0
        %2580 = vmatprep.subr.mxu0 0.0
        %2581 = vmatpush1.msra.mxu0 0.0
        %2582 = vmatprep.subr.mxu0 0.0
        %2583 = vmatpush1.msra.mxu0 0.0
        %2584 = vmatprep.subr.mxu0 0.0
        %2585 = vmatpush1.msra.mxu0 0.0
        %2586 = vmatprep.subr.mxu0 0.0
        %2587 = vmatpush1.msra.mxu0 0.0
        %2588 = vmatprep.subr.mxu0 0.0
        %2589 = vmatpush1.msra.mxu0 0.0
        %2590 = vmatprep.subr.mxu0 0.0
        %2591 = vmatpush1.msra.mxu0 0.0
        %2592 = vmatprep.subr.mxu0 0.0
        %2593 = vmatpush1.msra.mxu0 0.0
        %2594 = vmatprep.subr.mxu0 0.0
        %2595 = vmatpush1.msra.mxu0 0.0
        %2596 = vmatprep.subr.mxu0 0.0
        %2597 = vmatpush1.msra.mxu0 0.0
        %2598 = vmatprep.subr.mxu0 0.0
        %2599 = vmatpush1.msra.mxu0 0.0
        %2600 = vmatprep.subr.mxu0 0.0
        %2601 = vmatpush1.msra.mxu0 0.0
        %2602 = vmatprep.subr.mxu0 0.0
        %2603 = vmatpush1.msra.mxu0 0.0
        %2604 = vmatprep.subr.mxu0 0.0
        %2605 = vmatpush1.msra.mxu0 0.0
        %2606 = vmatprep.subr.mxu0 0.0
        %2607 = vmatpush1.msra.mxu0 0.0
        %2608 = vmatprep.subr.mxu0 0.0
        %2609 = vmatpush1.msra.mxu0 0.0
        %2610 = vmatprep.subr.mxu0 0.0
        %2611 = vmatpush1.msra.mxu0 0.0
        %2612 = vmatprep.subr.mxu0 0.0
        %2613 = vmatpush1.msra.mxu0 0.0
        %2614 = vmatprep.subr.mxu0 0.0
        %2615 = vmatpush1.msra.mxu0 0.0
        %2616 = vmatprep.subr.mxu0 0.0
        %2617 = vmatpush1.msra.mxu0 0.0
        %2618 = vmatprep.subr.mxu0 0.0
        %2619 = vmatpush1.msra.mxu0 0.0
        %2620 = vmatprep.subr.mxu0 0.0
        %2621 = vmatpush1.msra.mxu0 0.0
        %2622 = vmatprep.subr.mxu0 0.0
        %2623 = vmatpush1.msra.mxu0 0.0
        %2624 = vmatprep.mubr.f32.mxu0 0.0
        %2625 = vmatmul.mubr.f32.gmra.mrb[0].mxu0 %v2465
        %v2626 = vpop.f32.mrb[0].mxu0
        %v2627 = vadd.f32 0.0, %v2626
        %v2628 = vpop.f32.mrb[0].mxu0
        %2629 = vmatprep.mubr.f32.mxu0 0.0
        %2630 = vmatmul.mubr.f32.gmra.mrb[0].mxu0 %v2468
        %v2631 = vpop.f32.mrb[0].mxu0
        %v2632 = vadd.f32 0.0, %v2631
        %v2633 = vpop.f32.mrb[0].mxu0
        %2634 = vmatprep.mubr.f32.mxu0 0.0
        %2635 = vmatmul.mubr.f32.gmra.mrb[0].mxu0 %v2471
        %v2636 = vpop.f32.mrb[0].mxu0
        %v2637 = vadd.f32 0.0, %v2636
        %v2638 = vpop.f32.mrb[0].mxu0
        %2639 = vmatprep.mubr.f32.mxu0 0.0
        %2640 = vmatmul.mubr.f32.gmra.mrb[0].mxu0 %v2474
        %v2641 = vpop.f32.mrb[0].mxu0
        %v2642 = vadd.f32 0.0, %v2641
        %v2643 = vpop.f32.mrb[0].mxu0
        %2644 = vmatprep.mubr.f32.mxu0 0.0
        %2645 = vmatmul.mubr.f32.gmra.mrb[0].mxu0 %v2477
        %v2646 = vpop.f32.mrb[0].mxu0
        %v2647 = vadd.f32 0.0, %v2646
        %v2648 = vpop.f32.mrb[0].mxu0
        %2649 = vmatprep.mubr.f32.mxu0 0.0
        %2650 = vmatmul.mubr.f32.gmra.mrb[0].mxu0 %v2480
        %v2651 = vpop.f32.mrb[0].mxu0
        %v2652 = vadd.f32 0.0, %v2651
        %v2653 = vpop.f32.mrb[0].mxu0
        %2654 = vmatprep.mubr.f32.mxu0 0.0
        %2655 = vmatmul.mubr.f32.gmra.mrb[0].mxu0 %v2483
        %v2656 = vpop.f32.mrb[0].mxu0
        %v2657 = vadd.f32 0.0, %v2656
        %v2658 = vpop.f32.mrb[0].mxu0
        %2659 = vmatprep.mubr.f32.mxu0 0.0
        %2660 = vmatmul.mubr.f32.gmra.mrb[0].mxu0 %v2486
        %v2661 = vpop.f32.mrb[0].mxu0
        %v2662 = vadd.f32 0.0, %v2661
        %v2663 = vpop.f32.mrb[0].mxu0
        %2664 = vmatprep.mubr.f32.mxu0 0.0
        %2665 = vmatmul.mubr.f32.gmra.mrb[0].mxu0 %v2489
        %v2666 = vpop.f32.mrb[0].mxu0
        %v2667 = vadd.f32 0.0, %v2666
        %v2668 = vpop.f32.mrb[0].mxu0
        %2669 = vmatprep.mubr.f32.mxu0 0.0
        %2670 = vmatmul.mubr.f32.gmra.mrb[0].mxu0 %v2492
        %v2671 = vpop.f32.mrb[0].mxu0
        %v2672 = vadd.f32 0.0, %v2671
        %v2673 = vpop.f32.mrb[0].mxu0
        %2674 = vmatprep.mubr.f32.mxu0 0.0
        %2675 = vmatmul.mubr.f32.gmra.mrb[0].mxu0 %v2495
        %v2676 = vpop.f32.mrb[0].mxu0
        %v2677 = vadd.f32 0.0, %v2676
        %v2678 = vpop.f32.mrb[0].mxu0
        %2679 = vmatprep.mubr.f32.mxu0 0.0
        %2680 = vmatmul.mubr.f32.gmra.mrb[0].mxu0 %v2498
        %v2681 = vpop.f32.mrb[0].mxu0
        %v2682 = vadd.f32 0.0, %v2681
        %v2683 = vpop.f32.mrb[0].mxu0
        %2684 = vmatprep.mubr.f32.mxu0 0.0
        %2685 = vmatmul.mubr.f32.gmra.mrb[0].mxu0 %v2501
        %v2686 = vpop.f32.mrb[0].mxu0
        %v2687 = vadd.f32 0.0, %v2686
        %v2688 = vpop.f32.mrb[0].mxu0
        %2689 = vmatprep.mubr.f32.mxu0 0.0
        %2690 = vmatmul.mubr.f32.gmra.mrb[0].mxu0 %v2504
        %v2691 = vpop.f32.mrb[0].mxu0
        %v2692 = vadd.f32 0.0, %v2691
        %v2693 = vpop.f32.mrb[0].mxu0
        %2694 = vmatprep.mubr.f32.mxu0 0.0
        %2695 = vmatmul.mubr.f32.gmra.mrb[0].mxu0 %v2507
        %v2696 = vpop.f32.mrb[0].mxu0
        %v2697 = vadd.f32 0.0, %v2696
        %v2698 = vpop.f32.mrb[0].mxu0
        %2699 = vmatprep.mubr.f32.mxu0 0.0
        %2700 = vmatmul.mubr.f32.gmra.mrb[0].mxu0 %v2510
        %v2701 = vpop.f32.mrb[0].mxu0
        %v2702 = vadd.f32 0.0, %v2701
        %v2703 = vpop.f32.mrb[0].mxu0
        %2704 = vmatprep.mubr.f32.mxu0 0.0
        %2705 = vmatmul.mubr.f32.gmra.mrb[0].mxu0 %v2513
        %v2706 = vpop.f32.mrb[0].mxu0
        %v2707 = vadd.f32 0.0, %v2706
        %v2708 = vpop.f32.mrb[0].mxu0
        %2709 = vmatprep.mubr.f32.mxu0 0.0
        %2710 = vmatmul.mubr.f32.gmra.mrb[0].mxu0 %v2516
        %v2711 = vpop.f32.mrb[0].mxu0
        %v2712 = vadd.f32 0.0, %v2711
        %v2713 = vpop.f32.mrb[0].mxu0
        %2714 = vmatprep.mubr.f32.mxu0 0.0
        %2715 = vmatmul.mubr.f32.gmra.mrb[0].mxu0 %v2519
        %v2716 = vpop.f32.mrb[0].mxu0
        %v2717 = vadd.f32 0.0, %v2716
        %v2718 = vpop.f32.mrb[0].mxu0
        %2719 = vmatprep.mubr.f32.mxu0 0.0
        %2720 = vmatmul.mubr.f32.gmra.mrb[0].mxu0 %v2522
        %v2721 = vpop.f32.mrb[0].mxu0
        %v2722 = vadd.f32 0.0, %v2721
        %v2723 = vpop.f32.mrb[0].mxu0
        %2724 = vmatprep.mubr.f32.mxu0 0.0
        %2725 = vmatmul.mubr.f32.gmra.mrb[0].mxu0 %v2525
        %v2726 = vpop.f32.mrb[0].mxu0
        %v2727 = vadd.f32 0.0, %v2726
        %v2728 = vpop.f32.mrb[0].mxu0
        %2729 = vmatprep.mubr.f32.mxu0 0.0
        %2730 = vmatmul.mubr.f32.gmra.mrb[0].mxu0 %v2528
        %v2731 = vpop.f32.mrb[0].mxu0
        %v2732 = vadd.f32 0.0, %v2731
        %v2733 = vpop.f32.mrb[0].mxu0
        %2734 = vmatprep.mubr.f32.mxu0 0.0
        %2735 = vmatmul.mubr.f32.gmra.mrb[0].mxu0 %v2531
        %v2736 = vpop.f32.mrb[0].mxu0
        %v2737 = vadd.f32 0.0, %v2736
        %v2738 = vpop.f32.mrb[0].mxu0
        %2739 = vmatprep.mubr.f32.mxu0 0.0
        %2740 = vmatmul.mubr.f32.gmra.mrb[0].mxu0 %v2534
        %v2741 = vpop.f32.mrb[0].mxu0
        %v2742 = vadd.f32 0.0, %v2741
        %v2743 = vpop.f32.mrb[0].mxu0
        %2744 = vmatprep.mubr.f32.mxu0 0.0
        %2745 = vmatmul.mubr.f32.gmra.mrb[0].mxu0 %v2537
        %v2746 = vpop.f32.mrb[0].mxu0
        %v2747 = vadd.f32 0.0, %v2746
        %v2748 = vpop.f32.mrb[0].mxu0
        %2749 = vmatprep.mubr.f32.mxu0 0.0
        %2750 = vmatmul.mubr.f32.gmra.mrb[0].mxu0 %v2540
        %v2751 = vpop.f32.mrb[0].mxu0
        %v2752 = vadd.f32 0.0, %v2751
        %v2753 = vpop.f32.mrb[0].mxu0
        %2754 = vmatprep.mubr.f32.mxu0 0.0
        %2755 = vmatmul.mubr.f32.gmra.mrb[0].mxu0 %v2543
        %v2756 = vpop.f32.mrb[0].mxu0
        %v2757 = vadd.f32 0.0, %v2756
        %v2758 = vpop.f32.mrb[0].mxu0
        %2759 = vmatprep.mubr.f32.mxu0 0.0
        %2760 = vmatmul.mubr.f32.gmra.mrb[0].mxu0 %v2546
        %v2761 = vpop.f32.mrb[0].mxu0
        %v2762 = vadd.f32 0.0, %v2761
        %v2763 = vpop.f32.mrb[0].mxu0
        %2764 = vmatprep.mubr.f32.mxu0 0.0
        %2765 = vmatmul.mubr.f32.gmra.mrb[0].mxu0 %v2549
        %v2766 = vpop.f32.mrb[0].mxu0
        %v2767 = vadd.f32 0.0, %v2766
        %v2768 = vpop.f32.mrb[0].mxu0
        %2769 = vmatprep.mubr.f32.mxu0 0.0
        %2770 = vmatmul.mubr.f32.gmra.mrb[0].mxu0 %v2552
        %v2771 = vpop.f32.mrb[0].mxu0
        %v2772 = vadd.f32 0.0, %v2771
        %v2773 = vpop.f32.mrb[0].mxu0
        %2774 = vmatprep.mubr.f32.mxu0 0.0
        %2775 = vmatmul.mubr.f32.gmra.mrb[0].mxu0 %v2555
        %v2776 = vpop.f32.mrb[0].mxu0
        %v2777 = vadd.f32 0.0, %v2776
        %v2778 = vpop.f32.mrb[0].mxu0
        %2779 = vmatprep.mubr.f32.mxu0 0.0
        %2780 = vmatmul.mubr.f32.gmra.mrb[0].mxu0 %v2558
        %v2781 = vpop.f32.mrb[0].mxu0
        %v2782 = vadd.f32 0.0, %v2781
        %v2783 = vpop.f32.mrb[0].mxu0
        %2784 = vdwg.mxu0
        %v2785 = vadd.f32 %v2297, %v2627
        %v2786 = vadd.f32 %v2298, %v2632
        %v2787 = vadd.f32 %v2299, %v2637
        %v2788 = vadd.f32 %v2300, %v2642
        %v2789 = vadd.f32 %v2301, %v2647
        %v2790 = vadd.f32 %v2302, %v2652
        %v2791 = vadd.f32 %v2303, %v2657
        %v2792 = vadd.f32 %v2304, %v2662
        %v2793 = vadd.f32 %v2305, %v2667
        %v2794 = vadd.f32 %v2306, %v2672
        %v2795 = vadd.f32 %v2307, %v2677
        %v2796 = vadd.f32 %v2308, %v2682
        %v2797 = vadd.f32 %v2309, %v2687
        %v2798 = vadd.f32 %v2310, %v2692
        %v2799 = vadd.f32 %v2311, %v2697
        %v2800 = vadd.f32 %v2312, %v2702
        %v2801 = vadd.f32 %v2313, %v2707
        %v2802 = vadd.f32 %v2314, %v2712
        %v2803 = vadd.f32 %v2315, %v2717
        %v2804 = vadd.f32 %v2316, %v2722
        %v2805 = vadd.f32 %v2317, %v2727
        %v2806 = vadd.f32 %v2318, %v2732
        %v2807 = vadd.f32 %v2319, %v2737
        %v2808 = vadd.f32 %v2320, %v2742
        %v2809 = vadd.f32 %v2321, %v2747
        %v2810 = vadd.f32 %v2322, %v2752
        %v2811 = vadd.f32 %v2323, %v2757
        %v2812 = vadd.f32 %v2324, %v2762
        %v2813 = vadd.f32 %v2325, %v2767
        %v2814 = vadd.f32 %v2326, %v2772
        %v2815 = vadd.f32 %v2327, %v2777
        %v2816 = vadd.f32 %v2328, %v2782
        %2817 = vrot.lane.b32.xlu0 %v145, 123
        %v2818 = vpop.permute.xlu0 %2817
        %2819 = vrot.lane.b32.xlu0 %v146, 123
        %v2820 = vpop.permute.xlu0 %2819
        %2821 = vrot.lane.b32.xlu0 %v147, 123
        %v2822 = vpop.permute.xlu0 %2821
        %2823 = vrot.lane.b32.xlu0 %v148, 123
        %v2824 = vpop.permute.xlu0 %2823
        %2825 = vrot.lane.b32.xlu0 %v149, 123
        %v2826 = vpop.permute.xlu0 %2825
        %2827 = vrot.lane.b32.xlu0 %v150, 123
        %v2828 = vpop.permute.xlu0 %2827
        %2829 = vrot.lane.b32.xlu0 %v151, 123
        %v2830 = vpop.permute.xlu0 %2829
        %2831 = vrot.lane.b32.xlu0 %v152, 123
        %v2832 = vpop.permute.xlu0 %2831
        %2833 = vrot.lane.b32.xlu0 %v153, 123
        %v2834 = vpop.permute.xlu0 %2833
        %2835 = vrot.lane.b32.xlu0 %v154, 123
        %v2836 = vpop.permute.xlu0 %2835
        %2837 = vrot.lane.b32.xlu0 %v155, 123
        %v2838 = vpop.permute.xlu0 %2837
        %2839 = vrot.lane.b32.xlu0 %v156, 123
        %v2840 = vpop.permute.xlu0 %2839
        %2841 = vrot.lane.b32.xlu0 %v157, 123
        %v2842 = vpop.permute.xlu0 %2841
        %2843 = vrot.lane.b32.xlu0 %v158, 123
        %v2844 = vpop.permute.xlu0 %2843
        %2845 = vrot.lane.b32.xlu0 %v159, 123
        %v2846 = vpop.permute.xlu0 %2845
        %2847 = vrot.lane.b32.xlu0 %v160, 123
        %v2848 = vpop.permute.xlu0 %2847
        %2849 = vrot.lane.b32.xlu0 %v161, 123
        %v2850 = vpop.permute.xlu0 %2849
        %2851 = vrot.lane.b32.xlu0 %v162, 123
        %v2852 = vpop.permute.xlu0 %2851
        %2853 = vrot.lane.b32.xlu0 %v163, 123
        %v2854 = vpop.permute.xlu0 %2853
        %2855 = vrot.lane.b32.xlu0 %v164, 123
        %v2856 = vpop.permute.xlu0 %2855
        %2857 = vrot.lane.b32.xlu0 %v165, 123
        %v2858 = vpop.permute.xlu0 %2857
        %2859 = vrot.lane.b32.xlu0 %v166, 123
        %v2860 = vpop.permute.xlu0 %2859
        %2861 = vrot.lane.b32.xlu0 %v167, 123
        %v2862 = vpop.permute.xlu0 %2861
        %2863 = vrot.lane.b32.xlu0 %v168, 123
        %v2864 = vpop.permute.xlu0 %2863
        %2865 = vrot.lane.b32.xlu0 %v169, 123
        %v2866 = vpop.permute.xlu0 %2865
        %2867 = vrot.lane.b32.xlu0 %v170, 123
        %v2868 = vpop.permute.xlu0 %2867
        %2869 = vrot.lane.b32.xlu0 %v171, 123
        %v2870 = vpop.permute.xlu0 %2869
        %2871 = vrot.lane.b32.xlu0 %v172, 123
        %v2872 = vpop.permute.xlu0 %2871
        %2873 = vrot.lane.b32.xlu0 %v173, 123
        %v2874 = vpop.permute.xlu0 %2873
        %2875 = vrot.lane.b32.xlu0 %v174, 123
        %v2876 = vpop.permute.xlu0 %2875
        %2877 = vrot.lane.b32.xlu0 %v175, 123
        %v2878 = vpop.permute.xlu0 %2877
        %2879 = vrot.lane.b32.xlu0 %v176, 123
        %v2880 = vpop.permute.xlu0 %2879
        %v2913 = vmul.f32 %v145, %v2818
        %v2914 = vmul.f32 %v146, %v2820
        %v2915 = vmul.f32 %v147, %v2822
        %v2916 = vmul.f32 %v148, %v2824
        %v2917 = vmul.f32 %v149, %v2826
        %v2918 = vmul.f32 %v150, %v2828
        %v2919 = vmul.f32 %v151, %v2830
        %v2920 = vmul.f32 %v152, %v2832
        %v2921 = vmul.f32 %v153, %v2834
        %v2922 = vmul.f32 %v154, %v2836
        %v2923 = vmul.f32 %v155, %v2838
        %v2924 = vmul.f32 %v156, %v2840
        %v2925 = vmul.f32 %v157, %v2842
        %v2926 = vmul.f32 %v158, %v2844
        %v2927 = vmul.f32 %v159, %v2846
        %v2928 = vmul.f32 %v160, %v2848
        %v2929 = vmul.f32 %v161, %v2850
        %v2930 = vmul.f32 %v162, %v2852
        %v2931 = vmul.f32 %v163, %v2854
        %v2932 = vmul.f32 %v164, %v2856
        %v2933 = vmul.f32 %v165, %v2858
        %v2934 = vmul.f32 %v166, %v2860
        %v2935 = vmul.f32 %v167, %v2862
        %v2936 = vmul.f32 %v168, %v2864
        %v2937 = vmul.f32 %v169, %v2866
        %v2938 = vmul.f32 %v170, %v2868
        %v2939 = vmul.f32 %v171, %v2870
        %v2940 = vmul.f32 %v172, %v2872
        %v2941 = vmul.f32 %v173, %v2874
        %v2942 = vmul.f32 %v174, %v2876
        %v2943 = vmul.f32 %v175, %v2878
        %v2944 = vmul.f32 %v176, %v2880
        %s2945 = scalar_lea.vmem %s1, 288
        %v2946 = vld [vmem:[%s2945] sm:$0xff]
        %v2947 = vld [vmem:[%s2945 + $0x8] sm:$0xff]
        %v2948 = vld [vmem:[%s2945 + $0x10] sm:$0xff]
        %v2949 = vld [vmem:[%s2945 + $0x18] sm:$0xff]
        %v2950 = vld [vmem:[%s2945 + $0x20] sm:$0xff]
        %v2951 = vld [vmem:[%s2945 + $0x28] sm:$0xff]
        %v2953 = vsel %vm222, %v2913, 0
        %v2956 = vsel %vm222, %v2914, 0
        %v2959 = vsel %vm222, %v2915, 0
        %v2962 = vsel %vm222, %v2916, 0
        %v2965 = vsel %vm222, %v2917, 0
        %v2968 = vsel %vm222, %v2918, 0
        %v2971 = vsel %vm222, %v2919, 0
        %v2974 = vsel %vm222, %v2920, 0
        %v2977 = vsel %vm222, %v2921, 0
        %v2980 = vsel %vm222, %v2922, 0
        %v2983 = vsel %vm222, %v2923, 0
        %v2986 = vsel %vm222, %v2924, 0
        %v2989 = vsel %vm222, %v2925, 0
        %v2992 = vsel %vm222, %v2926, 0
        %v2995 = vsel %vm222, %v2927, 0
        %v2998 = vsel %vm222, %v2928, 0
        %v3001 = vsel %vm222, %v2929, 0
        %v3004 = vsel %vm222, %v2930, 0
        %v3007 = vsel %vm222, %v2931, 0
        %v3010 = vsel %vm222, %v2932, 0
        %v3013 = vsel %vm222, %v2933, 0
        %v3016 = vsel %vm222, %v2934, 0
        %v3019 = vsel %vm222, %v2935, 0
        %v3022 = vsel %vm222, %v2936, 0
        %v3025 = vsel %vm222, %v2937, 0
        %v3028 = vsel %vm222, %v2938, 0
        %v3031 = vsel %vm222, %v2939, 0
        %v3034 = vsel %vm222, %v2940, 0
        %v3037 = vsel %vm222, %v2941, 0
        %v3040 = vsel %vm222, %v2942, 0
        %v3043 = vsel %vm222, %v2943, 0
        %v3046 = vsel %vm222, %v2944, 0
        %3048 = vmatprep.subr.mxu0 0.0
        %3049 = vmatpush1.msra.mxu0 %v2946
        %3050 = vmatprep.subr.mxu0 0.0
        %3051 = vmatpush1.msra.mxu0 %v2947
        %3052 = vmatprep.subr.mxu0 0.0
        %3053 = vmatpush1.msra.mxu0 %v2948
        %3054 = vmatprep.subr.mxu0 0.0
        %3055 = vmatpush1.msra.mxu0 %v2949
        %3056 = vmatprep.subr.mxu0 0.0
        %3057 = vmatpush1.msra.mxu0 %v2950
        %3058 = vmatprep.subr.mxu0 0.0
        %3059 = vmatpush1.msra.mxu0 %v2951
        %3060 = vmatprep.subr.mxu0 0.0
        %3061 = vmatpush1.msra.mxu0 0.0
        %3062 = vmatprep.subr.mxu0 0.0
        %3063 = vmatpush1.msra.mxu0 0.0
        %3064 = vmatprep.subr.mxu0 0.0
        %3065 = vmatpush1.msra.mxu0 0.0
        %3066 = vmatprep.subr.mxu0 0.0
        %3067 = vmatpush1.msra.mxu0 0.0
        %3068 = vmatprep.subr.mxu0 0.0
        %3069 = vmatpush1.msra.mxu0 0.0
        %3070 = vmatprep.subr.mxu0 0.0
        %3071 = vmatpush1.msra.mxu0 0.0
        %3072 = vmatprep.subr.mxu0 0.0
        %3073 = vmatpush1.msra.mxu0 0.0
        %3074 = vmatprep.subr.mxu0 0.0
        %3075 = vmatpush1.msra.mxu0 0.0
        %3076 = vmatprep.subr.mxu0 0.0
        %3077 = vmatpush1.msra.mxu0 0.0
        %3078 = vmatprep.subr.mxu0 0.0
        %3079 = vmatpush1.msra.mxu0 0.0
        %3080 = vmatprep.subr.mxu0 0.0
        %3081 = vmatpush1.msra.mxu0 0.0
        %3082 = vmatprep.subr.mxu0 0.0
        %3083 = vmatpush1.msra.mxu0 0.0
        %3084 = vmatprep.subr.mxu0 0.0
        %3085 = vmatpush1.msra.mxu0 0.0
        %3086 = vmatprep.subr.mxu0 0.0
        %3087 = vmatpush1.msra.mxu0 0.0
        %3088 = vmatprep.subr.mxu0 0.0
        %3089 = vmatpush1.msra.mxu0 0.0
        %3090 = vmatprep.subr.mxu0 0.0
        %3091 = vmatpush1.msra.mxu0 0.0
        %3092 = vmatprep.subr.mxu0 0.0
        %3093 = vmatpush1.msra.mxu0 0.0
        %3094 = vmatprep.subr.mxu0 0.0
        %3095 = vmatpush1.msra.mxu0 0.0
        %3096 = vmatprep.subr.mxu0 0.0
        %3097 = vmatpush1.msra.mxu0 0.0
        %3098 = vmatprep.subr.mxu0 0.0
        %3099 = vmatpush1.msra.mxu0 0.0
        %3100 = vmatprep.subr.mxu0 0.0
        %3101 = vmatpush1.msra.mxu0 0.0
        %3102 = vmatprep.subr.mxu0 0.0
        %3103 = vmatpush1.msra.mxu0 0.0
        %3104 = vmatprep.subr.mxu0 0.0
        %3105 = vmatpush1.msra.mxu0 0.0
        %3106 = vmatprep.subr.mxu0 0.0
        %3107 = vmatpush1.msra.mxu0 0.0
        %3108 = vmatprep.subr.mxu0 0.0
        %3109 = vmatpush1.msra.mxu0 0.0
        %3110 = vmatprep.subr.mxu0 0.0
        %3111 = vmatpush1.msra.mxu0 0.0
        %3112 = vmatprep.mubr.f32.mxu0 0.0
        %3113 = vmatmul.mubr.f32.gmra.mrb[0].mxu0 %v2953
        %v3114 = vpop.f32.mrb[0].mxu0
        %v3115 = vadd.f32 0.0, %v3114
        %v3116 = vpop.f32.mrb[0].mxu0
        %3117 = vmatprep.mubr.f32.mxu0 0.0
        %3118 = vmatmul.mubr.f32.gmra.mrb[0].mxu0 %v2956
        %v3119 = vpop.f32.mrb[0].mxu0
        %v3120 = vadd.f32 0.0, %v3119
        %v3121 = vpop.f32.mrb[0].mxu0
        %3122 = vmatprep.mubr.f32.mxu0 0.0
        %3123 = vmatmul.mubr.f32.gmra.mrb[0].mxu0 %v2959
        %v3124 = vpop.f32.mrb[0].mxu0
        %v3125 = vadd.f32 0.0, %v3124
        %v3126 = vpop.f32.mrb[0].mxu0
        %3127 = vmatprep.mubr.f32.mxu0 0.0
        %3128 = vmatmul.mubr.f32.gmra.mrb[0].mxu0 %v2962
        %v3129 = vpop.f32.mrb[0].mxu0
        %v3130 = vadd.f32 0.0, %v3129
        %v3131 = vpop.f32.mrb[0].mxu0
        %3132 = vmatprep.mubr.f32.mxu0 0.0
        %3133 = vmatmul.mubr.f32.gmra.mrb[0].mxu0 %v2965
        %v3134 = vpop.f32.mrb[0].mxu0
        %v3135 = vadd.f32 0.0, %v3134
        %v3136 = vpop.f32.mrb[0].mxu0
        %3137 = vmatprep.mubr.f32.mxu0 0.0
        %3138 = vmatmul.mubr.f32.gmra.mrb[0].mxu0 %v2968
        %v3139 = vpop.f32.mrb[0].mxu0
        %v3140 = vadd.f32 0.0, %v3139
        %v3141 = vpop.f32.mrb[0].mxu0
        %3142 = vmatprep.mubr.f32.mxu0 0.0
        %3143 = vmatmul.mubr.f32.gmra.mrb[0].mxu0 %v2971
        %v3144 = vpop.f32.mrb[0].mxu0
        %v3145 = vadd.f32 0.0, %v3144
        %v3146 = vpop.f32.mrb[0].mxu0
        %3147 = vmatprep.mubr.f32.mxu0 0.0
        %3148 = vmatmul.mubr.f32.gmra.mrb[0].mxu0 %v2974
        %v3149 = vpop.f32.mrb[0].mxu0
        %v3150 = vadd.f32 0.0, %v3149
        %v3151 = vpop.f32.mrb[0].mxu0
        %3152 = vmatprep.mubr.f32.mxu0 0.0
        %3153 = vmatmul.mubr.f32.gmra.mrb[0].mxu0 %v2977
        %v3154 = vpop.f32.mrb[0].mxu0
        %v3155 = vadd.f32 0.0, %v3154
        %v3156 = vpop.f32.mrb[0].mxu0
        %3157 = vmatprep.mubr.f32.mxu0 0.0
        %3158 = vmatmul.mubr.f32.gmra.mrb[0].mxu0 %v2980
        %v3159 = vpop.f32.mrb[0].mxu0
        %v3160 = vadd.f32 0.0, %v3159
        %v3161 = vpop.f32.mrb[0].mxu0
        %3162 = vmatprep.mubr.f32.mxu0 0.0
        %3163 = vmatmul.mubr.f32.gmra.mrb[0].mxu0 %v2983
        %v3164 = vpop.f32.mrb[0].mxu0
        %v3165 = vadd.f32 0.0, %v3164
        %v3166 = vpop.f32.mrb[0].mxu0
        %3167 = vmatprep.mubr.f32.mxu0 0.0
        %3168 = vmatmul.mubr.f32.gmra.mrb[0].mxu0 %v2986
        %v3169 = vpop.f32.mrb[0].mxu0
        %v3170 = vadd.f32 0.0, %v3169
        %v3171 = vpop.f32.mrb[0].mxu0
        %3172 = vmatprep.mubr.f32.mxu0 0.0
        %3173 = vmatmul.mubr.f32.gmra.mrb[0].mxu0 %v2989
        %v3174 = vpop.f32.mrb[0].mxu0
        %v3175 = vadd.f32 0.0, %v3174
        %v3176 = vpop.f32.mrb[0].mxu0
        %3177 = vmatprep.mubr.f32.mxu0 0.0
        %3178 = vmatmul.mubr.f32.gmra.mrb[0].mxu0 %v2992
        %v3179 = vpop.f32.mrb[0].mxu0
        %v3180 = vadd.f32 0.0, %v3179
        %v3181 = vpop.f32.mrb[0].mxu0
        %3182 = vmatprep.mubr.f32.mxu0 0.0
        %3183 = vmatmul.mubr.f32.gmra.mrb[0].mxu0 %v2995
        %v3184 = vpop.f32.mrb[0].mxu0
        %v3185 = vadd.f32 0.0, %v3184
        %v3186 = vpop.f32.mrb[0].mxu0
        %3187 = vmatprep.mubr.f32.mxu0 0.0
        %3188 = vmatmul.mubr.f32.gmra.mrb[0].mxu0 %v2998
        %v3189 = vpop.f32.mrb[0].mxu0
        %v3190 = vadd.f32 0.0, %v3189
        %v3191 = vpop.f32.mrb[0].mxu0
        %3192 = vmatprep.mubr.f32.mxu0 0.0
        %3193 = vmatmul.mubr.f32.gmra.mrb[0].mxu0 %v3001
        %v3194 = vpop.f32.mrb[0].mxu0
        %v3195 = vadd.f32 0.0, %v3194
        %v3196 = vpop.f32.mrb[0].mxu0
        %3197 = vmatprep.mubr.f32.mxu0 0.0
        %3198 = vmatmul.mubr.f32.gmra.mrb[0].mxu0 %v3004
        %v3199 = vpop.f32.mrb[0].mxu0
        %v3200 = vadd.f32 0.0, %v3199
        %v3201 = vpop.f32.mrb[0].mxu0
        %3202 = vmatprep.mubr.f32.mxu0 0.0
        %3203 = vmatmul.mubr.f32.gmra.mrb[0].mxu0 %v3007
        %v3204 = vpop.f32.mrb[0].mxu0
        %v3205 = vadd.f32 0.0, %v3204
        %v3206 = vpop.f32.mrb[0].mxu0
        %3207 = vmatprep.mubr.f32.mxu0 0.0
        %3208 = vmatmul.mubr.f32.gmra.mrb[0].mxu0 %v3010
        %v3209 = vpop.f32.mrb[0].mxu0
        %v3210 = vadd.f32 0.0, %v3209
        %v3211 = vpop.f32.mrb[0].mxu0
        %3212 = vmatprep.mubr.f32.mxu0 0.0
        %3213 = vmatmul.mubr.f32.gmra.mrb[0].mxu0 %v3013
        %v3214 = vpop.f32.mrb[0].mxu0
        %v3215 = vadd.f32 0.0, %v3214
        %v3216 = vpop.f32.mrb[0].mxu0
        %3217 = vmatprep.mubr.f32.mxu0 0.0
        %3218 = vmatmul.mubr.f32.gmra.mrb[0].mxu0 %v3016
        %v3219 = vpop.f32.mrb[0].mxu0
        %v3220 = vadd.f32 0.0, %v3219
        %v3221 = vpop.f32.mrb[0].mxu0
        %3222 = vmatprep.mubr.f32.mxu0 0.0
        %3223 = vmatmul.mubr.f32.gmra.mrb[0].mxu0 %v3019
        %v3224 = vpop.f32.mrb[0].mxu0
        %v3225 = vadd.f32 0.0, %v3224
        %v3226 = vpop.f32.mrb[0].mxu0
        %3227 = vmatprep.mubr.f32.mxu0 0.0
        %3228 = vmatmul.mubr.f32.gmra.mrb[0].mxu0 %v3022
        %v3229 = vpop.f32.mrb[0].mxu0
        %v3230 = vadd.f32 0.0, %v3229
        %v3231 = vpop.f32.mrb[0].mxu0
        %3232 = vmatprep.mubr.f32.mxu0 0.0
        %3233 = vmatmul.mubr.f32.gmra.mrb[0].mxu0 %v3025
        %v3234 = vpop.f32.mrb[0].mxu0
        %v3235 = vadd.f32 0.0, %v3234
        %v3236 = vpop.f32.mrb[0].mxu0
        %3237 = vmatprep.mubr.f32.mxu0 0.0
        %3238 = vmatmul.mubr.f32.gmra.mrb[0].mxu0 %v3028
        %v3239 = vpop.f32.mrb[0].mxu0
        %v3240 = vadd.f32 0.0, %v3239
        %v3241 = vpop.f32.mrb[0].mxu0
        %3242 = vmatprep.mubr.f32.mxu0 0.0
        %3243 = vmatmul.mubr.f32.gmra.mrb[0].mxu0 %v3031
        %v3244 = vpop.f32.mrb[0].mxu0
        %v3245 = vadd.f32 0.0, %v3244
        %v3246 = vpop.f32.mrb[0].mxu0
        %3247 = vmatprep.mubr.f32.mxu0 0.0
        %3248 = vmatmul.mubr.f32.gmra.mrb[0].mxu0 %v3034
        %v3249 = vpop.f32.mrb[0].mxu0
        %v3250 = vadd.f32 0.0, %v3249
        %v3251 = vpop.f32.mrb[0].mxu0
        %3252 = vmatprep.mubr.f32.mxu0 0.0
        %3253 = vmatmul.mubr.f32.gmra.mrb[0].mxu0 %v3037
        %v3254 = vpop.f32.mrb[0].mxu0
        %v3255 = vadd.f32 0.0, %v3254
        %v3256 = vpop.f32.mrb[0].mxu0
        %3257 = vmatprep.mubr.f32.mxu0 0.0
        %3258 = vmatmul.mubr.f32.gmra.mrb[0].mxu0 %v3040
        %v3259 = vpop.f32.mrb[0].mxu0
        %v3260 = vadd.f32 0.0, %v3259
        %v3261 = vpop.f32.mrb[0].mxu0
        %3262 = vmatprep.mubr.f32.mxu0 0.0
        %3263 = vmatmul.mubr.f32.gmra.mrb[0].mxu0 %v3043
        %v3264 = vpop.f32.mrb[0].mxu0
        %v3265 = vadd.f32 0.0, %v3264
        %v3266 = vpop.f32.mrb[0].mxu0
        %3267 = vmatprep.mubr.f32.mxu0 0.0
        %3268 = vmatmul.mubr.f32.gmra.mrb[0].mxu0 %v3046
        %v3269 = vpop.f32.mrb[0].mxu0
        %v3270 = vadd.f32 0.0, %v3269
        %v3271 = vpop.f32.mrb[0].mxu0
        %3272 = vdwg.mxu0
        %v3273 = vadd.f32 %v2785, %v3115
        %v3274 = vadd.f32 %v2786, %v3120
        %v3275 = vadd.f32 %v2787, %v3125
        %v3276 = vadd.f32 %v2788, %v3130
        %v3277 = vadd.f32 %v2789, %v3135
        %v3278 = vadd.f32 %v2790, %v3140
        %v3279 = vadd.f32 %v2791, %v3145
        %v3280 = vadd.f32 %v2792, %v3150
        %v3281 = vadd.f32 %v2793, %v3155
        %v3282 = vadd.f32 %v2794, %v3160
        %v3283 = vadd.f32 %v2795, %v3165
        %v3284 = vadd.f32 %v2796, %v3170
        %v3285 = vadd.f32 %v2797, %v3175
        %v3286 = vadd.f32 %v2798, %v3180
        %v3287 = vadd.f32 %v2799, %v3185
        %v3288 = vadd.f32 %v2800, %v3190
        %v3289 = vadd.f32 %v2801, %v3195
        %v3290 = vadd.f32 %v2802, %v3200
        %v3291 = vadd.f32 %v2803, %v3205
        %v3292 = vadd.f32 %v2804, %v3210
        %v3293 = vadd.f32 %v2805, %v3215
        %v3294 = vadd.f32 %v2806, %v3220
        %v3295 = vadd.f32 %v2807, %v3225
        %v3296 = vadd.f32 %v2808, %v3230
        %v3297 = vadd.f32 %v2809, %v3235
        %v3298 = vadd.f32 %v2810, %v3240
        %v3299 = vadd.f32 %v2811, %v3245
        %v3300 = vadd.f32 %v2812, %v3250
        %v3301 = vadd.f32 %v2813, %v3255
        %v3302 = vadd.f32 %v2814, %v3260
        %v3303 = vadd.f32 %v2815, %v3265
        %v3304 = vadd.f32 %v2816, %v3270
        %3305 = vrot.lane.b32.xlu0 %v145, 122
        %v3306 = vpop.permute.xlu0 %3305
        %3307 = vrot.lane.b32.xlu0 %v146, 122
        %v3308 = vpop.permute.xlu0 %3307
        %3309 = vrot.lane.b32.xlu0 %v147, 122
        %v3310 = vpop.permute.xlu0 %3309
        %3311 = vrot.lane.b32.xlu0 %v148, 122
        %v3312 = vpop.permute.xlu0 %3311
        %3313 = vrot.lane.b32.xlu0 %v149, 122
        %v3314 = vpop.permute.xlu0 %3313
        %3315 = vrot.lane.b32.xlu0 %v150, 122
        %v3316 = vpop.permute.xlu0 %3315
        %3317 = vrot.lane.b32.xlu0 %v151, 122
        %v3318 = vpop.permute.xlu0 %3317
        %3319 = vrot.lane.b32.xlu0 %v152, 122
        %v3320 = vpop.permute.xlu0 %3319
        %3321 = vrot.lane.b32.xlu0 %v153, 122
        %v3322 = vpop.permute.xlu0 %3321
        %3323 = vrot.lane.b32.xlu0 %v154, 122
        %v3324 = vpop.permute.xlu0 %3323
        %3325 = vrot.lane.b32.xlu0 %v155, 122
        %v3326 = vpop.permute.xlu0 %3325
        %3327 = vrot.lane.b32.xlu0 %v156, 122
        %v3328 = vpop.permute.xlu0 %3327
        %3329 = vrot.lane.b32.xlu0 %v157, 122
        %v3330 = vpop.permute.xlu0 %3329
        %3331 = vrot.lane.b32.xlu0 %v158, 122
        %v3332 = vpop.permute.xlu0 %3331
        %3333 = vrot.lane.b32.xlu0 %v159, 122
        %v3334 = vpop.permute.xlu0 %3333
        %3335 = vrot.lane.b32.xlu0 %v160, 122
        %v3336 = vpop.permute.xlu0 %3335
        %3337 = vrot.lane.b32.xlu0 %v161, 122
        %v3338 = vpop.permute.xlu0 %3337
        %3339 = vrot.lane.b32.xlu0 %v162, 122
        %v3340 = vpop.permute.xlu0 %3339
        %3341 = vrot.lane.b32.xlu0 %v163, 122
        %v3342 = vpop.permute.xlu0 %3341
        %3343 = vrot.lane.b32.xlu0 %v164, 122
        %v3344 = vpop.permute.xlu0 %3343
        %3345 = vrot.lane.b32.xlu0 %v165, 122
        %v3346 = vpop.permute.xlu0 %3345
        %3347 = vrot.lane.b32.xlu0 %v166, 122
        %v3348 = vpop.permute.xlu0 %3347
        %3349 = vrot.lane.b32.xlu0 %v167, 122
        %v3350 = vpop.permute.xlu0 %3349
        %3351 = vrot.lane.b32.xlu0 %v168, 122
        %v3352 = vpop.permute.xlu0 %3351
        %3353 = vrot.lane.b32.xlu0 %v169, 122
        %v3354 = vpop.permute.xlu0 %3353
        %3355 = vrot.lane.b32.xlu0 %v170, 122
        %v3356 = vpop.permute.xlu0 %3355
        %3357 = vrot.lane.b32.xlu0 %v171, 122
        %v3358 = vpop.permute.xlu0 %3357
        %3359 = vrot.lane.b32.xlu0 %v172, 122
        %v3360 = vpop.permute.xlu0 %3359
        %3361 = vrot.lane.b32.xlu0 %v173, 122
        %v3362 = vpop.permute.xlu0 %3361
        %3363 = vrot.lane.b32.xlu0 %v174, 122
        %v3364 = vpop.permute.xlu0 %3363
        %3365 = vrot.lane.b32.xlu0 %v175, 122
        %v3366 = vpop.permute.xlu0 %3365
        %3367 = vrot.lane.b32.xlu0 %v176, 122
        %v3368 = vpop.permute.xlu0 %3367
        %v3401 = vmul.f32 %v145, %v3306
        %v3402 = vmul.f32 %v146, %v3308
        %v3403 = vmul.f32 %v147, %v3310
        %v3404 = vmul.f32 %v148, %v3312
        %v3405 = vmul.f32 %v149, %v3314
        %v3406 = vmul.f32 %v150, %v3316
        %v3407 = vmul.f32 %v151, %v3318
        %v3408 = vmul.f32 %v152, %v3320
        %v3409 = vmul.f32 %v153, %v3322
        %v3410 = vmul.f32 %v154, %v3324
        %v3411 = vmul.f32 %v155, %v3326
        %v3412 = vmul.f32 %v156, %v3328
        %v3413 = vmul.f32 %v157, %v3330
        %v3414 = vmul.f32 %v158, %v3332
        %v3415 = vmul.f32 %v159, %v3334
        %v3416 = vmul.f32 %v160, %v3336
        %v3417 = vmul.f32 %v161, %v3338
        %v3418 = vmul.f32 %v162, %v3340
        %v3419 = vmul.f32 %v163, %v3342
        %v3420 = vmul.f32 %v164, %v3344
        %v3421 = vmul.f32 %v165, %v3346
        %v3422 = vmul.f32 %v166, %v3348
        %v3423 = vmul.f32 %v167, %v3350
        %v3424 = vmul.f32 %v168, %v3352
        %v3425 = vmul.f32 %v169, %v3354
        %v3426 = vmul.f32 %v170, %v3356
        %v3427 = vmul.f32 %v171, %v3358
        %v3428 = vmul.f32 %v172, %v3360
        %v3429 = vmul.f32 %v173, %v3362
        %v3430 = vmul.f32 %v174, %v3364
        %v3431 = vmul.f32 %v175, %v3366
        %v3432 = vmul.f32 %v176, %v3368
        %s3433 = scalar_lea.vmem %s1, 336
        %v3434 = vld [vmem:[%s3433] sm:$0xff]
        %v3435 = vld [vmem:[%s3433 + $0x8] sm:$0xff]
        %v3436 = vld [vmem:[%s3433 + $0x10] sm:$0xff]
        %v3437 = vld [vmem:[%s3433 + $0x18] sm:$0xff]
        %v3438 = vld [vmem:[%s3433 + $0x20] sm:$0xff]
        %v3439 = vld [vmem:[%s3433 + $0x28] sm:$0xff]
        %v3441 = vsel %vm222, %v3401, 0
        %v3444 = vsel %vm222, %v3402, 0
        %v3447 = vsel %vm222, %v3403, 0
        %v3450 = vsel %vm222, %v3404, 0
        %v3453 = vsel %vm222, %v3405, 0
        %v3456 = vsel %vm222, %v3406, 0
        %v3459 = vsel %vm222, %v3407, 0
        %v3462 = vsel %vm222, %v3408, 0
        %v3465 = vsel %vm222, %v3409, 0
        %v3468 = vsel %vm222, %v3410, 0
        %v3471 = vsel %vm222, %v3411, 0
        %v3474 = vsel %vm222, %v3412, 0
        %v3477 = vsel %vm222, %v3413, 0
        %v3480 = vsel %vm222, %v3414, 0
        %v3483 = vsel %vm222, %v3415, 0
        %v3486 = vsel %vm222, %v3416, 0
        %v3489 = vsel %vm222, %v3417, 0
        %v3492 = vsel %vm222, %v3418, 0
        %v3495 = vsel %vm222, %v3419, 0
        %v3498 = vsel %vm222, %v3420, 0
        %v3501 = vsel %vm222, %v3421, 0
        %v3504 = vsel %vm222, %v3422, 0
        %v3507 = vsel %vm222, %v3423, 0
        %v3510 = vsel %vm222, %v3424, 0
        %v3513 = vsel %vm222, %v3425, 0
        %v3516 = vsel %vm222, %v3426, 0
        %v3519 = vsel %vm222, %v3427, 0
        %v3522 = vsel %vm222, %v3428, 0
        %v3525 = vsel %vm222, %v3429, 0
        %v3528 = vsel %vm222, %v3430, 0
        %v3531 = vsel %vm222, %v3431, 0
        %v3534 = vsel %vm222, %v3432, 0
        %3536 = vmatprep.subr.mxu0 0.0
        %3537 = vmatpush1.msra.mxu0 %v3434
        %3538 = vmatprep.subr.mxu0 0.0
        %3539 = vmatpush1.msra.mxu0 %v3435
        %3540 = vmatprep.subr.mxu0 0.0
        %3541 = vmatpush1.msra.mxu0 %v3436
        %3542 = vmatprep.subr.mxu0 0.0
        %3543 = vmatpush1.msra.mxu0 %v3437
        %3544 = vmatprep.subr.mxu0 0.0
        %3545 = vmatpush1.msra.mxu0 %v3438
        %3546 = vmatprep.subr.mxu0 0.0
        %3547 = vmatpush1.msra.mxu0 %v3439
        %3548 = vmatprep.subr.mxu0 0.0
        %3549 = vmatpush1.msra.mxu0 0.0
        %3550 = vmatprep.subr.mxu0 0.0
        %3551 = vmatpush1.msra.mxu0 0.0
        %3552 = vmatprep.subr.mxu0 0.0
        %3553 = vmatpush1.msra.mxu0 0.0
        %3554 = vmatprep.subr.mxu0 0.0
        %3555 = vmatpush1.msra.mxu0 0.0
        %3556 = vmatprep.subr.mxu0 0.0
        %3557 = vmatpush1.msra.mxu0 0.0
        %3558 = vmatprep.subr.mxu0 0.0
        %3559 = vmatpush1.msra.mxu0 0.0
        %3560 = vmatprep.subr.mxu0 0.0
        %3561 = vmatpush1.msra.mxu0 0.0
        %3562 = vmatprep.subr.mxu0 0.0
        %3563 = vmatpush1.msra.mxu0 0.0
        %3564 = vmatprep.subr.mxu0 0.0
        %3565 = vmatpush1.msra.mxu0 0.0
        %3566 = vmatprep.subr.mxu0 0.0
        %3567 = vmatpush1.msra.mxu0 0.0
        %3568 = vmatprep.subr.mxu0 0.0
        %3569 = vmatpush1.msra.mxu0 0.0
        %3570 = vmatprep.subr.mxu0 0.0
        %3571 = vmatpush1.msra.mxu0 0.0
        %3572 = vmatprep.subr.mxu0 0.0
        %3573 = vmatpush1.msra.mxu0 0.0
        %3574 = vmatprep.subr.mxu0 0.0
        %3575 = vmatpush1.msra.mxu0 0.0
        %3576 = vmatprep.subr.mxu0 0.0
        %3577 = vmatpush1.msra.mxu0 0.0
        %3578 = vmatprep.subr.mxu0 0.0
        %3579 = vmatpush1.msra.mxu0 0.0
        %3580 = vmatprep.subr.mxu0 0.0
        %3581 = vmatpush1.msra.mxu0 0.0
        %3582 = vmatprep.subr.mxu0 0.0
        %3583 = vmatpush1.msra.mxu0 0.0
        %3584 = vmatprep.subr.mxu0 0.0
        %3585 = vmatpush1.msra.mxu0 0.0
        %3586 = vmatprep.subr.mxu0 0.0
        %3587 = vmatpush1.msra.mxu0 0.0
        %3588 = vmatprep.subr.mxu0 0.0
        %3589 = vmatpush1.msra.mxu0 0.0
        %3590 = vmatprep.subr.mxu0 0.0
        %3591 = vmatpush1.msra.mxu0 0.0
        %3592 = vmatprep.subr.mxu0 0.0
        %3593 = vmatpush1.msra.mxu0 0.0
        %3594 = vmatprep.subr.mxu0 0.0
        %3595 = vmatpush1.msra.mxu0 0.0
        %3596 = vmatprep.subr.mxu0 0.0
        %3597 = vmatpush1.msra.mxu0 0.0
        %3598 = vmatprep.subr.mxu0 0.0
        %3599 = vmatpush1.msra.mxu0 0.0
        %3600 = vmatprep.mubr.f32.mxu0 0.0
        %3601 = vmatmul.mubr.f32.gmra.mrb[0].mxu0 %v3441
        %v3602 = vpop.f32.mrb[0].mxu0
        %v3603 = vadd.f32 0.0, %v3602
        %v3604 = vpop.f32.mrb[0].mxu0
        %3605 = vmatprep.mubr.f32.mxu0 0.0
        %3606 = vmatmul.mubr.f32.gmra.mrb[0].mxu0 %v3444
        %v3607 = vpop.f32.mrb[0].mxu0
        %v3608 = vadd.f32 0.0, %v3607
        %v3609 = vpop.f32.mrb[0].mxu0
        %3610 = vmatprep.mubr.f32.mxu0 0.0
        %3611 = vmatmul.mubr.f32.gmra.mrb[0].mxu0 %v3447
        %v3612 = vpop.f32.mrb[0].mxu0
        %v3613 = vadd.f32 0.0, %v3612
        %v3614 = vpop.f32.mrb[0].mxu0
        %3615 = vmatprep.mubr.f32.mxu0 0.0
        %3616 = vmatmul.mubr.f32.gmra.mrb[0].mxu0 %v3450
        %v3617 = vpop.f32.mrb[0].mxu0
        %v3618 = vadd.f32 0.0, %v3617
        %v3619 = vpop.f32.mrb[0].mxu0
        %3620 = vmatprep.mubr.f32.mxu0 0.0
        %3621 = vmatmul.mubr.f32.gmra.mrb[0].mxu0 %v3453
        %v3622 = vpop.f32.mrb[0].mxu0
        %v3623 = vadd.f32 0.0, %v3622
        %v3624 = vpop.f32.mrb[0].mxu0
        %3625 = vmatprep.mubr.f32.mxu0 0.0
        %3626 = vmatmul.mubr.f32.gmra.mrb[0].mxu0 %v3456
        %v3627 = vpop.f32.mrb[0].mxu0
        %v3628 = vadd.f32 0.0, %v3627
        %v3629 = vpop.f32.mrb[0].mxu0
        %3630 = vmatprep.mubr.f32.mxu0 0.0
        %3631 = vmatmul.mubr.f32.gmra.mrb[0].mxu0 %v3459
        %v3632 = vpop.f32.mrb[0].mxu0
        %v3633 = vadd.f32 0.0, %v3632
        %v3634 = vpop.f32.mrb[0].mxu0
        %3635 = vmatprep.mubr.f32.mxu0 0.0
        %3636 = vmatmul.mubr.f32.gmra.mrb[0].mxu0 %v3462
        %v3637 = vpop.f32.mrb[0].mxu0
        %v3638 = vadd.f32 0.0, %v3637
        %v3639 = vpop.f32.mrb[0].mxu0
        %3640 = vmatprep.mubr.f32.mxu0 0.0
        %3641 = vmatmul.mubr.f32.gmra.mrb[0].mxu0 %v3465
        %v3642 = vpop.f32.mrb[0].mxu0
        %v3643 = vadd.f32 0.0, %v3642
        %v3644 = vpop.f32.mrb[0].mxu0
        %3645 = vmatprep.mubr.f32.mxu0 0.0
        %3646 = vmatmul.mubr.f32.gmra.mrb[0].mxu0 %v3468
        %v3647 = vpop.f32.mrb[0].mxu0
        %v3648 = vadd.f32 0.0, %v3647
        %v3649 = vpop.f32.mrb[0].mxu0
        %3650 = vmatprep.mubr.f32.mxu0 0.0
        %3651 = vmatmul.mubr.f32.gmra.mrb[0].mxu0 %v3471
        %v3652 = vpop.f32.mrb[0].mxu0
        %v3653 = vadd.f32 0.0, %v3652
        %v3654 = vpop.f32.mrb[0].mxu0
        %3655 = vmatprep.mubr.f32.mxu0 0.0
        %3656 = vmatmul.mubr.f32.gmra.mrb[0].mxu0 %v3474
        %v3657 = vpop.f32.mrb[0].mxu0
        %v3658 = vadd.f32 0.0, %v3657
        %v3659 = vpop.f32.mrb[0].mxu0
        %3660 = vmatprep.mubr.f32.mxu0 0.0
        %3661 = vmatmul.mubr.f32.gmra.mrb[0].mxu0 %v3477
        %v3662 = vpop.f32.mrb[0].mxu0
        %v3663 = vadd.f32 0.0, %v3662
        %v3664 = vpop.f32.mrb[0].mxu0
        %3665 = vmatprep.mubr.f32.mxu0 0.0
        %3666 = vmatmul.mubr.f32.gmra.mrb[0].mxu0 %v3480
        %v3667 = vpop.f32.mrb[0].mxu0
        %v3668 = vadd.f32 0.0, %v3667
        %v3669 = vpop.f32.mrb[0].mxu0
        %3670 = vmatprep.mubr.f32.mxu0 0.0
        %3671 = vmatmul.mubr.f32.gmra.mrb[0].mxu0 %v3483
        %v3672 = vpop.f32.mrb[0].mxu0
        %v3673 = vadd.f32 0.0, %v3672
        %v3674 = vpop.f32.mrb[0].mxu0
        %3675 = vmatprep.mubr.f32.mxu0 0.0
        %3676 = vmatmul.mubr.f32.gmra.mrb[0].mxu0 %v3486
        %v3677 = vpop.f32.mrb[0].mxu0
        %v3678 = vadd.f32 0.0, %v3677
        %v3679 = vpop.f32.mrb[0].mxu0
        %3680 = vmatprep.mubr.f32.mxu0 0.0
        %3681 = vmatmul.mubr.f32.gmra.mrb[0].mxu0 %v3489
        %v3682 = vpop.f32.mrb[0].mxu0
        %v3683 = vadd.f32 0.0, %v3682
        %v3684 = vpop.f32.mrb[0].mxu0
        %3685 = vmatprep.mubr.f32.mxu0 0.0
        %3686 = vmatmul.mubr.f32.gmra.mrb[0].mxu0 %v3492
        %v3687 = vpop.f32.mrb[0].mxu0
        %v3688 = vadd.f32 0.0, %v3687
        %v3689 = vpop.f32.mrb[0].mxu0
        %3690 = vmatprep.mubr.f32.mxu0 0.0
        %3691 = vmatmul.mubr.f32.gmra.mrb[0].mxu0 %v3495
        %v3692 = vpop.f32.mrb[0].mxu0
        %v3693 = vadd.f32 0.0, %v3692
        %v3694 = vpop.f32.mrb[0].mxu0
        %3695 = vmatprep.mubr.f32.mxu0 0.0
        %3696 = vmatmul.mubr.f32.gmra.mrb[0].mxu0 %v3498
        %v3697 = vpop.f32.mrb[0].mxu0
        %v3698 = vadd.f32 0.0, %v3697
        %v3699 = vpop.f32.mrb[0].mxu0
        %3700 = vmatprep.mubr.f32.mxu0 0.0
        %3701 = vmatmul.mubr.f32.gmra.mrb[0].mxu0 %v3501
        %v3702 = vpop.f32.mrb[0].mxu0
        %v3703 = vadd.f32 0.0, %v3702
        %v3704 = vpop.f32.mrb[0].mxu0
        %3705 = vmatprep.mubr.f32.mxu0 0.0
        %3706 = vmatmul.mubr.f32.gmra.mrb[0].mxu0 %v3504
        %v3707 = vpop.f32.mrb[0].mxu0
        %v3708 = vadd.f32 0.0, %v3707
        %v3709 = vpop.f32.mrb[0].mxu0
        %3710 = vmatprep.mubr.f32.mxu0 0.0
        %3711 = vmatmul.mubr.f32.gmra.mrb[0].mxu0 %v3507
        %v3712 = vpop.f32.mrb[0].mxu0
        %v3713 = vadd.f32 0.0, %v3712
        %v3714 = vpop.f32.mrb[0].mxu0
        %3715 = vmatprep.mubr.f32.mxu0 0.0
        %3716 = vmatmul.mubr.f32.gmra.mrb[0].mxu0 %v3510
        %v3717 = vpop.f32.mrb[0].mxu0
        %v3718 = vadd.f32 0.0, %v3717
        %v3719 = vpop.f32.mrb[0].mxu0
        %3720 = vmatprep.mubr.f32.mxu0 0.0
        %3721 = vmatmul.mubr.f32.gmra.mrb[0].mxu0 %v3513
        %v3722 = vpop.f32.mrb[0].mxu0
        %v3723 = vadd.f32 0.0, %v3722
        %v3724 = vpop.f32.mrb[0].mxu0
        %3725 = vmatprep.mubr.f32.mxu0 0.0
        %3726 = vmatmul.mubr.f32.gmra.mrb[0].mxu0 %v3516
        %v3727 = vpop.f32.mrb[0].mxu0
        %v3728 = vadd.f32 0.0, %v3727
        %v3729 = vpop.f32.mrb[0].mxu0
        %3730 = vmatprep.mubr.f32.mxu0 0.0
        %3731 = vmatmul.mubr.f32.gmra.mrb[0].mxu0 %v3519
        %v3732 = vpop.f32.mrb[0].mxu0
        %v3733 = vadd.f32 0.0, %v3732
        %v3734 = vpop.f32.mrb[0].mxu0
        %3735 = vmatprep.mubr.f32.mxu0 0.0
        %3736 = vmatmul.mubr.f32.gmra.mrb[0].mxu0 %v3522
        %v3737 = vpop.f32.mrb[0].mxu0
        %v3738 = vadd.f32 0.0, %v3737
        %v3739 = vpop.f32.mrb[0].mxu0
        %3740 = vmatprep.mubr.f32.mxu0 0.0
        %3741 = vmatmul.mubr.f32.gmra.mrb[0].mxu0 %v3525
        %v3742 = vpop.f32.mrb[0].mxu0
        %v3743 = vadd.f32 0.0, %v3742
        %v3744 = vpop.f32.mrb[0].mxu0
        %3745 = vmatprep.mubr.f32.mxu0 0.0
        %3746 = vmatmul.mubr.f32.gmra.mrb[0].mxu0 %v3528
        %v3747 = vpop.f32.mrb[0].mxu0
        %v3748 = vadd.f32 0.0, %v3747
        %v3749 = vpop.f32.mrb[0].mxu0
        %3750 = vmatprep.mubr.f32.mxu0 0.0
        %3751 = vmatmul.mubr.f32.gmra.mrb[0].mxu0 %v3531
        %v3752 = vpop.f32.mrb[0].mxu0
        %v3753 = vadd.f32 0.0, %v3752
        %v3754 = vpop.f32.mrb[0].mxu0
        %3755 = vmatprep.mubr.f32.mxu0 0.0
        %3756 = vmatmul.mubr.f32.gmra.mrb[0].mxu0 %v3534
        %v3757 = vpop.f32.mrb[0].mxu0
        %v3758 = vadd.f32 0.0, %v3757
        %v3759 = vpop.f32.mrb[0].mxu0
        %3760 = vdwg.mxu0
        %v3761 = vadd.f32 %v3273, %v3603
        %v3762 = vadd.f32 %v3274, %v3608
        %v3763 = vadd.f32 %v3275, %v3613
        %v3764 = vadd.f32 %v3276, %v3618
        %v3765 = vadd.f32 %v3277, %v3623
        %v3766 = vadd.f32 %v3278, %v3628
        %v3767 = vadd.f32 %v3279, %v3633
        %v3768 = vadd.f32 %v3280, %v3638
        %v3769 = vadd.f32 %v3281, %v3643
        %v3770 = vadd.f32 %v3282, %v3648
        %v3771 = vadd.f32 %v3283, %v3653
        %v3772 = vadd.f32 %v3284, %v3658
        %v3773 = vadd.f32 %v3285, %v3663
        %v3774 = vadd.f32 %v3286, %v3668
        %v3775 = vadd.f32 %v3287, %v3673
        %v3776 = vadd.f32 %v3288, %v3678
        %v3777 = vadd.f32 %v3289, %v3683
        %v3778 = vadd.f32 %v3290, %v3688
        %v3779 = vadd.f32 %v3291, %v3693
        %v3780 = vadd.f32 %v3292, %v3698
        %v3781 = vadd.f32 %v3293, %v3703
        %v3782 = vadd.f32 %v3294, %v3708
        %v3783 = vadd.f32 %v3295, %v3713
        %v3784 = vadd.f32 %v3296, %v3718
        %v3785 = vadd.f32 %v3297, %v3723
        %v3786 = vadd.f32 %v3298, %v3728
        %v3787 = vadd.f32 %v3299, %v3733
        %v3788 = vadd.f32 %v3300, %v3738
        %v3789 = vadd.f32 %v3301, %v3743
        %v3790 = vadd.f32 %v3302, %v3748
        %v3791 = vadd.f32 %v3303, %v3753
        %v3792 = vadd.f32 %v3304, %v3758
        %3793 = vrot.lane.b32.xlu0 %v145, 121
        %v3794 = vpop.permute.xlu0 %3793
        %3795 = vrot.lane.b32.xlu0 %v146, 121
        %v3796 = vpop.permute.xlu0 %3795
        %3797 = vrot.lane.b32.xlu0 %v147, 121
        %v3798 = vpop.permute.xlu0 %3797
        %3799 = vrot.lane.b32.xlu0 %v148, 121
        %v3800 = vpop.permute.xlu0 %3799
        %3801 = vrot.lane.b32.xlu0 %v149, 121
        %v3802 = vpop.permute.xlu0 %3801
        %3803 = vrot.lane.b32.xlu0 %v150, 121
        %v3804 = vpop.permute.xlu0 %3803
        %3805 = vrot.lane.b32.xlu0 %v151, 121
        %v3806 = vpop.permute.xlu0 %3805
        %3807 = vrot.lane.b32.xlu0 %v152, 121
        %v3808 = vpop.permute.xlu0 %3807
        %3809 = vrot.lane.b32.xlu0 %v153, 121
        %v3810 = vpop.permute.xlu0 %3809
        %3811 = vrot.lane.b32.xlu0 %v154, 121
        %v3812 = vpop.permute.xlu0 %3811
        %3813 = vrot.lane.b32.xlu0 %v155, 121
        %v3814 = vpop.permute.xlu0 %3813
        %3815 = vrot.lane.b32.xlu0 %v156, 121
        %v3816 = vpop.permute.xlu0 %3815
        %3817 = vrot.lane.b32.xlu0 %v157, 121
        %v3818 = vpop.permute.xlu0 %3817
        %3819 = vrot.lane.b32.xlu0 %v158, 121
        %v3820 = vpop.permute.xlu0 %3819
        %3821 = vrot.lane.b32.xlu0 %v159, 121
        %v3822 = vpop.permute.xlu0 %3821
        %3823 = vrot.lane.b32.xlu0 %v160, 121
        %v3824 = vpop.permute.xlu0 %3823
        %3825 = vrot.lane.b32.xlu0 %v161, 121
        %v3826 = vpop.permute.xlu0 %3825
        %3827 = vrot.lane.b32.xlu0 %v162, 121
        %v3828 = vpop.permute.xlu0 %3827
        %3829 = vrot.lane.b32.xlu0 %v163, 121
        %v3830 = vpop.permute.xlu0 %3829
        %3831 = vrot.lane.b32.xlu0 %v164, 121
        %v3832 = vpop.permute.xlu0 %3831
        %3833 = vrot.lane.b32.xlu0 %v165, 121
        %v3834 = vpop.permute.xlu0 %3833
        %3835 = vrot.lane.b32.xlu0 %v166, 121
        %v3836 = vpop.permute.xlu0 %3835
        %3837 = vrot.lane.b32.xlu0 %v167, 121
        %v3838 = vpop.permute.xlu0 %3837
        %3839 = vrot.lane.b32.xlu0 %v168, 121
        %v3840 = vpop.permute.xlu0 %3839
        %3841 = vrot.lane.b32.xlu0 %v169, 121
        %v3842 = vpop.permute.xlu0 %3841
        %3843 = vrot.lane.b32.xlu0 %v170, 121
        %v3844 = vpop.permute.xlu0 %3843
        %3845 = vrot.lane.b32.xlu0 %v171, 121
        %v3846 = vpop.permute.xlu0 %3845
        %3847 = vrot.lane.b32.xlu0 %v172, 121
        %v3848 = vpop.permute.xlu0 %3847
        %3849 = vrot.lane.b32.xlu0 %v173, 121
        %v3850 = vpop.permute.xlu0 %3849
        %3851 = vrot.lane.b32.xlu0 %v174, 121
        %v3852 = vpop.permute.xlu0 %3851
        %3853 = vrot.lane.b32.xlu0 %v175, 121
        %v3854 = vpop.permute.xlu0 %3853
        %3855 = vrot.lane.b32.xlu0 %v176, 121
        %v3856 = vpop.permute.xlu0 %3855
        %v3889 = vmul.f32 %v145, %v3794
        %v3890 = vmul.f32 %v146, %v3796
        %v3891 = vmul.f32 %v147, %v3798
        %v3892 = vmul.f32 %v148, %v3800
        %v3893 = vmul.f32 %v149, %v3802
        %v3894 = vmul.f32 %v150, %v3804
        %v3895 = vmul.f32 %v151, %v3806
        %v3896 = vmul.f32 %v152, %v3808
        %v3897 = vmul.f32 %v153, %v3810
        %v3898 = vmul.f32 %v154, %v3812
        %v3899 = vmul.f32 %v155, %v3814
        %v3900 = vmul.f32 %v156, %v3816
        %v3901 = vmul.f32 %v157, %v3818
        %v3902 = vmul.f32 %v158, %v3820
        %v3903 = vmul.f32 %v159, %v3822
        %v3904 = vmul.f32 %v160, %v3824
        %v3905 = vmul.f32 %v161, %v3826
        %v3906 = vmul.f32 %v162, %v3828
        %v3907 = vmul.f32 %v163, %v3830
        %v3908 = vmul.f32 %v164, %v3832
        %v3909 = vmul.f32 %v165, %v3834
        %v3910 = vmul.f32 %v166, %v3836
        %v3911 = vmul.f32 %v167, %v3838
        %v3912 = vmul.f32 %v168, %v3840
        %v3913 = vmul.f32 %v169, %v3842
        %v3914 = vmul.f32 %v170, %v3844
        %v3915 = vmul.f32 %v171, %v3846
        %v3916 = vmul.f32 %v172, %v3848
        %v3917 = vmul.f32 %v173, %v3850
        %v3918 = vmul.f32 %v174, %v3852
        %v3919 = vmul.f32 %v175, %v3854
        %v3920 = vmul.f32 %v176, %v3856
        %s3921 = scalar_lea.vmem %s1, 384
        %v3922 = vld [vmem:[%s3921] sm:$0xff]
        %v3923 = vld [vmem:[%s3921 + $0x8] sm:$0xff]
        %v3924 = vld [vmem:[%s3921 + $0x10] sm:$0xff]
        %v3925 = vld [vmem:[%s3921 + $0x18] sm:$0xff]
        %v3926 = vld [vmem:[%s3921 + $0x20] sm:$0xff]
        %v3927 = vld [vmem:[%s3921 + $0x28] sm:$0xff]
        %v3929 = vsel %vm222, %v3889, 0
        %v3932 = vsel %vm222, %v3890, 0
        %v3935 = vsel %vm222, %v3891, 0
        %v3938 = vsel %vm222, %v3892, 0
        %v3941 = vsel %vm222, %v3893, 0
        %v3944 = vsel %vm222, %v3894, 0
        %v3947 = vsel %vm222, %v3895, 0
        %v3950 = vsel %vm222, %v3896, 0
        %v3953 = vsel %vm222, %v3897, 0
        %v3956 = vsel %vm222, %v3898, 0
        %v3959 = vsel %vm222, %v3899, 0
        %v3962 = vsel %vm222, %v3900, 0
        %v3965 = vsel %vm222, %v3901, 0
        %v3968 = vsel %vm222, %v3902, 0
        %v3971 = vsel %vm222, %v3903, 0
        %v3974 = vsel %vm222, %v3904, 0
        %v3977 = vsel %vm222, %v3905, 0
        %v3980 = vsel %vm222, %v3906, 0
        %v3983 = vsel %vm222, %v3907, 0
        %v3986 = vsel %vm222, %v3908, 0
        %v3989 = vsel %vm222, %v3909, 0
        %v3992 = vsel %vm222, %v3910, 0
        %v3995 = vsel %vm222, %v3911, 0
        %v3998 = vsel %vm222, %v3912, 0
        %v4001 = vsel %vm222, %v3913, 0
        %v4004 = vsel %vm222, %v3914, 0
        %v4007 = vsel %vm222, %v3915, 0
        %v4010 = vsel %vm222, %v3916, 0
        %v4013 = vsel %vm222, %v3917, 0
        %v4016 = vsel %vm222, %v3918, 0
        %v4019 = vsel %vm222, %v3919, 0
        %v4022 = vsel %vm222, %v3920, 0
        %4024 = vmatprep.subr.mxu0 0.0
        %4025 = vmatpush1.msra.mxu0 %v3922
        %4026 = vmatprep.subr.mxu0 0.0
        %4027 = vmatpush1.msra.mxu0 %v3923
        %4028 = vmatprep.subr.mxu0 0.0
        %4029 = vmatpush1.msra.mxu0 %v3924
        %4030 = vmatprep.subr.mxu0 0.0
        %4031 = vmatpush1.msra.mxu0 %v3925
        %4032 = vmatprep.subr.mxu0 0.0
        %4033 = vmatpush1.msra.mxu0 %v3926
        %4034 = vmatprep.subr.mxu0 0.0
        %4035 = vmatpush1.msra.mxu0 %v3927
        %4036 = vmatprep.subr.mxu0 0.0
        %4037 = vmatpush1.msra.mxu0 0.0
        %4038 = vmatprep.subr.mxu0 0.0
        %4039 = vmatpush1.msra.mxu0 0.0
        %4040 = vmatprep.subr.mxu0 0.0
        %4041 = vmatpush1.msra.mxu0 0.0
        %4042 = vmatprep.subr.mxu0 0.0
        %4043 = vmatpush1.msra.mxu0 0.0
        %4044 = vmatprep.subr.mxu0 0.0
        %4045 = vmatpush1.msra.mxu0 0.0
        %4046 = vmatprep.subr.mxu0 0.0
        %4047 = vmatpush1.msra.mxu0 0.0
        %4048 = vmatprep.subr.mxu0 0.0
        %4049 = vmatpush1.msra.mxu0 0.0
        %4050 = vmatprep.subr.mxu0 0.0
        %4051 = vmatpush1.msra.mxu0 0.0
        %4052 = vmatprep.subr.mxu0 0.0
        %4053 = vmatpush1.msra.mxu0 0.0
        %4054 = vmatprep.subr.mxu0 0.0
        %4055 = vmatpush1.msra.mxu0 0.0
        %4056 = vmatprep.subr.mxu0 0.0
        %4057 = vmatpush1.msra.mxu0 0.0
        %4058 = vmatprep.subr.mxu0 0.0
        %4059 = vmatpush1.msra.mxu0 0.0
        %4060 = vmatprep.subr.mxu0 0.0
        %4061 = vmatpush1.msra.mxu0 0.0
        %4062 = vmatprep.subr.mxu0 0.0
        %4063 = vmatpush1.msra.mxu0 0.0
        %4064 = vmatprep.subr.mxu0 0.0
        %4065 = vmatpush1.msra.mxu0 0.0
        %4066 = vmatprep.subr.mxu0 0.0
        %4067 = vmatpush1.msra.mxu0 0.0
        %4068 = vmatprep.subr.mxu0 0.0
        %4069 = vmatpush1.msra.mxu0 0.0
        %4070 = vmatprep.subr.mxu0 0.0
        %4071 = vmatpush1.msra.mxu0 0.0
        %4072 = vmatprep.subr.mxu0 0.0
        %4073 = vmatpush1.msra.mxu0 0.0
        %4074 = vmatprep.subr.mxu0 0.0
        %4075 = vmatpush1.msra.mxu0 0.0
        %4076 = vmatprep.subr.mxu0 0.0
        %4077 = vmatpush1.msra.mxu0 0.0
        %4078 = vmatprep.subr.mxu0 0.0
        %4079 = vmatpush1.msra.mxu0 0.0
        %4080 = vmatprep.subr.mxu0 0.0
        %4081 = vmatpush1.msra.mxu0 0.0
        %4082 = vmatprep.subr.mxu0 0.0
        %4083 = vmatpush1.msra.mxu0 0.0
        %4084 = vmatprep.subr.mxu0 0.0
        %4085 = vmatpush1.msra.mxu0 0.0
        %4086 = vmatprep.subr.mxu0 0.0
        %4087 = vmatpush1.msra.mxu0 0.0
        %4088 = vmatprep.mubr.f32.mxu0 0.0
        %4089 = vmatmul.mubr.f32.gmra.mrb[0].mxu0 %v3929
        %v4090 = vpop.f32.mrb[0].mxu0
        %v4091 = vadd.f32 0.0, %v4090
        %v4092 = vpop.f32.mrb[0].mxu0
        %4093 = vmatprep.mubr.f32.mxu0 0.0
        %4094 = vmatmul.mubr.f32.gmra.mrb[0].mxu0 %v3932
        %v4095 = vpop.f32.mrb[0].mxu0
        %v4096 = vadd.f32 0.0, %v4095
        %v4097 = vpop.f32.mrb[0].mxu0
        %4098 = vmatprep.mubr.f32.mxu0 0.0
        %4099 = vmatmul.mubr.f32.gmra.mrb[0].mxu0 %v3935
        %v4100 = vpop.f32.mrb[0].mxu0
        %v4101 = vadd.f32 0.0, %v4100
        %v4102 = vpop.f32.mrb[0].mxu0
        %4103 = vmatprep.mubr.f32.mxu0 0.0
        %4104 = vmatmul.mubr.f32.gmra.mrb[0].mxu0 %v3938
        %v4105 = vpop.f32.mrb[0].mxu0
        %v4106 = vadd.f32 0.0, %v4105
        %v4107 = vpop.f32.mrb[0].mxu0
        %4108 = vmatprep.mubr.f32.mxu0 0.0
        %4109 = vmatmul.mubr.f32.gmra.mrb[0].mxu0 %v3941
        %v4110 = vpop.f32.mrb[0].mxu0
        %v4111 = vadd.f32 0.0, %v4110
        %v4112 = vpop.f32.mrb[0].mxu0
        %4113 = vmatprep.mubr.f32.mxu0 0.0
        %4114 = vmatmul.mubr.f32.gmra.mrb[0].mxu0 %v3944
        %v4115 = vpop.f32.mrb[0].mxu0
        %v4116 = vadd.f32 0.0, %v4115
        %v4117 = vpop.f32.mrb[0].mxu0
        %4118 = vmatprep.mubr.f32.mxu0 0.0
        %4119 = vmatmul.mubr.f32.gmra.mrb[0].mxu0 %v3947
        %v4120 = vpop.f32.mrb[0].mxu0
        %v4121 = vadd.f32 0.0, %v4120
        %v4122 = vpop.f32.mrb[0].mxu0
        %4123 = vmatprep.mubr.f32.mxu0 0.0
        %4124 = vmatmul.mubr.f32.gmra.mrb[0].mxu0 %v3950
        %v4125 = vpop.f32.mrb[0].mxu0
        %v4126 = vadd.f32 0.0, %v4125
        %v4127 = vpop.f32.mrb[0].mxu0
        %4128 = vmatprep.mubr.f32.mxu0 0.0
        %4129 = vmatmul.mubr.f32.gmra.mrb[0].mxu0 %v3953
        %v4130 = vpop.f32.mrb[0].mxu0
        %v4131 = vadd.f32 0.0, %v4130
        %v4132 = vpop.f32.mrb[0].mxu0
        %4133 = vmatprep.mubr.f32.mxu0 0.0
        %4134 = vmatmul.mubr.f32.gmra.mrb[0].mxu0 %v3956
        %v4135 = vpop.f32.mrb[0].mxu0
        %v4136 = vadd.f32 0.0, %v4135
        %v4137 = vpop.f32.mrb[0].mxu0
        %4138 = vmatprep.mubr.f32.mxu0 0.0
        %4139 = vmatmul.mubr.f32.gmra.mrb[0].mxu0 %v3959
        %v4140 = vpop.f32.mrb[0].mxu0
        %v4141 = vadd.f32 0.0, %v4140
        %v4142 = vpop.f32.mrb[0].mxu0
        %4143 = vmatprep.mubr.f32.mxu0 0.0
        %4144 = vmatmul.mubr.f32.gmra.mrb[0].mxu0 %v3962
        %v4145 = vpop.f32.mrb[0].mxu0
        %v4146 = vadd.f32 0.0, %v4145
        %v4147 = vpop.f32.mrb[0].mxu0
        %4148 = vmatprep.mubr.f32.mxu0 0.0
        %4149 = vmatmul.mubr.f32.gmra.mrb[0].mxu0 %v3965
        %v4150 = vpop.f32.mrb[0].mxu0
        %v4151 = vadd.f32 0.0, %v4150
        %v4152 = vpop.f32.mrb[0].mxu0
        %4153 = vmatprep.mubr.f32.mxu0 0.0
        %4154 = vmatmul.mubr.f32.gmra.mrb[0].mxu0 %v3968
        %v4155 = vpop.f32.mrb[0].mxu0
        %v4156 = vadd.f32 0.0, %v4155
        %v4157 = vpop.f32.mrb[0].mxu0
        %4158 = vmatprep.mubr.f32.mxu0 0.0
        %4159 = vmatmul.mubr.f32.gmra.mrb[0].mxu0 %v3971
        %v4160 = vpop.f32.mrb[0].mxu0
        %v4161 = vadd.f32 0.0, %v4160
        %v4162 = vpop.f32.mrb[0].mxu0
        %4163 = vmatprep.mubr.f32.mxu0 0.0
        %4164 = vmatmul.mubr.f32.gmra.mrb[0].mxu0 %v3974
        %v4165 = vpop.f32.mrb[0].mxu0
        %v4166 = vadd.f32 0.0, %v4165
        %v4167 = vpop.f32.mrb[0].mxu0
        %4168 = vmatprep.mubr.f32.mxu0 0.0
        %4169 = vmatmul.mubr.f32.gmra.mrb[0].mxu0 %v3977
        %v4170 = vpop.f32.mrb[0].mxu0
        %v4171 = vadd.f32 0.0, %v4170
        %v4172 = vpop.f32.mrb[0].mxu0
        %4173 = vmatprep.mubr.f32.mxu0 0.0
        %4174 = vmatmul.mubr.f32.gmra.mrb[0].mxu0 %v3980
        %v4175 = vpop.f32.mrb[0].mxu0
        %v4176 = vadd.f32 0.0, %v4175
        %v4177 = vpop.f32.mrb[0].mxu0
        %4178 = vmatprep.mubr.f32.mxu0 0.0
        %4179 = vmatmul.mubr.f32.gmra.mrb[0].mxu0 %v3983
        %v4180 = vpop.f32.mrb[0].mxu0
        %v4181 = vadd.f32 0.0, %v4180
        %v4182 = vpop.f32.mrb[0].mxu0
        %4183 = vmatprep.mubr.f32.mxu0 0.0
        %4184 = vmatmul.mubr.f32.gmra.mrb[0].mxu0 %v3986
        %v4185 = vpop.f32.mrb[0].mxu0
        %v4186 = vadd.f32 0.0, %v4185
        %v4187 = vpop.f32.mrb[0].mxu0
        %4188 = vmatprep.mubr.f32.mxu0 0.0
        %4189 = vmatmul.mubr.f32.gmra.mrb[0].mxu0 %v3989
        %v4190 = vpop.f32.mrb[0].mxu0
        %v4191 = vadd.f32 0.0, %v4190
        %v4192 = vpop.f32.mrb[0].mxu0
        %4193 = vmatprep.mubr.f32.mxu0 0.0
        %4194 = vmatmul.mubr.f32.gmra.mrb[0].mxu0 %v3992
        %v4195 = vpop.f32.mrb[0].mxu0
        %v4196 = vadd.f32 0.0, %v4195
        %v4197 = vpop.f32.mrb[0].mxu0
        %4198 = vmatprep.mubr.f32.mxu0 0.0
        %4199 = vmatmul.mubr.f32.gmra.mrb[0].mxu0 %v3995
        %v4200 = vpop.f32.mrb[0].mxu0
        %v4201 = vadd.f32 0.0, %v4200
        %v4202 = vpop.f32.mrb[0].mxu0
        %4203 = vmatprep.mubr.f32.mxu0 0.0
        %4204 = vmatmul.mubr.f32.gmra.mrb[0].mxu0 %v3998
        %v4205 = vpop.f32.mrb[0].mxu0
        %v4206 = vadd.f32 0.0, %v4205
        %v4207 = vpop.f32.mrb[0].mxu0
        %4208 = vmatprep.mubr.f32.mxu0 0.0
        %4209 = vmatmul.mubr.f32.gmra.mrb[0].mxu0 %v4001
        %v4210 = vpop.f32.mrb[0].mxu0
        %v4211 = vadd.f32 0.0, %v4210
        %v4212 = vpop.f32.mrb[0].mxu0
        %4213 = vmatprep.mubr.f32.mxu0 0.0
        %4214 = vmatmul.mubr.f32.gmra.mrb[0].mxu0 %v4004
        %v4215 = vpop.f32.mrb[0].mxu0
        %v4216 = vadd.f32 0.0, %v4215
        %v4217 = vpop.f32.mrb[0].mxu0
        %4218 = vmatprep.mubr.f32.mxu0 0.0
        %4219 = vmatmul.mubr.f32.gmra.mrb[0].mxu0 %v4007
        %v4220 = vpop.f32.mrb[0].mxu0
        %v4221 = vadd.f32 0.0, %v4220
        %v4222 = vpop.f32.mrb[0].mxu0
        %4223 = vmatprep.mubr.f32.mxu0 0.0
        %4224 = vmatmul.mubr.f32.gmra.mrb[0].mxu0 %v4010
        %v4225 = vpop.f32.mrb[0].mxu0
        %v4226 = vadd.f32 0.0, %v4225
        %v4227 = vpop.f32.mrb[0].mxu0
        %4228 = vmatprep.mubr.f32.mxu0 0.0
        %4229 = vmatmul.mubr.f32.gmra.mrb[0].mxu0 %v4013
        %v4230 = vpop.f32.mrb[0].mxu0
        %v4231 = vadd.f32 0.0, %v4230
        %v4232 = vpop.f32.mrb[0].mxu0
        %4233 = vmatprep.mubr.f32.mxu0 0.0
        %4234 = vmatmul.mubr.f32.gmra.mrb[0].mxu0 %v4016
        %v4235 = vpop.f32.mrb[0].mxu0
        %v4236 = vadd.f32 0.0, %v4235
        %v4237 = vpop.f32.mrb[0].mxu0
        %4238 = vmatprep.mubr.f32.mxu0 0.0
        %4239 = vmatmul.mubr.f32.gmra.mrb[0].mxu0 %v4019
        %v4240 = vpop.f32.mrb[0].mxu0
        %v4241 = vadd.f32 0.0, %v4240
        %v4242 = vpop.f32.mrb[0].mxu0
        %4243 = vmatprep.mubr.f32.mxu0 0.0
        %4244 = vmatmul.mubr.f32.gmra.mrb[0].mxu0 %v4022
        %v4245 = vpop.f32.mrb[0].mxu0
        %v4246 = vadd.f32 0.0, %v4245
        %v4247 = vpop.f32.mrb[0].mxu0
        %4248 = vdwg.mxu0
        %v4249 = vadd.f32 %v3761, %v4091
        %v4250 = vadd.f32 %v3762, %v4096
        %v4251 = vadd.f32 %v3763, %v4101
        %v4252 = vadd.f32 %v3764, %v4106
        %v4253 = vadd.f32 %v3765, %v4111
        %v4254 = vadd.f32 %v3766, %v4116
        %v4255 = vadd.f32 %v3767, %v4121
        %v4256 = vadd.f32 %v3768, %v4126
        %v4257 = vadd.f32 %v3769, %v4131
        %v4258 = vadd.f32 %v3770, %v4136
        %v4259 = vadd.f32 %v3771, %v4141
        %v4260 = vadd.f32 %v3772, %v4146
        %v4261 = vadd.f32 %v3773, %v4151
        %v4262 = vadd.f32 %v3774, %v4156
        %v4263 = vadd.f32 %v3775, %v4161
        %v4264 = vadd.f32 %v3776, %v4166
        %v4265 = vadd.f32 %v3777, %v4171
        %v4266 = vadd.f32 %v3778, %v4176
        %v4267 = vadd.f32 %v3779, %v4181
        %v4268 = vadd.f32 %v3780, %v4186
        %v4269 = vadd.f32 %v3781, %v4191
        %v4270 = vadd.f32 %v3782, %v4196
        %v4271 = vadd.f32 %v3783, %v4201
        %v4272 = vadd.f32 %v3784, %v4206
        %v4273 = vadd.f32 %v3785, %v4211
        %v4274 = vadd.f32 %v3786, %v4216
        %v4275 = vadd.f32 %v3787, %v4221
        %v4276 = vadd.f32 %v3788, %v4226
        %v4277 = vadd.f32 %v3789, %v4231
        %v4278 = vadd.f32 %v3790, %v4236
        %v4279 = vadd.f32 %v3791, %v4241
        %v4280 = vadd.f32 %v3792, %v4246
        %4281 = vrot.lane.b32.xlu0 %v145, 120
        %v4282 = vpop.permute.xlu0 %4281
        %4283 = vrot.lane.b32.xlu0 %v146, 120
        %v4284 = vpop.permute.xlu0 %4283
        %4285 = vrot.lane.b32.xlu0 %v147, 120
        %v4286 = vpop.permute.xlu0 %4285
        %4287 = vrot.lane.b32.xlu0 %v148, 120
        %v4288 = vpop.permute.xlu0 %4287
        %4289 = vrot.lane.b32.xlu0 %v149, 120
        %v4290 = vpop.permute.xlu0 %4289
        %4291 = vrot.lane.b32.xlu0 %v150, 120
        %v4292 = vpop.permute.xlu0 %4291
        %4293 = vrot.lane.b32.xlu0 %v151, 120
        %v4294 = vpop.permute.xlu0 %4293
        %4295 = vrot.lane.b32.xlu0 %v152, 120
        %v4296 = vpop.permute.xlu0 %4295
        %4297 = vrot.lane.b32.xlu0 %v153, 120
        %v4298 = vpop.permute.xlu0 %4297
        %4299 = vrot.lane.b32.xlu0 %v154, 120
        %v4300 = vpop.permute.xlu0 %4299
        %4301 = vrot.lane.b32.xlu0 %v155, 120
        %v4302 = vpop.permute.xlu0 %4301
        %4303 = vrot.lane.b32.xlu0 %v156, 120
        %v4304 = vpop.permute.xlu0 %4303
        %4305 = vrot.lane.b32.xlu0 %v157, 120
        %v4306 = vpop.permute.xlu0 %4305
        %4307 = vrot.lane.b32.xlu0 %v158, 120
        %v4308 = vpop.permute.xlu0 %4307
        %4309 = vrot.lane.b32.xlu0 %v159, 120
        %v4310 = vpop.permute.xlu0 %4309
        %4311 = vrot.lane.b32.xlu0 %v160, 120
        %v4312 = vpop.permute.xlu0 %4311
        %4313 = vrot.lane.b32.xlu0 %v161, 120
        %v4314 = vpop.permute.xlu0 %4313
        %4315 = vrot.lane.b32.xlu0 %v162, 120
        %v4316 = vpop.permute.xlu0 %4315
        %4317 = vrot.lane.b32.xlu0 %v163, 120
        %v4318 = vpop.permute.xlu0 %4317
        %4319 = vrot.lane.b32.xlu0 %v164, 120
        %v4320 = vpop.permute.xlu0 %4319
        %4321 = vrot.lane.b32.xlu0 %v165, 120
        %v4322 = vpop.permute.xlu0 %4321
        %4323 = vrot.lane.b32.xlu0 %v166, 120
        %v4324 = vpop.permute.xlu0 %4323
        %4325 = vrot.lane.b32.xlu0 %v167, 120
        %v4326 = vpop.permute.xlu0 %4325
        %4327 = vrot.lane.b32.xlu0 %v168, 120
        %v4328 = vpop.permute.xlu0 %4327
        %4329 = vrot.lane.b32.xlu0 %v169, 120
        %v4330 = vpop.permute.xlu0 %4329
        %4331 = vrot.lane.b32.xlu0 %v170, 120
        %v4332 = vpop.permute.xlu0 %4331
        %4333 = vrot.lane.b32.xlu0 %v171, 120
        %v4334 = vpop.permute.xlu0 %4333
        %4335 = vrot.lane.b32.xlu0 %v172, 120
        %v4336 = vpop.permute.xlu0 %4335
        %4337 = vrot.lane.b32.xlu0 %v173, 120
        %v4338 = vpop.permute.xlu0 %4337
        %4339 = vrot.lane.b32.xlu0 %v174, 120
        %v4340 = vpop.permute.xlu0 %4339
        %4341 = vrot.lane.b32.xlu0 %v175, 120
        %v4342 = vpop.permute.xlu0 %4341
        %4343 = vrot.lane.b32.xlu0 %v176, 120
        %v4344 = vpop.permute.xlu0 %4343
        %v4377 = vmul.f32 %v145, %v4282
        %v4378 = vmul.f32 %v146, %v4284
        %v4379 = vmul.f32 %v147, %v4286
        %v4380 = vmul.f32 %v148, %v4288
        %v4381 = vmul.f32 %v149, %v4290
        %v4382 = vmul.f32 %v150, %v4292
        %v4383 = vmul.f32 %v151, %v4294
        %v4384 = vmul.f32 %v152, %v4296
        %v4385 = vmul.f32 %v153, %v4298
        %v4386 = vmul.f32 %v154, %v4300
        %v4387 = vmul.f32 %v155, %v4302
        %v4388 = vmul.f32 %v156, %v4304
        %v4389 = vmul.f32 %v157, %v4306
        %v4390 = vmul.f32 %v158, %v4308
        %v4391 = vmul.f32 %v159, %v4310
        %v4392 = vmul.f32 %v160, %v4312
        %v4393 = vmul.f32 %v161, %v4314
        %v4394 = vmul.f32 %v162, %v4316
        %v4395 = vmul.f32 %v163, %v4318
        %v4396 = vmul.f32 %v164, %v4320
        %v4397 = vmul.f32 %v165, %v4322
        %v4398 = vmul.f32 %v166, %v4324
        %v4399 = vmul.f32 %v167, %v4326
        %v4400 = vmul.f32 %v168, %v4328
        %v4401 = vmul.f32 %v169, %v4330
        %v4402 = vmul.f32 %v170, %v4332
        %v4403 = vmul.f32 %v171, %v4334
        %v4404 = vmul.f32 %v172, %v4336
        %v4405 = vmul.f32 %v173, %v4338
        %v4406 = vmul.f32 %v174, %v4340
        %v4407 = vmul.f32 %v175, %v4342
        %v4408 = vmul.f32 %v176, %v4344
        %s4409 = scalar_lea.vmem %s1, 432
        %v4410 = vld [vmem:[%s4409] sm:$0xff]
        %v4411 = vld [vmem:[%s4409 + $0x8] sm:$0xff]
        %v4412 = vld [vmem:[%s4409 + $0x10] sm:$0xff]
        %v4413 = vld [vmem:[%s4409 + $0x18] sm:$0xff]
        %v4414 = vld [vmem:[%s4409 + $0x20] sm:$0xff]
        %v4415 = vld [vmem:[%s4409 + $0x28] sm:$0xff]
        %v4417 = vsel %vm222, %v4377, 0
        %v4420 = vsel %vm222, %v4378, 0
        %v4423 = vsel %vm222, %v4379, 0
        %v4426 = vsel %vm222, %v4380, 0
        %v4429 = vsel %vm222, %v4381, 0
        %v4432 = vsel %vm222, %v4382, 0
        %v4435 = vsel %vm222, %v4383, 0
        %v4438 = vsel %vm222, %v4384, 0
        %v4441 = vsel %vm222, %v4385, 0
        %v4444 = vsel %vm222, %v4386, 0
        %v4447 = vsel %vm222, %v4387, 0
        %v4450 = vsel %vm222, %v4388, 0
        %v4453 = vsel %vm222, %v4389, 0
        %v4456 = vsel %vm222, %v4390, 0
        %v4459 = vsel %vm222, %v4391, 0
        %v4462 = vsel %vm222, %v4392, 0
        %v4465 = vsel %vm222, %v4393, 0
        %v4468 = vsel %vm222, %v4394, 0
        %v4471 = vsel %vm222, %v4395, 0
        %v4474 = vsel %vm222, %v4396, 0
        %v4477 = vsel %vm222, %v4397, 0
        %v4480 = vsel %vm222, %v4398, 0
        %v4483 = vsel %vm222, %v4399, 0
        %v4486 = vsel %vm222, %v4400, 0
        %v4489 = vsel %vm222, %v4401, 0
        %v4492 = vsel %vm222, %v4402, 0
        %v4495 = vsel %vm222, %v4403, 0
        %v4498 = vsel %vm222, %v4404, 0
        %v4501 = vsel %vm222, %v4405, 0
        %v4504 = vsel %vm222, %v4406, 0
        %v4507 = vsel %vm222, %v4407, 0
        %v4510 = vsel %vm222, %v4408, 0
        %4512 = vmatprep.subr.mxu0 0.0
        %4513 = vmatpush1.msra.mxu0 %v4410
        %4514 = vmatprep.subr.mxu0 0.0
        %4515 = vmatpush1.msra.mxu0 %v4411
        %4516 = vmatprep.subr.mxu0 0.0
        %4517 = vmatpush1.msra.mxu0 %v4412
        %4518 = vmatprep.subr.mxu0 0.0
        %4519 = vmatpush1.msra.mxu0 %v4413
        %4520 = vmatprep.subr.mxu0 0.0
        %4521 = vmatpush1.msra.mxu0 %v4414
        %4522 = vmatprep.subr.mxu0 0.0
        %4523 = vmatpush1.msra.mxu0 %v4415
        %4524 = vmatprep.subr.mxu0 0.0
        %4525 = vmatpush1.msra.mxu0 0.0
        %4526 = vmatprep.subr.mxu0 0.0
        %4527 = vmatpush1.msra.mxu0 0.0
        %4528 = vmatprep.subr.mxu0 0.0
        %4529 = vmatpush1.msra.mxu0 0.0
        %4530 = vmatprep.subr.mxu0 0.0
        %4531 = vmatpush1.msra.mxu0 0.0
        %4532 = vmatprep.subr.mxu0 0.0
        %4533 = vmatpush1.msra.mxu0 0.0
        %4534 = vmatprep.subr.mxu0 0.0
        %4535 = vmatpush1.msra.mxu0 0.0
        %4536 = vmatprep.subr.mxu0 0.0
        %4537 = vmatpush1.msra.mxu0 0.0
        %4538 = vmatprep.subr.mxu0 0.0
        %4539 = vmatpush1.msra.mxu0 0.0
        %4540 = vmatprep.subr.mxu0 0.0
        %4541 = vmatpush1.msra.mxu0 0.0
        %4542 = vmatprep.subr.mxu0 0.0
        %4543 = vmatpush1.msra.mxu0 0.0
        %4544 = vmatprep.subr.mxu0 0.0
        %4545 = vmatpush1.msra.mxu0 0.0
        %4546 = vmatprep.subr.mxu0 0.0
        %4547 = vmatpush1.msra.mxu0 0.0
        %4548 = vmatprep.subr.mxu0 0.0
        %4549 = vmatpush1.msra.mxu0 0.0
        %4550 = vmatprep.subr.mxu0 0.0
        %4551 = vmatpush1.msra.mxu0 0.0
        %4552 = vmatprep.subr.mxu0 0.0
        %4553 = vmatpush1.msra.mxu0 0.0
        %4554 = vmatprep.subr.mxu0 0.0
        %4555 = vmatpush1.msra.mxu0 0.0
        %4556 = vmatprep.subr.mxu0 0.0
        %4557 = vmatpush1.msra.mxu0 0.0
        %4558 = vmatprep.subr.mxu0 0.0
        %4559 = vmatpush1.msra.mxu0 0.0
        %4560 = vmatprep.subr.mxu0 0.0
        %4561 = vmatpush1.msra.mxu0 0.0
        %4562 = vmatprep.subr.mxu0 0.0
        %4563 = vmatpush1.msra.mxu0 0.0
        %4564 = vmatprep.subr.mxu0 0.0
        %4565 = vmatpush1.msra.mxu0 0.0
        %4566 = vmatprep.subr.mxu0 0.0
        %4567 = vmatpush1.msra.mxu0 0.0
        %4568 = vmatprep.subr.mxu0 0.0
        %4569 = vmatpush1.msra.mxu0 0.0
        %4570 = vmatprep.subr.mxu0 0.0
        %4571 = vmatpush1.msra.mxu0 0.0
        %4572 = vmatprep.subr.mxu0 0.0
        %4573 = vmatpush1.msra.mxu0 0.0
        %4574 = vmatprep.subr.mxu0 0.0
        %4575 = vmatpush1.msra.mxu0 0.0
        %4576 = vmatprep.mubr.f32.mxu0 0.0
        %4577 = vmatmul.mubr.f32.gmra.mrb[0].mxu0 %v4417
        %v4578 = vpop.f32.mrb[0].mxu0
        %v4579 = vadd.f32 0.0, %v4578
        %v4580 = vpop.f32.mrb[0].mxu0
        %4581 = vmatprep.mubr.f32.mxu0 0.0
        %4582 = vmatmul.mubr.f32.gmra.mrb[0].mxu0 %v4420
        %v4583 = vpop.f32.mrb[0].mxu0
        %v4584 = vadd.f32 0.0, %v4583
        %v4585 = vpop.f32.mrb[0].mxu0
        %4586 = vmatprep.mubr.f32.mxu0 0.0
        %4587 = vmatmul.mubr.f32.gmra.mrb[0].mxu0 %v4423
        %v4588 = vpop.f32.mrb[0].mxu0
        %v4589 = vadd.f32 0.0, %v4588
        %v4590 = vpop.f32.mrb[0].mxu0
        %4591 = vmatprep.mubr.f32.mxu0 0.0
        %4592 = vmatmul.mubr.f32.gmra.mrb[0].mxu0 %v4426
        %v4593 = vpop.f32.mrb[0].mxu0
        %v4594 = vadd.f32 0.0, %v4593
        %v4595 = vpop.f32.mrb[0].mxu0
        %4596 = vmatprep.mubr.f32.mxu0 0.0
        %4597 = vmatmul.mubr.f32.gmra.mrb[0].mxu0 %v4429
        %v4598 = vpop.f32.mrb[0].mxu0
        %v4599 = vadd.f32 0.0, %v4598
        %v4600 = vpop.f32.mrb[0].mxu0
        %4601 = vmatprep.mubr.f32.mxu0 0.0
        %4602 = vmatmul.mubr.f32.gmra.mrb[0].mxu0 %v4432
        %v4603 = vpop.f32.mrb[0].mxu0
        %v4604 = vadd.f32 0.0, %v4603
        %v4605 = vpop.f32.mrb[0].mxu0
        %4606 = vmatprep.mubr.f32.mxu0 0.0
        %4607 = vmatmul.mubr.f32.gmra.mrb[0].mxu0 %v4435
        %v4608 = vpop.f32.mrb[0].mxu0
        %v4609 = vadd.f32 0.0, %v4608
        %v4610 = vpop.f32.mrb[0].mxu0
        %4611 = vmatprep.mubr.f32.mxu0 0.0
        %4612 = vmatmul.mubr.f32.gmra.mrb[0].mxu0 %v4438
        %v4613 = vpop.f32.mrb[0].mxu0
        %v4614 = vadd.f32 0.0, %v4613
        %v4615 = vpop.f32.mrb[0].mxu0
        %4616 = vmatprep.mubr.f32.mxu0 0.0
        %4617 = vmatmul.mubr.f32.gmra.mrb[0].mxu0 %v4441
        %v4618 = vpop.f32.mrb[0].mxu0
        %v4619 = vadd.f32 0.0, %v4618
        %v4620 = vpop.f32.mrb[0].mxu0
        %4621 = vmatprep.mubr.f32.mxu0 0.0
        %4622 = vmatmul.mubr.f32.gmra.mrb[0].mxu0 %v4444
        %v4623 = vpop.f32.mrb[0].mxu0
        %v4624 = vadd.f32 0.0, %v4623
        %v4625 = vpop.f32.mrb[0].mxu0
        %4626 = vmatprep.mubr.f32.mxu0 0.0
        %4627 = vmatmul.mubr.f32.gmra.mrb[0].mxu0 %v4447
        %v4628 = vpop.f32.mrb[0].mxu0
        %v4629 = vadd.f32 0.0, %v4628
        %v4630 = vpop.f32.mrb[0].mxu0
        %4631 = vmatprep.mubr.f32.mxu0 0.0
        %4632 = vmatmul.mubr.f32.gmra.mrb[0].mxu0 %v4450
        %v4633 = vpop.f32.mrb[0].mxu0
        %v4634 = vadd.f32 0.0, %v4633
        %v4635 = vpop.f32.mrb[0].mxu0
        %4636 = vmatprep.mubr.f32.mxu0 0.0
        %4637 = vmatmul.mubr.f32.gmra.mrb[0].mxu0 %v4453
        %v4638 = vpop.f32.mrb[0].mxu0
        %v4639 = vadd.f32 0.0, %v4638
        %v4640 = vpop.f32.mrb[0].mxu0
        %4641 = vmatprep.mubr.f32.mxu0 0.0
        %4642 = vmatmul.mubr.f32.gmra.mrb[0].mxu0 %v4456
        %v4643 = vpop.f32.mrb[0].mxu0
        %v4644 = vadd.f32 0.0, %v4643
        %v4645 = vpop.f32.mrb[0].mxu0
        %4646 = vmatprep.mubr.f32.mxu0 0.0
        %4647 = vmatmul.mubr.f32.gmra.mrb[0].mxu0 %v4459
        %v4648 = vpop.f32.mrb[0].mxu0
        %v4649 = vadd.f32 0.0, %v4648
        %v4650 = vpop.f32.mrb[0].mxu0
        %4651 = vmatprep.mubr.f32.mxu0 0.0
        %4652 = vmatmul.mubr.f32.gmra.mrb[0].mxu0 %v4462
        %v4653 = vpop.f32.mrb[0].mxu0
        %v4654 = vadd.f32 0.0, %v4653
        %v4655 = vpop.f32.mrb[0].mxu0
        %4656 = vmatprep.mubr.f32.mxu0 0.0
        %4657 = vmatmul.mubr.f32.gmra.mrb[0].mxu0 %v4465
        %v4658 = vpop.f32.mrb[0].mxu0
        %v4659 = vadd.f32 0.0, %v4658
        %v4660 = vpop.f32.mrb[0].mxu0
        %4661 = vmatprep.mubr.f32.mxu0 0.0
        %4662 = vmatmul.mubr.f32.gmra.mrb[0].mxu0 %v4468
        %v4663 = vpop.f32.mrb[0].mxu0
        %v4664 = vadd.f32 0.0, %v4663
        %v4665 = vpop.f32.mrb[0].mxu0
        %4666 = vmatprep.mubr.f32.mxu0 0.0
        %4667 = vmatmul.mubr.f32.gmra.mrb[0].mxu0 %v4471
        %v4668 = vpop.f32.mrb[0].mxu0
        %v4669 = vadd.f32 0.0, %v4668
        %v4670 = vpop.f32.mrb[0].mxu0
        %4671 = vmatprep.mubr.f32.mxu0 0.0
        %4672 = vmatmul.mubr.f32.gmra.mrb[0].mxu0 %v4474
        %v4673 = vpop.f32.mrb[0].mxu0
        %v4674 = vadd.f32 0.0, %v4673
        %v4675 = vpop.f32.mrb[0].mxu0
        %4676 = vmatprep.mubr.f32.mxu0 0.0
        %4677 = vmatmul.mubr.f32.gmra.mrb[0].mxu0 %v4477
        %v4678 = vpop.f32.mrb[0].mxu0
        %v4679 = vadd.f32 0.0, %v4678
        %v4680 = vpop.f32.mrb[0].mxu0
        %4681 = vmatprep.mubr.f32.mxu0 0.0
        %4682 = vmatmul.mubr.f32.gmra.mrb[0].mxu0 %v4480
        %v4683 = vpop.f32.mrb[0].mxu0
        %v4684 = vadd.f32 0.0, %v4683
        %v4685 = vpop.f32.mrb[0].mxu0
        %4686 = vmatprep.mubr.f32.mxu0 0.0
        %4687 = vmatmul.mubr.f32.gmra.mrb[0].mxu0 %v4483
        %v4688 = vpop.f32.mrb[0].mxu0
        %v4689 = vadd.f32 0.0, %v4688
        %v4690 = vpop.f32.mrb[0].mxu0
        %4691 = vmatprep.mubr.f32.mxu0 0.0
        %4692 = vmatmul.mubr.f32.gmra.mrb[0].mxu0 %v4486
        %v4693 = vpop.f32.mrb[0].mxu0
        %v4694 = vadd.f32 0.0, %v4693
        %v4695 = vpop.f32.mrb[0].mxu0
        %4696 = vmatprep.mubr.f32.mxu0 0.0
        %4697 = vmatmul.mubr.f32.gmra.mrb[0].mxu0 %v4489
        %v4698 = vpop.f32.mrb[0].mxu0
        %v4699 = vadd.f32 0.0, %v4698
        %v4700 = vpop.f32.mrb[0].mxu0
        %4701 = vmatprep.mubr.f32.mxu0 0.0
        %4702 = vmatmul.mubr.f32.gmra.mrb[0].mxu0 %v4492
        %v4703 = vpop.f32.mrb[0].mxu0
        %v4704 = vadd.f32 0.0, %v4703
        %v4705 = vpop.f32.mrb[0].mxu0
        %4706 = vmatprep.mubr.f32.mxu0 0.0
        %4707 = vmatmul.mubr.f32.gmra.mrb[0].mxu0 %v4495
        %v4708 = vpop.f32.mrb[0].mxu0
        %v4709 = vadd.f32 0.0, %v4708
        %v4710 = vpop.f32.mrb[0].mxu0
        %4711 = vmatprep.mubr.f32.mxu0 0.0
        %4712 = vmatmul.mubr.f32.gmra.mrb[0].mxu0 %v4498
        %v4713 = vpop.f32.mrb[0].mxu0
        %v4714 = vadd.f32 0.0, %v4713
        %v4715 = vpop.f32.mrb[0].mxu0
        %4716 = vmatprep.mubr.f32.mxu0 0.0
        %4717 = vmatmul.mubr.f32.gmra.mrb[0].mxu0 %v4501
        %v4718 = vpop.f32.mrb[0].mxu0
        %v4719 = vadd.f32 0.0, %v4718
        %v4720 = vpop.f32.mrb[0].mxu0
        %4721 = vmatprep.mubr.f32.mxu0 0.0
        %4722 = vmatmul.mubr.f32.gmra.mrb[0].mxu0 %v4504
        %v4723 = vpop.f32.mrb[0].mxu0
        %v4724 = vadd.f32 0.0, %v4723
        %v4725 = vpop.f32.mrb[0].mxu0
        %4726 = vmatprep.mubr.f32.mxu0 0.0
        %4727 = vmatmul.mubr.f32.gmra.mrb[0].mxu0 %v4507
        %v4728 = vpop.f32.mrb[0].mxu0
        %v4729 = vadd.f32 0.0, %v4728
        %v4730 = vpop.f32.mrb[0].mxu0
        %4731 = vmatprep.mubr.f32.mxu0 0.0
        %4732 = vmatmul.mubr.f32.gmra.mrb[0].mxu0 %v4510
        %v4733 = vpop.f32.mrb[0].mxu0
        %v4734 = vadd.f32 0.0, %v4733
        %v4735 = vpop.f32.mrb[0].mxu0
        %4736 = vdwg.mxu0
        %v4737 = vadd.f32 %v4249, %v4579
        %v4738 = vadd.f32 %v4250, %v4584
        %v4739 = vadd.f32 %v4251, %v4589
        %v4740 = vadd.f32 %v4252, %v4594
        %v4741 = vadd.f32 %v4253, %v4599
        %v4742 = vadd.f32 %v4254, %v4604
        %v4743 = vadd.f32 %v4255, %v4609
        %v4744 = vadd.f32 %v4256, %v4614
        %v4745 = vadd.f32 %v4257, %v4619
        %v4746 = vadd.f32 %v4258, %v4624
        %v4747 = vadd.f32 %v4259, %v4629
        %v4748 = vadd.f32 %v4260, %v4634
        %v4749 = vadd.f32 %v4261, %v4639
        %v4750 = vadd.f32 %v4262, %v4644
        %v4751 = vadd.f32 %v4263, %v4649
        %v4752 = vadd.f32 %v4264, %v4654
        %v4753 = vadd.f32 %v4265, %v4659
        %v4754 = vadd.f32 %v4266, %v4664
        %v4755 = vadd.f32 %v4267, %v4669
        %v4756 = vadd.f32 %v4268, %v4674
        %v4757 = vadd.f32 %v4269, %v4679
        %v4758 = vadd.f32 %v4270, %v4684
        %v4759 = vadd.f32 %v4271, %v4689
        %v4760 = vadd.f32 %v4272, %v4694
        %v4761 = vadd.f32 %v4273, %v4699
        %v4762 = vadd.f32 %v4274, %v4704
        %v4763 = vadd.f32 %v4275, %v4709
        %v4764 = vadd.f32 %v4276, %v4714
        %v4765 = vadd.f32 %v4277, %v4719
        %v4766 = vadd.f32 %v4278, %v4724
        %v4767 = vadd.f32 %v4279, %v4729
        %v4768 = vadd.f32 %v4280, %v4734
        %4769 = vst [vmem:[%s137] sm:$0xff] %v4737
        %4770 = vst [vmem:[%s137 + $0x8] sm:$0xff] %v4738
        %4771 = vst [vmem:[%s137 + $0x10] sm:$0xff] %v4739
        %4772 = vst [vmem:[%s137 + $0x18] sm:$0xff] %v4740
        %4773 = vst [vmem:[%s137 + $0x20] sm:$0xff] %v4741
        %4774 = vst [vmem:[%s137 + $0x28] sm:$0xff] %v4742
        %4775 = vst [vmem:[%s137 + $0x30] sm:$0xff] %v4743
        %4776 = vst [vmem:[%s137 + $0x38] sm:$0xff] %v4744
        %4777 = vst [vmem:[%s137 + $0x40] sm:$0xff] %v4745
        %4778 = vst [vmem:[%s137 + $0x48] sm:$0xff] %v4746
        %4779 = vst [vmem:[%s137 + $0x50] sm:$0xff] %v4747
        %4780 = vst [vmem:[%s137 + $0x58] sm:$0xff] %v4748
        %4781 = vst [vmem:[%s137 + $0x60] sm:$0xff] %v4749
        %4782 = vst [vmem:[%s137 + $0x68] sm:$0xff] %v4750
        %4783 = vst [vmem:[%s137 + $0x70] sm:$0xff] %v4751
        %4784 = vst [vmem:[%s137 + $0x78] sm:$0xff] %v4752
        %4785 = vst [vmem:[%s137 + $0x80] sm:$0xff] %v4753
        %4786 = vst [vmem:[%s137 + $0x88] sm:$0xff] %v4754
        %4787 = vst [vmem:[%s137 + $0x90] sm:$0xff] %v4755
        %4788 = vst [vmem:[%s137 + $0x98] sm:$0xff] %v4756
        %4789 = vst [vmem:[%s137 + $0xa0] sm:$0xff] %v4757
        %4790 = vst [vmem:[%s137 + $0xa8] sm:$0xff] %v4758
        %4791 = vst [vmem:[%s137 + $0xb0] sm:$0xff] %v4759
        %4792 = vst [vmem:[%s137 + $0xb8] sm:$0xff] %v4760
        %4793 = vst [vmem:[%s137 + $0xc0] sm:$0xff] %v4761
        %4794 = vst [vmem:[%s137 + $0xc8] sm:$0xff] %v4762
        %4795 = vst [vmem:[%s137 + $0xd0] sm:$0xff] %v4763
        %4796 = vst [vmem:[%s137 + $0xd8] sm:$0xff] %v4764
        %4797 = vst [vmem:[%s137 + $0xe0] sm:$0xff] %v4765
        %4798 = vst [vmem:[%s137 + $0xe8] sm:$0xff] %v4766
        %4799 = vst [vmem:[%s137 + $0xf0] sm:$0xff] %v4767
        %4800 = vst [vmem:[%s137 + $0xf8] sm:$0xff] %v4768
        %s4801 = sand.u32 %s71, 1
        %s4802 = scalar_lea.sflag [#allocation3], %s4801
        %s4803 = sand.u32 %s71, 1
        %s4804 = smul.addr %s4803, 256
        %s4805 = scalar_lea.vmem [#allocation2], %s4804
        // Predicated region
        $region29: #{tpu_custom_call.1} parent=27 // pred_check
          %p4806 = pneg %p81
        $region30: #{tpu_custom_call.1} parent=27 // pred_check_branch
          %4808 = sbr.rel (%p4806) target = $region32
        $region31: #{tpu_custom_call.1} parent=27 // pred_region
          %s4809 = smul.u32 32, %s16
          %s4811 = ssub.s32 4096, 4096
          %4812 = vsyncadd %s4802, %s4811
          %s4813 = smul.addr %s4809, 128
          %s4814 = scalar_lea.hbm %s2, %s4813
          %s4815 = sshll.u32 %s4805, 4
          %s4816 = int_to_ptr.vmem [resolvable:$true] %s4815
          %4821 = dma.vmem_to_hbm [thread:$0]  %s4816, 4096, %s4814, %s4802, 128, 128, 8
        $region32: #{tpu_custom_call.1} parent=27 // pred_fallthru
          _
      $region28: #{tpu_custom_call.1} parent=5 // pred_fallthru
        _
      %p4822 = scmp.le.s32.totalorder 2, %s11
      // Predicated region
      $region33: #{tpu_custom_call.1} parent=5 // pred_check
        %p4823 = pneg %p4822
      $region34: #{tpu_custom_call.1} parent=5 // pred_check_branch
        %4825 = sbr.rel (%p4823) target = $region36
      $region35: #{tpu_custom_call.1} parent=5 // pred_region
        %s4826 = ssub.s32 %s11, 2
        // Predicated region
        $region37: #{tpu_custom_call.1} parent=35 // pred_check
          %p4827 = pneg %p87
        $region38: #{tpu_custom_call.1} parent=35 // pred_check_branch
          %4829 = sbr.rel (%p4827) target = $region40
        $region39: #{tpu_custom_call.1} parent=35 // pred_region
          %s4830 = sand.u32 %s72, 1
          %s4831 = scalar_lea.sflag [#allocation3], %s4830
          %s4832 = sand.u32 %s72, 1
          %s4833 = smul.addr %s4832, 256
          %s4834 = scalar_lea.vmem [#allocation2], %s4833
          %4835 = dma.done %s4831, 4096
        $region40: #{tpu_custom_call.1} parent=35 // pred_fallthru
          _
      $region36: #{tpu_custom_call.1} parent=5 // pred_fallthru
        _
    $region6: #{tpu_custom_call.1} parent=1 // loop_footer
      %s15 = sadd.s32 1, %s11
    $region7: #{tpu_custom_call.1} parent=1 // loop_footer_branch
      %10 = sbr.rel target = $region3
    $region8: #{tpu_custom_call.1} parent=1 // loop_exit
      _
    %4836 = vsyncpa [#allocation3], 1
    %s4837 = scalar_lea.sflag [#allocation3], 1
    %4838 = vsyncpa %s4837, 1

</llo_original>
